<compile_context>
chip_gen: v6e
topology: v6e:2x2x1
jax: 0.10.0
libtpu: 0.0.40
codegen_flags: <defaults>
</compile_context>

<pallas_src>
import functools

import jax
import jax.numpy as jnp
from jax import lax
from jax.experimental import pallas as pl
from jax.experimental.pallas import tpu as pltpu

EPS = 1e-5


def _odefunc_kernel(x_ref, valid_ref, agg_ref,
                    g1_ref, b1_ref, w1_ref, tb1_ref,
                    g2_ref, b2_ref, w2_ref, tb2_ref,
                    g3_ref, b3_ref,
                    out_ref, *, c, h, w, groups):
    f32 = jnp.float32
    hw = h * w
    cpg = c // groups
    inv_cnt = 1.0 / float(hw * cpg)

    agg = agg_ref[...]                      # (C, C) 0/1 same-group matrix

    def groupnorm(x, g_ref, b_ref):
        # x: (C, HW).  Within-group channel sums via a tiny (C,C)x(C,HW) matmul
        # (lane-dense N), spatial reduction as an exact f32 cross-lane reduce (XLU).
        gx = jnp.dot(agg, x, preferred_element_type=f32)                  # (C, HW)
        mean_c = jnp.sum(gx, axis=1, keepdims=True) * inv_cnt             # (C, 1)
        centered = x - mean_c
        gx2 = jnp.dot(agg, centered * centered, preferred_element_type=f32)
        var_c = jnp.sum(gx2, axis=1, keepdims=True) * inv_cnt             # (C, 1)
        inv = lax.rsqrt(var_c + EPS)
        return centered * (inv * g_ref[...]) + b_ref[...]

    def concat_conv3x3(x, w_ref, tb_ref):
        # x: (Cin, HW).  Nine taps realised as lane rolls of the flattened spatial
        # axis, zero-padded via the precomputed validity masks, each reduced with a
        # (Cout, Cin) x (Cin, HW) channel matmul on the MXU.  The constant-t input
        # channel and the conv bias are folded into tb_ref (precomputed, (Cout, HW)).
        acc = tb_ref[...]
        for ky in range(3):
            for kx in range(3):
                k = ky * 3 + kx
                off = (ky - 1) * w + (kx - 1)
                if off == 0:
                    shifted = x
                else:
                    # roll so that shifted[p] = x[p + off] (wrap positions are masked).
                    shifted = pltpu.roll(x, (-off) % hw, axis=1)
                patch = shifted * valid_ref[k:k + 1, :]                   # (Cin, HW)
                acc = acc + jnp.dot(w_ref[k], patch, preferred_element_type=f32)
        return acc

    x = x_ref[...]                                                        # (C, HW)
    out = groupnorm(x, g1_ref, b1_ref)
    out = jnp.maximum(out, 0.0)
    out = concat_conv3x3(out, w1_ref, tb1_ref)
    out = groupnorm(out, g2_ref, b2_ref)
    out = jnp.maximum(out, 0.0)
    out = concat_conv3x3(out, w2_ref, tb2_ref)
    out = groupnorm(out, g3_ref, b3_ref)
    out_ref[...] = out


def odefunc_forward(t, x, params, groups):
    """x: (N, C, H, W) NCHW.  Returns cat(v, f(v)) along batch, like the PyTorch module."""
    n, c, h, w = x.shape
    cutoff = n // 2
    v = x[cutoff:]                           # (Nv, C, H, W);  z = x[:cutoff] is unused
    nv = v.shape[0]
    hw = h * w

    # NCHW with flattened spatial -> per-sample (C, HW) slabs (no transpose needed).
    v2 = v.reshape(nv, c, hw).astype(jnp.float32)
    t = jnp.asarray(t, jnp.float32)

    # Per-tap zero-padding validity masks over the flattened spatial axis (tiny, 9xHW).
    rows = jnp.arange(h)[:, None]
    cols = jnp.arange(w)[None, :]
    masks = []
    for ky in range(3):
        for kx in range(3):
            oy, ox = ky - 1, kx - 1
            m_ = ((rows + oy >= 0) & (rows + oy < h) &
                  (cols + ox >= 0) & (cols + ox < w))
            masks.append(m_.reshape(hw))
    valid9 = jnp.stack(masks, axis=0).astype(jnp.float32)                 # (9, HW)

    cpg = c // groups
    agg = (jnp.arange(c)[:, None] // cpg ==
           jnp.arange(c)[None, :] // cpg).astype(jnp.float32)             # (C, C)

    def prep_gn(g, b):
        return (g.reshape(c, 1).astype(jnp.float32),
                b.reshape(c, 1).astype(jnp.float32))

    def prep_conv(wt_full, bias):
        # wt_full: (Cout, Cin+1, 3, 3); input channel 0 is the constant-t channel.
        wx = jnp.transpose(wt_full[:, 1:], (2, 3, 0, 1)).reshape(9, c, c)  # (9, Cout, Cin)
        wt = wt_full[:, 0].reshape(c, 9)                                   # (Cout, 9)
        # bias + t-channel contribution (zero-padded at borders), hoisted out of kernel.
        tb = bias.reshape(c, 1) + t * jnp.dot(wt, valid9)                  # (Cout, HW)
        return wx.astype(jnp.float32), tb.astype(jnp.float32)

    g1, b1 = prep_gn(params["gn1_w"], params["gn1_b"])
    g2, b2 = prep_gn(params["gn2_w"], params["gn2_b"])
    g3, b3 = prep_gn(params["gn3_w"], params["gn3_b"])
    w1, tb1 = prep_conv(params["c1_w"], params["c1_b"])
    w2, tb2 = prep_conv(params["c2_w"], params["c2_b"])

    per_sample = pl.BlockSpec((None, c, hw), lambda s: (s, 0, 0))

    def bcast(shape):
        return pl.BlockSpec(shape, lambda s, _shape=shape: tuple(0 for _ in _shape))

    # Advisory cost estimate (conv taps + GroupNorm aggregation matmuls).
    flops = nv * hw * c * c * 2 * (2 * 9 + 3 * 2)
    param_bytes = 4 * (9 * hw + c * c + 6 * c + 2 * (9 * c * c + c * hw))
    bytes_accessed = 4 * 2 * nv * c * hw + param_bytes

    out2 = pl.pallas_call(
        functools.partial(_odefunc_kernel, c=c, h=h, w=w, groups=groups),
        out_shape=jax.ShapeDtypeStruct((nv, c, hw), jnp.float32),
        grid=(nv,),
        in_specs=[per_sample,                      # x (per-sample block)
                  bcast((9, hw)),                  # tap validity masks
                  bcast((c, c)),                   # group aggregation matrix
                  bcast((c, 1)), bcast((c, 1)),    # gn1 gamma/beta
                  bcast((9, c, c)), bcast((c, hw)),  # conv1 weights / bias+t
                  bcast((c, 1)), bcast((c, 1)),    # gn2 gamma/beta
                  bcast((9, c, c)), bcast((c, hw)),  # conv2 weights / bias+t
                  bcast((c, 1)), bcast((c, 1))],   # gn3 gamma/beta
        out_specs=per_sample,
        compiler_params=pltpu.CompilerParams(dimension_semantics=("parallel",)),
        cost_estimate=pl.CostEstimate(flops=flops, transcendentals=3 * nv * c,
                                      bytes_accessed=bytes_accessed),
    )(v2, valid9, agg, g1, b1, w1, tb1, g2, b2, w2, tb2, g3, b3)

    out = out2.reshape(nv, c, h, w)
    # TODO(synk): the PyTorch module's self.nfe += 1 side-effect has no functional equivalent.
    return jnp.concatenate([v, out], axis=0)


# ----------------- deterministic parameter init & pure-JAX reference -----------------

def init_params(key, dim):
    cin = dim + 1
    k = jax.random.split(key, 10)

    def gn_init(kw, kb):
        return (1.0 + 0.1 * jax.random.normal(kw, (dim,), jnp.float32),
                0.1 * jax.random.normal(kb, (dim,), jnp.float32))

    def conv_init(kw, kb):
        fan = float(cin * 9)
        return (jax.random.normal(kw, (dim, cin, 3, 3), jnp.float32) / jnp.sqrt(fan),
                0.1 * jax.random.normal(kb, (dim,), jnp.float32))

    gn1_w, gn1_b = gn_init(k[0], k[1])
    c1_w, c1_b = conv_init(k[2], k[3])
    gn2_w, gn2_b = gn_init(k[4], k[5])
    c2_w, c2_b = conv_init(k[6], k[7])
    gn3_w, gn3_b = gn_init(k[8], k[9])
    return dict(gn1_w=gn1_w, gn1_b=gn1_b, c1_w=c1_w, c1_b=c1_b,
                gn2_w=gn2_w, gn2_b=gn2_b, c2_w=c2_w, c2_b=c2_b,
                gn3_w=gn3_w, gn3_b=gn3_b)


def ref_forward(t, x, params, groups):
    n = x.shape[0]
    cutoff = n // 2
    v = x[cutoff:]

    def gn(y, g, b):
        nn_, c, h, w = y.shape
        yg = y.reshape(nn_, groups, c // groups, h, w)
        mean = yg.mean(axis=(2, 3, 4), keepdims=True)
        var = ((yg - mean) ** 2).mean(axis=(2, 3, 4), keepdims=True)
        yn = ((yg - mean) / jnp.sqrt(var + EPS)).reshape(nn_, c, h, w)
        return yn * g[None, :, None, None] + b[None, :, None, None]

    def cconv(y, wt, bs):
        tt = jnp.full_like(y[:, :1], t)
        tty = jnp.concatenate([tt, y], axis=1)
        z = lax.conv_general_dilated(tty, wt, (1, 1), ((1, 1), (1, 1)),
                                     dimension_numbers=("NCHW", "OIHW", "NCHW"),
                                     precision=lax.Precision.HIGHEST)
        return z + bs[None, :, None, None]

    out = gn(v, params["gn1_w"], params["gn1_b"])
    out = jnp.maximum(out, 0.0)
    out = cconv(out, params["c1_w"], params["c1_b"])
    out = gn(out, params["gn2_w"], params["gn2_b"])
    out = jnp.maximum(out, 0.0)
    out = cconv(out, params["c2_w"], params["c2_b"])
    out = gn(out, params["gn3_w"], params["gn3_b"])
    return jnp.concatenate([v, out], axis=0)


if __name__ == "__main__":
    key = jax.random.PRNGKey(0)
    dim, N, H, W = 4, 4, 16, 16
    groups = min(32, dim)

    kx_, kp = jax.random.split(key)
    x = jax.random.normal(kx_, (N, dim, H, W), jnp.float32)
    t = jnp.float32(0.5)
    params = init_params(kp, dim)

    out = odefunc_forward(t, x, params, groups)
    out = jax.block_until_ready(out)

    ref = ref_forward(t, x, params, groups)
    assert out.shape == x.shape, (out.shape, x.shape)
    max_err = float(jnp.max(jnp.abs(out - ref)))
    # default (non-HIGHEST) matmul precision on the MXU -> allow a few e-3 of rounding
    if max_err < 2e-2:
        print("KERNEL_OK")
    else:
        print(f"MISMATCH max_abs_err={max_err}")
</pallas_src>

<mosaic_0001>
module attributes {stable_mosaic.version = 11 : i64} {
  func.func @_odefunc_kernel(%arg0: i32, %arg1: memref<1x4x256xf32, #tpu.memory_space<vmem>>, %arg2: memref<9x256xf32, #tpu.memory_space<vmem>>, %arg3: memref<4x4xf32, #tpu.memory_space<vmem>>, %arg4: memref<4x1xf32, #tpu.memory_space<vmem>>, %arg5: memref<4x1xf32, #tpu.memory_space<vmem>>, %arg6: memref<9x4x4xf32, #tpu.memory_space<vmem>>, %arg7: memref<4x256xf32, #tpu.memory_space<vmem>>, %arg8: memref<4x1xf32, #tpu.memory_space<vmem>>, %arg9: memref<4x1xf32, #tpu.memory_space<vmem>>, %arg10: memref<9x4x4xf32, #tpu.memory_space<vmem>>, %arg11: memref<4x256xf32, #tpu.memory_space<vmem>>, %arg12: memref<4x1xf32, #tpu.memory_space<vmem>>, %arg13: memref<4x1xf32, #tpu.memory_space<vmem>>, %arg14: memref<1x4x256xf32, #tpu.memory_space<vmem>>) attributes {dimension_semantics = [#tpu.dimension_semantics<parallel>], iteration_bounds = array<i64: 2>, scalar_prefetch = 0 : i64, scratch_operands = 0 : i64, tpu.core_type = #tpu.core_type<tc>, window_params = [{transform_indices = @transform_0, window_bounds = array<i64: 1, 4, 256>}, {pipeline_mode = #tpu.pipeline_mode<synchronous>, transform_indices = @transform_1, window_bounds = array<i64: 9, 256>}, {pipeline_mode = #tpu.pipeline_mode<synchronous>, transform_indices = @transform_2, window_bounds = array<i64: 4, 4>}, {pipeline_mode = #tpu.pipeline_mode<synchronous>, transform_indices = @transform_3, window_bounds = array<i64: 4, 1>}, {pipeline_mode = #tpu.pipeline_mode<synchronous>, transform_indices = @transform_4, window_bounds = array<i64: 4, 1>}, {pipeline_mode = #tpu.pipeline_mode<synchronous>, transform_indices = @transform_5, window_bounds = array<i64: 9, 4, 4>}, {pipeline_mode = #tpu.pipeline_mode<synchronous>, transform_indices = @transform_6, window_bounds = array<i64: 4, 256>}, {pipeline_mode = #tpu.pipeline_mode<synchronous>, transform_indices = @transform_7, window_bounds = array<i64: 4, 1>}, {pipeline_mode = #tpu.pipeline_mode<synchronous>, transform_indices = @transform_8, window_bounds = array<i64: 4, 1>}, {pipeline_mode = #tpu.pipeline_mode<synchronous>, transform_indices = @transform_9, window_bounds = array<i64: 9, 4, 4>}, {pipeline_mode = #tpu.pipeline_mode<synchronous>, transform_indices = @transform_10, window_bounds = array<i64: 4, 256>}, {pipeline_mode = #tpu.pipeline_mode<synchronous>, transform_indices = @transform_11, window_bounds = array<i64: 4, 1>}, {pipeline_mode = #tpu.pipeline_mode<synchronous>, transform_indices = @transform_12, window_bounds = array<i64: 4, 1>}, {transform_indices = @transform_13, window_bounds = array<i64: 1, 4, 256>}]} {
    %c0 = arith.constant 0 : index
    %c0_0 = arith.constant 0 : index
    %0 = vector.load %arg3[%c0, %c0_0] : memref<4x4xf32, #tpu.memory_space<vmem>>, vector<4x4xf32>
    %c0_1 = arith.constant 0 : index
    %c0_2 = arith.constant 0 : index
    %c0_3 = arith.constant 0 : index
    %1 = vector.load %arg1[%c0_1, %c0_2, %c0_3] : memref<1x4x256xf32, #tpu.memory_space<vmem>>, vector<1x4x256xf32>
    %2 = vector.shape_cast %1 : vector<1x4x256xf32> to vector<4x256xf32>
    %cst = arith.constant dense<0.000000e+00> : vector<4x256xf32>
    %3 = tpu.matmul %0, %2, %cst {dimension_numbers = #tpu.dot_dimension_numbers<[1], [0], [0], [1], [0, 0, 1, 1], [], []>} : vector<4x4xf32>, vector<4x256xf32>, vector<4x256xf32> -> vector<4x256xf32>
    %cst_4 = arith.constant dense<0.000000e+00> : vector<4xf32>
    %4 = vector.multi_reduction <add>, %3, %cst_4 [1] : vector<4x256xf32> to vector<4xf32>
    %5 = vector.shape_cast %4 : vector<4xf32> to vector<4x1xf32>
    %cst_5 = arith.constant 3.906250e-03 : f32
    %6 = vector.broadcast %cst_5 : f32 to vector<4x1xf32>
    %7 = arith.mulf %5, %6 : vector<4x1xf32>
    %8 = vector.broadcast %7 : vector<4x1xf32> to vector<4x256xf32>
    %9 = arith.subf %2, %8 : vector<4x256xf32>
    %10 = arith.mulf %9, %9 : vector<4x256xf32>
    %cst_6 = arith.constant dense<0.000000e+00> : vector<4x256xf32>
    %11 = tpu.matmul %0, %10, %cst_6 {dimension_numbers = #tpu.dot_dimension_numbers<[1], [0], [0], [1], [0, 0, 1, 1], [], []>} : vector<4x4xf32>, vector<4x256xf32>, vector<4x256xf32> -> vector<4x256xf32>
    %cst_7 = arith.constant dense<0.000000e+00> : vector<4xf32>
    %12 = vector.multi_reduction <add>, %11, %cst_7 [1] : vector<4x256xf32> to vector<4xf32>
    %13 = vector.shape_cast %12 : vector<4xf32> to vector<4x1xf32>
    %cst_8 = arith.constant 3.906250e-03 : f32
    %14 = vector.broadcast %cst_8 : f32 to vector<4x1xf32>
    %15 = arith.mulf %13, %14 : vector<4x1xf32>
    %cst_9 = arith.constant 9.99999974E-6 : f32
    %16 = vector.broadcast %cst_9 : f32 to vector<4x1xf32>
    %17 = arith.addf %15, %16 : vector<4x1xf32>
    %18 = math.rsqrt %17 : vector<4x1xf32>
    %c0_10 = arith.constant 0 : index
    %c0_11 = arith.constant 0 : index
    %19 = vector.load %arg4[%c0_10, %c0_11] : memref<4x1xf32, #tpu.memory_space<vmem>>, vector<4x1xf32>
    %20 = arith.mulf %18, %19 : vector<4x1xf32>
    %21 = vector.broadcast %20 : vector<4x1xf32> to vector<4x256xf32>
    %22 = arith.mulf %9, %21 : vector<4x256xf32>
    %c0_12 = arith.constant 0 : index
    %c0_13 = arith.constant 0 : index
    %23 = vector.load %arg5[%c0_12, %c0_13] : memref<4x1xf32, #tpu.memory_space<vmem>>, vector<4x1xf32>
    %24 = vector.broadcast %23 : vector<4x1xf32> to vector<4x256xf32>
    %25 = arith.addf %22, %24 : vector<4x256xf32>
    %cst_14 = arith.constant 0.000000e+00 : f32
    %26 = vector.broadcast %cst_14 : f32 to vector<4x256xf32>
    %27 = arith.maximumf %25, %26 : vector<4x256xf32>
    %c0_15 = arith.constant 0 : index
    %c0_16 = arith.constant 0 : index
    %28 = vector.load %arg7[%c0_15, %c0_16] : memref<4x256xf32, #tpu.memory_space<vmem>>, vector<4x256xf32>
    %c17_i32 = arith.constant 17 : i32
    %29 = tpu.dynamic_rotate %27 by %c17_i32 dim 1 : vector<4x256xf32>, i32 -> vector<4x256xf32>
    %c0_17 = arith.constant 0 : index
    %c0_18 = arith.constant 0 : index
    %30 = vector.load %arg2[%c0_17, %c0_18] : memref<9x256xf32, #tpu.memory_space<vmem>>, vector<1x256xf32>
    %31 = vector.broadcast %30 : vector<1x256xf32> to vector<4x256xf32>
    %32 = arith.mulf %29, %31 : vector<4x256xf32>
    %c0_19 = arith.constant 0 : index
    %c0_20 = arith.constant 0 : index
    %c0_21 = arith.constant 0 : index
    %33 = vector.load %arg6[%c0_19, %c0_20, %c0_21] : memref<9x4x4xf32, #tpu.memory_space<vmem>>, vector<1x4x4xf32>
    %34 = vector.shape_cast %33 : vector<1x4x4xf32> to vector<4x4xf32>
    %cst_22 = arith.constant dense<0.000000e+00> : vector<4x256xf32>
    %35 = tpu.matmul %34, %32, %cst_22 {dimension_numbers = #tpu.dot_dimension_numbers<[1], [0], [0], [1], [0, 0, 1, 1], [], []>} : vector<4x4xf32>, vector<4x256xf32>, vector<4x256xf32> -> vector<4x256xf32>
    %36 = arith.addf %28, %35 : vector<4x256xf32>
    %c16_i32 = arith.constant 16 : i32
    %37 = tpu.dynamic_rotate %27 by %c16_i32 dim 1 : vector<4x256xf32>, i32 -> vector<4x256xf32>
    %c1 = arith.constant 1 : index
    %c0_23 = arith.constant 0 : index
    %38 = vector.load %arg2[%c1, %c0_23] : memref<9x256xf32, #tpu.memory_space<vmem>>, vector<1x256xf32>
    %39 = vector.broadcast %38 : vector<1x256xf32> to vector<4x256xf32>
    %40 = arith.mulf %37, %39 : vector<4x256xf32>
    %c1_24 = arith.constant 1 : index
    %c0_25 = arith.constant 0 : index
    %c0_26 = arith.constant 0 : index
    %41 = vector.load %arg6[%c1_24, %c0_25, %c0_26] : memref<9x4x4xf32, #tpu.memory_space<vmem>>, vector<1x4x4xf32>
    %42 = vector.shape_cast %41 : vector<1x4x4xf32> to vector<4x4xf32>
    %cst_27 = arith.constant dense<0.000000e+00> : vector<4x256xf32>
    %43 = tpu.matmul %42, %40, %cst_27 {dimension_numbers = #tpu.dot_dimension_numbers<[1], [0], [0], [1], [0, 0, 1, 1], [], []>} : vector<4x4xf32>, vector<4x256xf32>, vector<4x256xf32> -> vector<4x256xf32>
    %44 = arith.addf %36, %43 : vector<4x256xf32>
    %c15_i32 = arith.constant 15 : i32
    %45 = tpu.dynamic_rotate %27 by %c15_i32 dim 1 : vector<4x256xf32>, i32 -> vector<4x256xf32>
    %c2 = arith.constant 2 : index
    %c0_28 = arith.constant 0 : index
    %46 = vector.load %arg2[%c2, %c0_28] : memref<9x256xf32, #tpu.memory_space<vmem>>, vector<1x256xf32>
    %47 = vector.broadcast %46 : vector<1x256xf32> to vector<4x256xf32>
    %48 = arith.mulf %45, %47 : vector<4x256xf32>
    %c2_29 = arith.constant 2 : index
    %c0_30 = arith.constant 0 : index
    %c0_31 = arith.constant 0 : index
    %49 = vector.load %arg6[%c2_29, %c0_30, %c0_31] : memref<9x4x4xf32, #tpu.memory_space<vmem>>, vector<1x4x4xf32>
    %50 = vector.shape_cast %49 : vector<1x4x4xf32> to vector<4x4xf32>
    %cst_32 = arith.constant dense<0.000000e+00> : vector<4x256xf32>
    %51 = tpu.matmul %50, %48, %cst_32 {dimension_numbers = #tpu.dot_dimension_numbers<[1], [0], [0], [1], [0, 0, 1, 1], [], []>} : vector<4x4xf32>, vector<4x256xf32>, vector<4x256xf32> -> vector<4x256xf32>
    %52 = arith.addf %44, %51 : vector<4x256xf32>
    %c1_i32 = arith.constant 1 : i32
    %53 = tpu.dynamic_rotate %27 by %c1_i32 dim 1 : vector<4x256xf32>, i32 -> vector<4x256xf32>
    %c3 = arith.constant 3 : index
    %c0_33 = arith.constant 0 : index
    %54 = vector.load %arg2[%c3, %c0_33] : memref<9x256xf32, #tpu.memory_space<vmem>>, vector<1x256xf32>
    %55 = vector.broadcast %54 : vector<1x256xf32> to vector<4x256xf32>
    %56 = arith.mulf %53, %55 : vector<4x256xf32>
    %c3_34 = arith.constant 3 : index
    %c0_35 = arith.constant 0 : index
    %c0_36 = arith.constant 0 : index
    %57 = vector.load %arg6[%c3_34, %c0_35, %c0_36] : memref<9x4x4xf32, #tpu.memory_space<vmem>>, vector<1x4x4xf32>
    %58 = vector.shape_cast %57 : vector<1x4x4xf32> to vector<4x4xf32>
    %cst_37 = arith.constant dense<0.000000e+00> : vector<4x256xf32>
    %59 = tpu.matmul %58, %56, %cst_37 {dimension_numbers = #tpu.dot_dimension_numbers<[1], [0], [0], [1], [0, 0, 1, 1], [], []>} : vector<4x4xf32>, vector<4x256xf32>, vector<4x256xf32> -> vector<4x256xf32>
    %60 = arith.addf %52, %59 : vector<4x256xf32>
    %c4 = arith.constant 4 : index
    %c0_38 = arith.constant 0 : index
    %61 = vector.load %arg2[%c4, %c0_38] : memref<9x256xf32, #tpu.memory_space<vmem>>, vector<1x256xf32>
    %62 = vector.broadcast %61 : vector<1x256xf32> to vector<4x256xf32>
    %63 = arith.mulf %27, %62 : vector<4x256xf32>
    %c4_39 = arith.constant 4 : index
    %c0_40 = arith.constant 0 : index
    %c0_41 = arith.constant 0 : index
    %64 = vector.load %arg6[%c4_39, %c0_40, %c0_41] : memref<9x4x4xf32, #tpu.memory_space<vmem>>, vector<1x4x4xf32>
    %65 = vector.shape_cast %64 : vector<1x4x4xf32> to vector<4x4xf32>
    %cst_42 = arith.constant dense<0.000000e+00> : vector<4x256xf32>
    %66 = tpu.matmul %65, %63, %cst_42 {dimension_numbers = #tpu.dot_dimension_numbers<[1], [0], [0], [1], [0, 0, 1, 1], [], []>} : vector<4x4xf32>, vector<4x256xf32>, vector<4x256xf32> -> vector<4x256xf32>
    %67 = arith.addf %60, %66 : vector<4x256xf32>
    %c255_i32 = arith.constant 255 : i32
    %68 = tpu.dynamic_rotate %27 by %c255_i32 dim 1 : vector<4x256xf32>, i32 -> vector<4x256xf32>
    %c5 = arith.constant 5 : index
    %c0_43 = arith.constant 0 : index
    %69 = vector.load %arg2[%c5, %c0_43] : memref<9x256xf32, #tpu.memory_space<vmem>>, vector<1x256xf32>
    %70 = vector.broadcast %69 : vector<1x256xf32> to vector<4x256xf32>
    %71 = arith.mulf %68, %70 : vector<4x256xf32>
    %c5_44 = arith.constant 5 : index
    %c0_45 = arith.constant 0 : index
    %c0_46 = arith.constant 0 : index
    %72 = vector.load %arg6[%c5_44, %c0_45, %c0_46] : memref<9x4x4xf32, #tpu.memory_space<vmem>>, vector<1x4x4xf32>
    %73 = vector.shape_cast %72 : vector<1x4x4xf32> to vector<4x4xf32>
    %cst_47 = arith.constant dense<0.000000e+00> : vector<4x256xf32>
    %74 = tpu.matmul %73, %71, %cst_47 {dimension_numbers = #tpu.dot_dimension_numbers<[1], [0], [0], [1], [0, 0, 1, 1], [], []>} : vector<4x4xf32>, vector<4x256xf32>, vector<4x256xf32> -> vector<4x256xf32>
    %75 = arith.addf %67, %74 : vector<4x256xf32>
    %c241_i32 = arith.constant 241 : i32
    %76 = tpu.dynamic_rotate %27 by %c241_i32 dim 1 : vector<4x256xf32>, i32 -> vector<4x256xf32>
    %c6 = arith.constant 6 : index
    %c0_48 = arith.constant 0 : index
    %77 = vector.load %arg2[%c6, %c0_48] : memref<9x256xf32, #tpu.memory_space<vmem>>, vector<1x256xf32>
    %78 = vector.broadcast %77 : vector<1x256xf32> to vector<4x256xf32>
    %79 = arith.mulf %76, %78 : vector<4x256xf32>
    %c6_49 = arith.constant 6 : index
    %c0_50 = arith.constant 0 : index
    %c0_51 = arith.constant 0 : index
    %80 = vector.load %arg6[%c6_49, %c0_50, %c0_51] : memref<9x4x4xf32, #tpu.memory_space<vmem>>, vector<1x4x4xf32>
    %81 = vector.shape_cast %80 : vector<1x4x4xf32> to vector<4x4xf32>
    %cst_52 = arith.constant dense<0.000000e+00> : vector<4x256xf32>
    %82 = tpu.matmul %81, %79, %cst_52 {dimension_numbers = #tpu.dot_dimension_numbers<[1], [0], [0], [1], [0, 0, 1, 1], [], []>} : vector<4x4xf32>, vector<4x256xf32>, vector<4x256xf32> -> vector<4x256xf32>
    %83 = arith.addf %75, %82 : vector<4x256xf32>
    %c240_i32 = arith.constant 240 : i32
    %84 = tpu.dynamic_rotate %27 by %c240_i32 dim 1 : vector<4x256xf32>, i32 -> vector<4x256xf32>
    %c7 = arith.constant 7 : index
    %c0_53 = arith.constant 0 : index
    %85 = vector.load %arg2[%c7, %c0_53] : memref<9x256xf32, #tpu.memory_space<vmem>>, vector<1x256xf32>
    %86 = vector.broadcast %85 : vector<1x256xf32> to vector<4x256xf32>
    %87 = arith.mulf %84, %86 : vector<4x256xf32>
    %c7_54 = arith.constant 7 : index
    %c0_55 = arith.constant 0 : index
    %c0_56 = arith.constant 0 : index
    %88 = vector.load %arg6[%c7_54, %c0_55, %c0_56] : memref<9x4x4xf32, #tpu.memory_space<vmem>>, vector<1x4x4xf32>
    %89 = vector.shape_cast %88 : vector<1x4x4xf32> to vector<4x4xf32>
    %cst_57 = arith.constant dense<0.000000e+00> : vector<4x256xf32>
    %90 = tpu.matmul %89, %87, %cst_57 {dimension_numbers = #tpu.dot_dimension_numbers<[1], [0], [0], [1], [0, 0, 1, 1], [], []>} : vector<4x4xf32>, vector<4x256xf32>, vector<4x256xf32> -> vector<4x256xf32>
    %91 = arith.addf %83, %90 : vector<4x256xf32>
    %c239_i32 = arith.constant 239 : i32
    %92 = tpu.dynamic_rotate %27 by %c239_i32 dim 1 : vector<4x256xf32>, i32 -> vector<4x256xf32>
    %c8 = arith.constant 8 : index
    %c0_58 = arith.constant 0 : index
    %93 = vector.load %arg2[%c8, %c0_58] : memref<9x256xf32, #tpu.memory_space<vmem>>, vector<1x256xf32>
    %94 = vector.broadcast %93 : vector<1x256xf32> to vector<4x256xf32>
    %95 = arith.mulf %92, %94 : vector<4x256xf32>
    %c8_59 = arith.constant 8 : index
    %c0_60 = arith.constant 0 : index
    %c0_61 = arith.constant 0 : index
    %96 = vector.load %arg6[%c8_59, %c0_60, %c0_61] : memref<9x4x4xf32, #tpu.memory_space<vmem>>, vector<1x4x4xf32>
    %97 = vector.shape_cast %96 : vector<1x4x4xf32> to vector<4x4xf32>
    %cst_62 = arith.constant dense<0.000000e+00> : vector<4x256xf32>
    %98 = tpu.matmul %97, %95, %cst_62 {dimension_numbers = #tpu.dot_dimension_numbers<[1], [0], [0], [1], [0, 0, 1, 1], [], []>} : vector<4x4xf32>, vector<4x256xf32>, vector<4x256xf32> -> vector<4x256xf32>
    %99 = arith.addf %91, %98 : vector<4x256xf32>
    %cst_63 = arith.constant dense<0.000000e+00> : vector<4x256xf32>
    %100 = tpu.matmul %0, %99, %cst_63 {dimension_numbers = #tpu.dot_dimension_numbers<[1], [0], [0], [1], [0, 0, 1, 1], [], []>} : vector<4x4xf32>, vector<4x256xf32>, vector<4x256xf32> -> vector<4x256xf32>
    %cst_64 = arith.constant dense<0.000000e+00> : vector<4xf32>
    %101 = vector.multi_reduction <add>, %100, %cst_64 [1] : vector<4x256xf32> to vector<4xf32>
    %102 = vector.shape_cast %101 : vector<4xf32> to vector<4x1xf32>
    %cst_65 = arith.constant 3.906250e-03 : f32
    %103 = vector.broadcast %cst_65 : f32 to vector<4x1xf32>
    %104 = arith.mulf %102, %103 : vector<4x1xf32>
    %105 = vector.broadcast %104 : vector<4x1xf32> to vector<4x256xf32>
    %106 = arith.subf %99, %105 : vector<4x256xf32>
    %107 = arith.mulf %106, %106 : vector<4x256xf32>
    %cst_66 = arith.constant dense<0.000000e+00> : vector<4x256xf32>
    %108 = tpu.matmul %0, %107, %cst_66 {dimension_numbers = #tpu.dot_dimension_numbers<[1], [0], [0], [1], [0, 0, 1, 1], [], []>} : vector<4x4xf32>, vector<4x256xf32>, vector<4x256xf32> -> vector<4x256xf32>
    %cst_67 = arith.constant dense<0.000000e+00> : vector<4xf32>
    %109 = vector.multi_reduction <add>, %108, %cst_67 [1] : vector<4x256xf32> to vector<4xf32>
    %110 = vector.shape_cast %109 : vector<4xf32> to vector<4x1xf32>
    %cst_68 = arith.constant 3.906250e-03 : f32
    %111 = vector.broadcast %cst_68 : f32 to vector<4x1xf32>
    %112 = arith.mulf %110, %111 : vector<4x1xf32>
    %cst_69 = arith.constant 9.99999974E-6 : f32
    %113 = vector.broadcast %cst_69 : f32 to vector<4x1xf32>
    %114 = arith.addf %112, %113 : vector<4x1xf32>
    %115 = math.rsqrt %114 : vector<4x1xf32>
    %c0_70 = arith.constant 0 : index
    %c0_71 = arith.constant 0 : index
    %116 = vector.load %arg8[%c0_70, %c0_71] : memref<4x1xf32, #tpu.memory_space<vmem>>, vector<4x1xf32>
    %117 = arith.mulf %115, %116 : vector<4x1xf32>
    %118 = vector.broadcast %117 : vector<4x1xf32> to vector<4x256xf32>
    %119 = arith.mulf %106, %118 : vector<4x256xf32>
    %c0_72 = arith.constant 0 : index
    %c0_73 = arith.constant 0 : index
    %120 = vector.load %arg9[%c0_72, %c0_73] : memref<4x1xf32, #tpu.memory_space<vmem>>, vector<4x1xf32>
    %121 = vector.broadcast %120 : vector<4x1xf32> to vector<4x256xf32>
    %122 = arith.addf %119, %121 : vector<4x256xf32>
    %cst_74 = arith.constant 0.000000e+00 : f32
    %123 = vector.broadcast %cst_74 : f32 to vector<4x256xf32>
    %124 = arith.maximumf %122, %123 : vector<4x256xf32>
    %c0_75 = arith.constant 0 : index
    %c0_76 = arith.constant 0 : index
    %125 = vector.load %arg11[%c0_75, %c0_76] : memref<4x256xf32, #tpu.memory_space<vmem>>, vector<4x256xf32>
    %c17_i32_77 = arith.constant 17 : i32
    %126 = tpu.dynamic_rotate %124 by %c17_i32_77 dim 1 : vector<4x256xf32>, i32 -> vector<4x256xf32>
    %c0_78 = arith.constant 0 : index
    %c0_79 = arith.constant 0 : index
    %127 = vector.load %arg2[%c0_78, %c0_79] : memref<9x256xf32, #tpu.memory_space<vmem>>, vector<1x256xf32>
    %128 = vector.broadcast %127 : vector<1x256xf32> to vector<4x256xf32>
    %129 = arith.mulf %126, %128 : vector<4x256xf32>
    %c0_80 = arith.constant 0 : index
    %c0_81 = arith.constant 0 : index
    %c0_82 = arith.constant 0 : index
    %130 = vector.load %arg10[%c0_80, %c0_81, %c0_82] : memref<9x4x4xf32, #tpu.memory_space<vmem>>, vector<1x4x4xf32>
    %131 = vector.shape_cast %130 : vector<1x4x4xf32> to vector<4x4xf32>
    %cst_83 = arith.constant dense<0.000000e+00> : vector<4x256xf32>
    %132 = tpu.matmul %131, %129, %cst_83 {dimension_numbers = #tpu.dot_dimension_numbers<[1], [0], [0], [1], [0, 0, 1, 1], [], []>} : vector<4x4xf32>, vector<4x256xf32>, vector<4x256xf32> -> vector<4x256xf32>
    %133 = arith.addf %125, %132 : vector<4x256xf32>
    %c16_i32_84 = arith.constant 16 : i32
    %134 = tpu.dynamic_rotate %124 by %c16_i32_84 dim 1 : vector<4x256xf32>, i32 -> vector<4x256xf32>
    %c1_85 = arith.constant 1 : index
    %c0_86 = arith.constant 0 : index
    %135 = vector.load %arg2[%c1_85, %c0_86] : memref<9x256xf32, #tpu.memory_space<vmem>>, vector<1x256xf32>
    %136 = vector.broadcast %135 : vector<1x256xf32> to vector<4x256xf32>
    %137 = arith.mulf %134, %136 : vector<4x256xf32>
    %c1_87 = arith.constant 1 : index
    %c0_88 = arith.constant 0 : index
    %c0_89 = arith.constant 0 : index
    %138 = vector.load %arg10[%c1_87, %c0_88, %c0_89] : memref<9x4x4xf32, #tpu.memory_space<vmem>>, vector<1x4x4xf32>
    %139 = vector.shape_cast %138 : vector<1x4x4xf32> to vector<4x4xf32>
    %cst_90 = arith.constant dense<0.000000e+00> : vector<4x256xf32>
    %140 = tpu.matmul %139, %137, %cst_90 {dimension_numbers = #tpu.dot_dimension_numbers<[1], [0], [0], [1], [0, 0, 1, 1], [], []>} : vector<4x4xf32>, vector<4x256xf32>, vector<4x256xf32> -> vector<4x256xf32>
    %141 = arith.addf %133, %140 : vector<4x256xf32>
    %c15_i32_91 = arith.constant 15 : i32
    %142 = tpu.dynamic_rotate %124 by %c15_i32_91 dim 1 : vector<4x256xf32>, i32 -> vector<4x256xf32>
    %c2_92 = arith.constant 2 : index
    %c0_93 = arith.constant 0 : index
    %143 = vector.load %arg2[%c2_92, %c0_93] : memref<9x256xf32, #tpu.memory_space<vmem>>, vector<1x256xf32>
    %144 = vector.broadcast %143 : vector<1x256xf32> to vector<4x256xf32>
    %145 = arith.mulf %142, %144 : vector<4x256xf32>
    %c2_94 = arith.constant 2 : index
    %c0_95 = arith.constant 0 : index
    %c0_96 = arith.constant 0 : index
    %146 = vector.load %arg10[%c2_94, %c0_95, %c0_96] : memref<9x4x4xf32, #tpu.memory_space<vmem>>, vector<1x4x4xf32>
    %147 = vector.shape_cast %146 : vector<1x4x4xf32> to vector<4x4xf32>
    %cst_97 = arith.constant dense<0.000000e+00> : vector<4x256xf32>
    %148 = tpu.matmul %147, %145, %cst_97 {dimension_numbers = #tpu.dot_dimension_numbers<[1], [0], [0], [1], [0, 0, 1, 1], [], []>} : vector<4x4xf32>, vector<4x256xf32>, vector<4x256xf32> -> vector<4x256xf32>
    %149 = arith.addf %141, %148 : vector<4x256xf32>
    %c1_i32_98 = arith.constant 1 : i32
    %150 = tpu.dynamic_rotate %124 by %c1_i32_98 dim 1 : vector<4x256xf32>, i32 -> vector<4x256xf32>
    %c3_99 = arith.constant 3 : index
    %c0_100 = arith.constant 0 : index
    %151 = vector.load %arg2[%c3_99, %c0_100] : memref<9x256xf32, #tpu.memory_space<vmem>>, vector<1x256xf32>
    %152 = vector.broadcast %151 : vector<1x256xf32> to vector<4x256xf32>
    %153 = arith.mulf %150, %152 : vector<4x256xf32>
    %c3_101 = arith.constant 3 : index
    %c0_102 = arith.constant 0 : index
    %c0_103 = arith.constant 0 : index
    %154 = vector.load %arg10[%c3_101, %c0_102, %c0_103] : memref<9x4x4xf32, #tpu.memory_space<vmem>>, vector<1x4x4xf32>
    %155 = vector.shape_cast %154 : vector<1x4x4xf32> to vector<4x4xf32>
    %cst_104 = arith.constant dense<0.000000e+00> : vector<4x256xf32>
    %156 = tpu.matmul %155, %153, %cst_104 {dimension_numbers = #tpu.dot_dimension_numbers<[1], [0], [0], [1], [0, 0, 1, 1], [], []>} : vector<4x4xf32>, vector<4x256xf32>, vector<4x256xf32> -> vector<4x256xf32>
    %157 = arith.addf %149, %156 : vector<4x256xf32>
    %c4_105 = arith.constant 4 : index
    %c0_106 = arith.constant 0 : index
    %158 = vector.load %arg2[%c4_105, %c0_106] : memref<9x256xf32, #tpu.memory_space<vmem>>, vector<1x256xf32>
    %159 = vector.broadcast %158 : vector<1x256xf32> to vector<4x256xf32>
    %160 = arith.mulf %124, %159 : vector<4x256xf32>
    %c4_107 = arith.constant 4 : index
    %c0_108 = arith.constant 0 : index
    %c0_109 = arith.constant 0 : index
    %161 = vector.load %arg10[%c4_107, %c0_108, %c0_109] : memref<9x4x4xf32, #tpu.memory_space<vmem>>, vector<1x4x4xf32>
    %162 = vector.shape_cast %161 : vector<1x4x4xf32> to vector<4x4xf32>
    %cst_110 = arith.constant dense<0.000000e+00> : vector<4x256xf32>
    %163 = tpu.matmul %162, %160, %cst_110 {dimension_numbers = #tpu.dot_dimension_numbers<[1], [0], [0], [1], [0, 0, 1, 1], [], []>} : vector<4x4xf32>, vector<4x256xf32>, vector<4x256xf32> -> vector<4x256xf32>
    %164 = arith.addf %157, %163 : vector<4x256xf32>
    %c255_i32_111 = arith.constant 255 : i32
    %165 = tpu.dynamic_rotate %124 by %c255_i32_111 dim 1 : vector<4x256xf32>, i32 -> vector<4x256xf32>
    %c5_112 = arith.constant 5 : index
    %c0_113 = arith.constant 0 : index
    %166 = vector.load %arg2[%c5_112, %c0_113] : memref<9x256xf32, #tpu.memory_space<vmem>>, vector<1x256xf32>
    %167 = vector.broadcast %166 : vector<1x256xf32> to vector<4x256xf32>
    %168 = arith.mulf %165, %167 : vector<4x256xf32>
    %c5_114 = arith.constant 5 : index
    %c0_115 = arith.constant 0 : index
    %c0_116 = arith.constant 0 : index
    %169 = vector.load %arg10[%c5_114, %c0_115, %c0_116] : memref<9x4x4xf32, #tpu.memory_space<vmem>>, vector<1x4x4xf32>
    %170 = vector.shape_cast %169 : vector<1x4x4xf32> to vector<4x4xf32>
    %cst_117 = arith.constant dense<0.000000e+00> : vector<4x256xf32>
    %171 = tpu.matmul %170, %168, %cst_117 {dimension_numbers = #tpu.dot_dimension_numbers<[1], [0], [0], [1], [0, 0, 1, 1], [], []>} : vector<4x4xf32>, vector<4x256xf32>, vector<4x256xf32> -> vector<4x256xf32>
    %172 = arith.addf %164, %171 : vector<4x256xf32>
    %c241_i32_118 = arith.constant 241 : i32
    %173 = tpu.dynamic_rotate %124 by %c241_i32_118 dim 1 : vector<4x256xf32>, i32 -> vector<4x256xf32>
    %c6_119 = arith.constant 6 : index
    %c0_120 = arith.constant 0 : index
    %174 = vector.load %arg2[%c6_119, %c0_120] : memref<9x256xf32, #tpu.memory_space<vmem>>, vector<1x256xf32>
    %175 = vector.broadcast %174 : vector<1x256xf32> to vector<4x256xf32>
    %176 = arith.mulf %173, %175 : vector<4x256xf32>
    %c6_121 = arith.constant 6 : index
    %c0_122 = arith.constant 0 : index
    %c0_123 = arith.constant 0 : index
    %177 = vector.load %arg10[%c6_121, %c0_122, %c0_123] : memref<9x4x4xf32, #tpu.memory_space<vmem>>, vector<1x4x4xf32>
    %178 = vector.shape_cast %177 : vector<1x4x4xf32> to vector<4x4xf32>
    %cst_124 = arith.constant dense<0.000000e+00> : vector<4x256xf32>
    %179 = tpu.matmul %178, %176, %cst_124 {dimension_numbers = #tpu.dot_dimension_numbers<[1], [0], [0], [1], [0, 0, 1, 1], [], []>} : vector<4x4xf32>, vector<4x256xf32>, vector<4x256xf32> -> vector<4x256xf32>
    %180 = arith.addf %172, %179 : vector<4x256xf32>
    %c240_i32_125 = arith.constant 240 : i32
    %181 = tpu.dynamic_rotate %124 by %c240_i32_125 dim 1 : vector<4x256xf32>, i32 -> vector<4x256xf32>
    %c7_126 = arith.constant 7 : index
    %c0_127 = arith.constant 0 : index
    %182 = vector.load %arg2[%c7_126, %c0_127] : memref<9x256xf32, #tpu.memory_space<vmem>>, vector<1x256xf32>
    %183 = vector.broadcast %182 : vector<1x256xf32> to vector<4x256xf32>
    %184 = arith.mulf %181, %183 : vector<4x256xf32>
    %c7_128 = arith.constant 7 : index
    %c0_129 = arith.constant 0 : index
    %c0_130 = arith.constant 0 : index
    %185 = vector.load %arg10[%c7_128, %c0_129, %c0_130] : memref<9x4x4xf32, #tpu.memory_space<vmem>>, vector<1x4x4xf32>
    %186 = vector.shape_cast %185 : vector<1x4x4xf32> to vector<4x4xf32>
    %cst_131 = arith.constant dense<0.000000e+00> : vector<4x256xf32>
    %187 = tpu.matmul %186, %184, %cst_131 {dimension_numbers = #tpu.dot_dimension_numbers<[1], [0], [0], [1], [0, 0, 1, 1], [], []>} : vector<4x4xf32>, vector<4x256xf32>, vector<4x256xf32> -> vector<4x256xf32>
    %188 = arith.addf %180, %187 : vector<4x256xf32>
    %c239_i32_132 = arith.constant 239 : i32
    %189 = tpu.dynamic_rotate %124 by %c239_i32_132 dim 1 : vector<4x256xf32>, i32 -> vector<4x256xf32>
    %c8_133 = arith.constant 8 : index
    %c0_134 = arith.constant 0 : index
    %190 = vector.load %arg2[%c8_133, %c0_134] : memref<9x256xf32, #tpu.memory_space<vmem>>, vector<1x256xf32>
    %191 = vector.broadcast %190 : vector<1x256xf32> to vector<4x256xf32>
    %192 = arith.mulf %189, %191 : vector<4x256xf32>
    %c8_135 = arith.constant 8 : index
    %c0_136 = arith.constant 0 : index
    %c0_137 = arith.constant 0 : index
    %193 = vector.load %arg10[%c8_135, %c0_136, %c0_137] : memref<9x4x4xf32, #tpu.memory_space<vmem>>, vector<1x4x4xf32>
    %194 = vector.shape_cast %193 : vector<1x4x4xf32> to vector<4x4xf32>
    %cst_138 = arith.constant dense<0.000000e+00> : vector<4x256xf32>
    %195 = tpu.matmul %194, %192, %cst_138 {dimension_numbers = #tpu.dot_dimension_numbers<[1], [0], [0], [1], [0, 0, 1, 1], [], []>} : vector<4x4xf32>, vector<4x256xf32>, vector<4x256xf32> -> vector<4x256xf32>
    %196 = arith.addf %188, %195 : vector<4x256xf32>
    %cst_139 = arith.constant dense<0.000000e+00> : vector<4x256xf32>
    %197 = tpu.matmul %0, %196, %cst_139 {dimension_numbers = #tpu.dot_dimension_numbers<[1], [0], [0], [1], [0, 0, 1, 1], [], []>} : vector<4x4xf32>, vector<4x256xf32>, vector<4x256xf32> -> vector<4x256xf32>
    %cst_140 = arith.constant dense<0.000000e+00> : vector<4xf32>
    %198 = vector.multi_reduction <add>, %197, %cst_140 [1] : vector<4x256xf32> to vector<4xf32>
    %199 = vector.shape_cast %198 : vector<4xf32> to vector<4x1xf32>
    %cst_141 = arith.constant 3.906250e-03 : f32
    %200 = vector.broadcast %cst_141 : f32 to vector<4x1xf32>
    %201 = arith.mulf %199, %200 : vector<4x1xf32>
    %202 = vector.broadcast %201 : vector<4x1xf32> to vector<4x256xf32>
    %203 = arith.subf %196, %202 : vector<4x256xf32>
    %204 = arith.mulf %203, %203 : vector<4x256xf32>
    %cst_142 = arith.constant dense<0.000000e+00> : vector<4x256xf32>
    %205 = tpu.matmul %0, %204, %cst_142 {dimension_numbers = #tpu.dot_dimension_numbers<[1], [0], [0], [1], [0, 0, 1, 1], [], []>} : vector<4x4xf32>, vector<4x256xf32>, vector<4x256xf32> -> vector<4x256xf32>
    %cst_143 = arith.constant dense<0.000000e+00> : vector<4xf32>
    %206 = vector.multi_reduction <add>, %205, %cst_143 [1] : vector<4x256xf32> to vector<4xf32>
    %207 = vector.shape_cast %206 : vector<4xf32> to vector<4x1xf32>
    %cst_144 = arith.constant 3.906250e-03 : f32
    %208 = vector.broadcast %cst_144 : f32 to vector<4x1xf32>
    %209 = arith.mulf %207, %208 : vector<4x1xf32>
    %cst_145 = arith.constant 9.99999974E-6 : f32
    %210 = vector.broadcast %cst_145 : f32 to vector<4x1xf32>
    %211 = arith.addf %209, %210 : vector<4x1xf32>
    %212 = math.rsqrt %211 : vector<4x1xf32>
    %c0_146 = arith.constant 0 : index
    %c0_147 = arith.constant 0 : index
    %213 = vector.load %arg12[%c0_146, %c0_147] : memref<4x1xf32, #tpu.memory_space<vmem>>, vector<4x1xf32>
    %214 = arith.mulf %212, %213 : vector<4x1xf32>
    %215 = vector.broadcast %214 : vector<4x1xf32> to vector<4x256xf32>
    %216 = arith.mulf %203, %215 : vector<4x256xf32>
    %c0_148 = arith.constant 0 : index
    %c0_149 = arith.constant 0 : index
    %217 = vector.load %arg13[%c0_148, %c0_149] : memref<4x1xf32, #tpu.memory_space<vmem>>, vector<4x1xf32>
    %218 = vector.broadcast %217 : vector<4x1xf32> to vector<4x256xf32>
    %219 = arith.addf %216, %218 : vector<4x256xf32>
    %c0_150 = arith.constant 0 : index
    %c0_151 = arith.constant 0 : index
    %c0_152 = arith.constant 0 : index
    %220 = vector.load %arg14[%c0_150, %c0_151, %c0_152] : memref<1x4x256xf32, #tpu.memory_space<vmem>>, vector<1x4x256xf32>
    %221 = vector.shape_cast %220 : vector<1x4x256xf32> to vector<4x256xf32>
    %222 = vector.shape_cast %219 : vector<4x256xf32> to vector<1x4x256xf32>
    tpu.vector_store %arg14[%c0_150, %c0_151, %c0_152], %222 {strides = array<i32>} : memref<1x4x256xf32, #tpu.memory_space<vmem>>, vector<1x4x256xf32>,
    return
  }
  func.func @transform_0(%arg0: i32) -> (i32, i32, i32) {
    %c0_i32 = arith.constant 0 : i32
    %c0_i32_0 = arith.constant 0 : i32
    %c0_i32_1 = arith.constant 0 : i32
    return %arg0, %c0_i32, %c0_i32_0 : i32, i32, i32
  }
  func.func @transform_1(%arg0: i32) -> (i32, i32) {
    %c0_i32 = arith.constant 0 : i32
    %c0_i32_0 = arith.constant 0 : i32
    %c0_i32_1 = arith.constant 0 : i32
    return %c0_i32, %c0_i32_0 : i32, i32
  }
  func.func @transform_2(%arg0: i32) -> (i32, i32) {
    %c0_i32 = arith.constant 0 : i32
    %c0_i32_0 = arith.constant 0 : i32
    %c0_i32_1 = arith.constant 0 : i32
    return %c0_i32, %c0_i32_0 : i32, i32
  }
  func.func @transform_3(%arg0: i32) -> (i32, i32) {
    %c0_i32 = arith.constant 0 : i32
    %c0_i32_0 = arith.constant 0 : i32
    %c0_i32_1 = arith.constant 0 : i32
    return %c0_i32, %c0_i32_0 : i32, i32
  }
  func.func @transform_4(%arg0: i32) -> (i32, i32) {
    %c0_i32 = arith.constant 0 : i32
    %c0_i32_0 = arith.constant 0 : i32
    %c0_i32_1 = arith.constant 0 : i32
    return %c0_i32, %c0_i32_0 : i32, i32
  }
  func.func @transform_5(%arg0: i32) -> (i32, i32, i32) {
    %c0_i32 = arith.constant 0 : i32
    %c0_i32_0 = arith.constant 0 : i32
    %c0_i32_1 = arith.constant 0 : i32
    %c0_i32_2 = arith.constant 0 : i32
    return %c0_i32, %c0_i32_0, %c0_i32_1 : i32, i32, i32
  }
  func.func @transform_6(%arg0: i32) -> (i32, i32) {
    %c0_i32 = arith.constant 0 : i32
    %c0_i32_0 = arith.constant 0 : i32
    %c0_i32_1 = arith.constant 0 : i32
    return %c0_i32, %c0_i32_0 : i32, i32
  }
  func.func @transform_7(%arg0: i32) -> (i32, i32) {
    %c0_i32 = arith.constant 0 : i32
    %c0_i32_0 = arith.constant 0 : i32
    %c0_i32_1 = arith.constant 0 : i32
    return %c0_i32, %c0_i32_0 : i32, i32
  }
  func.func @transform_8(%arg0: i32) -> (i32, i32) {
    %c0_i32 = arith.constant 0 : i32
    %c0_i32_0 = arith.constant 0 : i32
    %c0_i32_1 = arith.constant 0 : i32
    return %c0_i32, %c0_i32_0 : i32, i32
  }
  func.func @transform_9(%arg0: i32) -> (i32, i32, i32) {
    %c0_i32 = arith.constant 0 : i32
    %c0_i32_0 = arith.constant 0 : i32
    %c0_i32_1 = arith.constant 0 : i32
    %c0_i32_2 = arith.constant 0 : i32
    return %c0_i32, %c0_i32_0, %c0_i32_1 : i32, i32, i32
  }
  func.func @transform_10(%arg0: i32) -> (i32, i32) {
    %c0_i32 = arith.constant 0 : i32
    %c0_i32_0 = arith.constant 0 : i32
    %c0_i32_1 = arith.constant 0 : i32
    return %c0_i32, %c0_i32_0 : i32, i32
  }
  func.func @transform_11(%arg0: i32) -> (i32, i32) {
    %c0_i32 = arith.constant 0 : i32
    %c0_i32_0 = arith.constant 0 : i32
    %c0_i32_1 = arith.constant 0 : i32
    return %c0_i32, %c0_i32_0 : i32, i32
  }
  func.func @transform_12(%arg0: i32) -> (i32, i32) {
    %c0_i32 = arith.constant 0 : i32
    %c0_i32_0 = arith.constant 0 : i32
    %c0_i32_1 = arith.constant 0 : i32
    return %c0_i32, %c0_i32_0 : i32, i32
  }
  func.func @transform_13(%arg0: i32) -> (i32, i32, i32) {
    %c0_i32 = arith.constant 0 : i32
    %c0_i32_0 = arith.constant 0 : i32
    %c0_i32_1 = arith.constant 0 : i32
    return %arg0, %c0_i32, %c0_i32_0 : i32, i32, i32
  }
}

</mosaic_0001>

<llo_original>
// kernel: tpu_custom_call.1
$region0: #{tpu_custom_call.1}
  #allocation0 [shape = 'u32[]', space=smem, size = 0x4, offset = 0x4, fixed_abs, tag = 'smem constant byte address 0x4 - core index']
  #allocation1 [shape = 'u32[144,128]{1,0:T(1,128)}', space=vmem, size = 0x12000, scoped, tag = 'internal scratch']
  %s0 = inlined_call_operand.vmem [shape: f32[2,4,256], index: 0, kind: input, shape index: {}]
  %s1 = inlined_call_operand.vmem [shape: f32[9,256], index: 1, kind: input, shape index: {}]
  %s2 = inlined_call_operand.vmem [shape: f32[4,4], index: 2, kind: input, shape index: {}]
  %s3 = inlined_call_operand.vmem [shape: f32[4,1], index: 3, kind: input, shape index: {}]
  %s4 = inlined_call_operand.vmem [shape: f32[4,1], index: 4, kind: input, shape index: {}]
  %s5 = inlined_call_operand.vmem [shape: f32[9,4,4], index: 5, kind: input, shape index: {}]
  %s6 = inlined_call_operand.vmem [shape: f32[4,256], index: 6, kind: input, shape index: {}]
  %s7 = inlined_call_operand.vmem [shape: f32[4,1], index: 7, kind: input, shape index: {}]
  %s8 = inlined_call_operand.vmem [shape: f32[4,1], index: 8, kind: input, shape index: {}]
  %s9 = inlined_call_operand.vmem [shape: f32[9,4,4], index: 9, kind: input, shape index: {}]
  %s10 = inlined_call_operand.vmem [shape: f32[4,256], index: 10, kind: input, shape index: {}]
  %s11 = inlined_call_operand.vmem [shape: f32[4,1], index: 11, kind: input, shape index: {}]
  %s12 = inlined_call_operand.vmem [shape: f32[4,1], index: 12, kind: input, shape index: {}]
  %s13 = inlined_call_operand.hbm [shape: f32[2,4,256], index: 13, kind: output, shape index: {}]
  %s14 = sld [smem:[#allocation0]]
  $region85: #{tpu_custom_call.1} parent=0
    _
  %s16 = ssub.s32 1, %s14
  %s17 = scalar_select 0, %s16, %s14
  $region1: #{tpu_custom_call.1} parent=0
    #allocation2 [shape = 'u8[8192]{0}', space=vmem, size = 0x2000, scoped, tag = 'output window, operand 0']
    #allocation3 [shape = 's32[2]{0}', space=sflag, size = 0x8, scoped, tag = 'scoped memory for tpu_custom_call.1']
    %18 = vsyncpa [#allocation3], 0
    %s19 = scalar_lea.sflag [#allocation3], 1
    %20 = vsyncpa %s19, 0
    loop: start=0, step=1, limit=4
    $region2: #{tpu_custom_call.1} parent=1 // loop_pre_header
      _
    $region3: #{tpu_custom_call.1} parent=1 // loop_header
      %s22 = sphi 0, %s26
      %p23 = scmp.ge.s32.totalorder %s22, 4
      %s32 = sphi 0, %s34
      %s35 = sphi 0, %s32
      %s36 = sphi 0, %s35
      %s52 = sphi 0, %s36
      %s56 = sphi 0, %s56
      %s58 = sphi 0, %s56
      %s59 = sphi 0, %s58
      %s73 = sphi 0, %s59
      %s77 = sphi 0, %s77
      %s79 = sphi 0, %s77
      %s80 = sphi 0, %s79
      %s94 = sphi 0, %s80
      %s98 = sphi 0, %s98
      %s100 = sphi 0, %s98
      %s101 = sphi 0, %s100
      %s115 = sphi 0, %s101
      %s119 = sphi 0, %s119
      %s121 = sphi 0, %s119
      %s122 = sphi 0, %s121
      %s136 = sphi 0, %s122
      %s140 = sphi 0, %s140
      %s142 = sphi 0, %s140
      %s143 = sphi 0, %s142
      %s157 = sphi 0, %s143
      %s161 = sphi 0, %s161
      %s163 = sphi 0, %s161
      %s164 = sphi 0, %s163
      %s178 = sphi 0, %s164
      %s182 = sphi 0, %s182
      %s184 = sphi 0, %s182
      %s185 = sphi 0, %s184
      %s199 = sphi 0, %s185
      %s203 = sphi 0, %s203
      %s205 = sphi 0, %s203
      %s206 = sphi 0, %s205
      %s220 = sphi 0, %s206
      %s224 = sphi 0, %s224
      %s226 = sphi 0, %s224
      %s227 = sphi 0, %s226
      %s241 = sphi 0, %s227
      %s245 = sphi 0, %s245
      %s247 = sphi 0, %s245
      %s248 = sphi 0, %s247
      %s262 = sphi 0, %s248
      %s266 = sphi 0, %s266
      %s268 = sphi 0, %s266
      %s269 = sphi 0, %s268
      %s283 = sphi 0, %s269
      %s287 = sphi 0, %s287
      %s289 = sphi 0, %s287
      %s290 = sphi 0, %s289
      %s304 = sphi 0, %s290
      %s310 = sphi 0, %s312
      %s313 = sphi 0, %s310
      %s314 = sphi 0, %s313
      %s330 = sphi 0, %s314
    $region4: #{tpu_custom_call.1} parent=1 // loop_header_branch
      %25 = sbr.rel (%p23) target = $region8
    $region5: #{tpu_custom_call.1} parent=1 // loop_body
      %s27 = ssub.s32 %s22, 1
      %s28 = ssub.s32 %s22, 2
      %s29 = sadd.s32 %s22, 1
      %s30 = ssub.s32 %s22, %s29
      %p31 = scmp.eq.s32.totalorder %s30, 0
      %s33 = sadd.s32 %s32, 1
      %s34 = scalar_select %p31, %s32, %s33
      %p37 = pneg %p31
      %p38 = scmp.eq.s32.totalorder %s22, 1
      %p39 = por %p37, %p38
      %p40 = scmp.ne.s32.totalorder %s32, %s35
      %p41 = scmp.eq.s32.totalorder %s22, 0
      %p42 = por %p40, %p41
      %p43 = scmp.ne.s32.totalorder %s32, %s35
      %p44 = scmp.eq.s32.totalorder %s27, 1
      %p45 = por %p43, %p44
      %p46 = scmp.ne.s32.totalorder %s35, %s36
      %p47 = scmp.eq.s32.totalorder %s27, 0
      %p48 = por %p46, %p47
      %p49 = scmp.ne.s32.totalorder %s35, %s36
      %p50 = scmp.eq.s32.totalorder %s28, 1
      %p51 = por %p49, %p50
      %p53 = scmp.ne.s32.totalorder %s36, %s52
      %p54 = scmp.eq.s32.totalorder %s28, 0
      %p55 = por %p53, %p54
      %s57 = sadd.s32 %s56, 1
      %p60 = scmp.eq.s32.totalorder %s22, 1
      %p61 = scmp.ne.s32.totalorder %s56, %s58
      %p62 = scmp.eq.s32.totalorder %s22, 0
      %p63 = por %p61, %p62
      %p64 = scmp.ne.s32.totalorder %s56, %s58
      %p65 = scmp.eq.s32.totalorder %s27, 1
      %p66 = por %p64, %p65
      %p67 = scmp.ne.s32.totalorder %s58, %s59
      %p68 = scmp.eq.s32.totalorder %s27, 0
      %p69 = por %p67, %p68
      %p70 = scmp.ne.s32.totalorder %s58, %s59
      %p71 = scmp.eq.s32.totalorder %s28, 1
      %p72 = por %p70, %p71
      %p74 = scmp.ne.s32.totalorder %s59, %s73
      %p75 = scmp.eq.s32.totalorder %s28, 0
      %p76 = por %p74, %p75
      %s78 = sadd.s32 %s77, 1
      %p81 = scmp.eq.s32.totalorder %s22, 1
      %p82 = scmp.ne.s32.totalorder %s77, %s79
      %p83 = scmp.eq.s32.totalorder %s22, 0
      %p84 = por %p82, %p83
      %p85 = scmp.ne.s32.totalorder %s77, %s79
      %p86 = scmp.eq.s32.totalorder %s27, 1
      %p87 = por %p85, %p86
      %p88 = scmp.ne.s32.totalorder %s79, %s80
      %p89 = scmp.eq.s32.totalorder %s27, 0
      %p90 = por %p88, %p89
      %p91 = scmp.ne.s32.totalorder %s79, %s80
      %p92 = scmp.eq.s32.totalorder %s28, 1
      %p93 = por %p91, %p92
      %p95 = scmp.ne.s32.totalorder %s80, %s94
      %p96 = scmp.eq.s32.totalorder %s28, 0
      %p97 = por %p95, %p96
      %s99 = sadd.s32 %s98, 1
      %p102 = scmp.eq.s32.totalorder %s22, 1
      %p103 = scmp.ne.s32.totalorder %s98, %s100
      %p104 = scmp.eq.s32.totalorder %s22, 0
      %p105 = por %p103, %p104
      %p106 = scmp.ne.s32.totalorder %s98, %s100
      %p107 = scmp.eq.s32.totalorder %s27, 1
      %p108 = por %p106, %p107
      %p109 = scmp.ne.s32.totalorder %s100, %s101
      %p110 = scmp.eq.s32.totalorder %s27, 0
      %p111 = por %p109, %p110
      %p112 = scmp.ne.s32.totalorder %s100, %s101
      %p113 = scmp.eq.s32.totalorder %s28, 1
      %p114 = por %p112, %p113
      %p116 = scmp.ne.s32.totalorder %s101, %s115
      %p117 = scmp.eq.s32.totalorder %s28, 0
      %p118 = por %p116, %p117
      %s120 = sadd.s32 %s119, 1
      %p123 = scmp.eq.s32.totalorder %s22, 1
      %p124 = scmp.ne.s32.totalorder %s119, %s121
      %p125 = scmp.eq.s32.totalorder %s22, 0
      %p126 = por %p124, %p125
      %p127 = scmp.ne.s32.totalorder %s119, %s121
      %p128 = scmp.eq.s32.totalorder %s27, 1
      %p129 = por %p127, %p128
      %p130 = scmp.ne.s32.totalorder %s121, %s122
      %p131 = scmp.eq.s32.totalorder %s27, 0
      %p132 = por %p130, %p131
      %p133 = scmp.ne.s32.totalorder %s121, %s122
      %p134 = scmp.eq.s32.totalorder %s28, 1
      %p135 = por %p133, %p134
      %p137 = scmp.ne.s32.totalorder %s122, %s136
      %p138 = scmp.eq.s32.totalorder %s28, 0
      %p139 = por %p137, %p138
      %s141 = sadd.s32 %s140, 1
      %p144 = scmp.eq.s32.totalorder %s22, 1
      %p145 = scmp.ne.s32.totalorder %s140, %s142
      %p146 = scmp.eq.s32.totalorder %s22, 0
      %p147 = por %p145, %p146
      %p148 = scmp.ne.s32.totalorder %s140, %s142
      %p149 = scmp.eq.s32.totalorder %s27, 1
      %p150 = por %p148, %p149
      %p151 = scmp.ne.s32.totalorder %s142, %s143
      %p152 = scmp.eq.s32.totalorder %s27, 0
      %p153 = por %p151, %p152
      %p154 = scmp.ne.s32.totalorder %s142, %s143
      %p155 = scmp.eq.s32.totalorder %s28, 1
      %p156 = por %p154, %p155
      %p158 = scmp.ne.s32.totalorder %s143, %s157
      %p159 = scmp.eq.s32.totalorder %s28, 0
      %p160 = por %p158, %p159
      %s162 = sadd.s32 %s161, 1
      %p165 = scmp.eq.s32.totalorder %s22, 1
      %p166 = scmp.ne.s32.totalorder %s161, %s163
      %p167 = scmp.eq.s32.totalorder %s22, 0
      %p168 = por %p166, %p167
      %p169 = scmp.ne.s32.totalorder %s161, %s163
      %p170 = scmp.eq.s32.totalorder %s27, 1
      %p171 = por %p169, %p170
      %p172 = scmp.ne.s32.totalorder %s163, %s164
      %p173 = scmp.eq.s32.totalorder %s27, 0
      %p174 = por %p172, %p173
      %p175 = scmp.ne.s32.totalorder %s163, %s164
      %p176 = scmp.eq.s32.totalorder %s28, 1
      %p177 = por %p175, %p176
      %p179 = scmp.ne.s32.totalorder %s164, %s178
      %p180 = scmp.eq.s32.totalorder %s28, 0
      %p181 = por %p179, %p180
      %s183 = sadd.s32 %s182, 1
      %p186 = scmp.eq.s32.totalorder %s22, 1
      %p187 = scmp.ne.s32.totalorder %s182, %s184
      %p188 = scmp.eq.s32.totalorder %s22, 0
      %p189 = por %p187, %p188
      %p190 = scmp.ne.s32.totalorder %s182, %s184
      %p191 = scmp.eq.s32.totalorder %s27, 1
      %p192 = por %p190, %p191
      %p193 = scmp.ne.s32.totalorder %s184, %s185
      %p194 = scmp.eq.s32.totalorder %s27, 0
      %p195 = por %p193, %p194
      %p196 = scmp.ne.s32.totalorder %s184, %s185
      %p197 = scmp.eq.s32.totalorder %s28, 1
      %p198 = por %p196, %p197
      %p200 = scmp.ne.s32.totalorder %s185, %s199
      %p201 = scmp.eq.s32.totalorder %s28, 0
      %p202 = por %p200, %p201
      %s204 = sadd.s32 %s203, 1
      %p207 = scmp.eq.s32.totalorder %s22, 1
      %p208 = scmp.ne.s32.totalorder %s203, %s205
      %p209 = scmp.eq.s32.totalorder %s22, 0
      %p210 = por %p208, %p209
      %p211 = scmp.ne.s32.totalorder %s203, %s205
      %p212 = scmp.eq.s32.totalorder %s27, 1
      %p213 = por %p211, %p212
      %p214 = scmp.ne.s32.totalorder %s205, %s206
      %p215 = scmp.eq.s32.totalorder %s27, 0
      %p216 = por %p214, %p215
      %p217 = scmp.ne.s32.totalorder %s205, %s206
      %p218 = scmp.eq.s32.totalorder %s28, 1
      %p219 = por %p217, %p218
      %p221 = scmp.ne.s32.totalorder %s206, %s220
      %p222 = scmp.eq.s32.totalorder %s28, 0
      %p223 = por %p221, %p222
      %s225 = sadd.s32 %s224, 1
      %p228 = scmp.eq.s32.totalorder %s22, 1
      %p229 = scmp.ne.s32.totalorder %s224, %s226
      %p230 = scmp.eq.s32.totalorder %s22, 0
      %p231 = por %p229, %p230
      %p232 = scmp.ne.s32.totalorder %s224, %s226
      %p233 = scmp.eq.s32.totalorder %s27, 1
      %p234 = por %p232, %p233
      %p235 = scmp.ne.s32.totalorder %s226, %s227
      %p236 = scmp.eq.s32.totalorder %s27, 0
      %p237 = por %p235, %p236
      %p238 = scmp.ne.s32.totalorder %s226, %s227
      %p239 = scmp.eq.s32.totalorder %s28, 1
      %p240 = por %p238, %p239
      %p242 = scmp.ne.s32.totalorder %s227, %s241
      %p243 = scmp.eq.s32.totalorder %s28, 0
      %p244 = por %p242, %p243
      %s246 = sadd.s32 %s245, 1
      %p249 = scmp.eq.s32.totalorder %s22, 1
      %p250 = scmp.ne.s32.totalorder %s245, %s247
      %p251 = scmp.eq.s32.totalorder %s22, 0
      %p252 = por %p250, %p251
      %p253 = scmp.ne.s32.totalorder %s245, %s247
      %p254 = scmp.eq.s32.totalorder %s27, 1
      %p255 = por %p253, %p254
      %p256 = scmp.ne.s32.totalorder %s247, %s248
      %p257 = scmp.eq.s32.totalorder %s27, 0
      %p258 = por %p256, %p257
      %p259 = scmp.ne.s32.totalorder %s247, %s248
      %p260 = scmp.eq.s32.totalorder %s28, 1
      %p261 = por %p259, %p260
      %p263 = scmp.ne.s32.totalorder %s248, %s262
      %p264 = scmp.eq.s32.totalorder %s28, 0
      %p265 = por %p263, %p264
      %s267 = sadd.s32 %s266, 1
      %p270 = scmp.eq.s32.totalorder %s22, 1
      %p271 = scmp.ne.s32.totalorder %s266, %s268
      %p272 = scmp.eq.s32.totalorder %s22, 0
      %p273 = por %p271, %p272
      %p274 = scmp.ne.s32.totalorder %s266, %s268
      %p275 = scmp.eq.s32.totalorder %s27, 1
      %p276 = por %p274, %p275
      %p277 = scmp.ne.s32.totalorder %s268, %s269
      %p278 = scmp.eq.s32.totalorder %s27, 0
      %p279 = por %p277, %p278
      %p280 = scmp.ne.s32.totalorder %s268, %s269
      %p281 = scmp.eq.s32.totalorder %s28, 1
      %p282 = por %p280, %p281
      %p284 = scmp.ne.s32.totalorder %s269, %s283
      %p285 = scmp.eq.s32.totalorder %s28, 0
      %p286 = por %p284, %p285
      %s288 = sadd.s32 %s287, 1
      %p291 = scmp.eq.s32.totalorder %s22, 1
      %p292 = scmp.ne.s32.totalorder %s287, %s289
      %p293 = scmp.eq.s32.totalorder %s22, 0
      %p294 = por %p292, %p293
      %p295 = scmp.ne.s32.totalorder %s287, %s289
      %p296 = scmp.eq.s32.totalorder %s27, 1
      %p297 = por %p295, %p296
      %p298 = scmp.ne.s32.totalorder %s289, %s290
      %p299 = scmp.eq.s32.totalorder %s27, 0
      %p300 = por %p298, %p299
      %p301 = scmp.ne.s32.totalorder %s289, %s290
      %p302 = scmp.eq.s32.totalorder %s28, 1
      %p303 = por %p301, %p302
      %p305 = scmp.ne.s32.totalorder %s290, %s304
      %p306 = scmp.eq.s32.totalorder %s28, 0
      %p307 = por %p305, %p306
      %s308 = ssub.s32 %s22, %s29
      %p309 = scmp.eq.s32.totalorder %s308, 0
      %s311 = sadd.s32 %s310, 1
      %s312 = scalar_select %p309, %s310, %s311
      %p315 = pneg %p309
      %p316 = scmp.eq.s32.totalorder %s22, 1
      %p317 = por %p315, %p316
      %p318 = scmp.ne.s32.totalorder %s310, %s313
      %p319 = scmp.eq.s32.totalorder %s22, 0
      %p320 = por %p318, %p319
      %p321 = scmp.ne.s32.totalorder %s310, %s313
      %p322 = scmp.eq.s32.totalorder %s27, 1
      %p323 = por %p321, %p322
      %p324 = scmp.ne.s32.totalorder %s313, %s314
      %p325 = scmp.eq.s32.totalorder %s27, 0
      %p326 = por %p324, %p325
      %p327 = scmp.ne.s32.totalorder %s313, %s314
      %p328 = scmp.eq.s32.totalorder %s28, 1
      %p329 = por %p327, %p328
      %p331 = scmp.ne.s32.totalorder %s314, %s330
      %p332 = scmp.eq.s32.totalorder %s28, 0
      %p333 = por %p331, %p332
      %p334 = scmp.le.s32.totalorder 1, %s22
      %p335 = scmp.lt.s32.totalorder %s22, 3
      %p336 = pnand %p334, %p335
      %p337 = pneg %p336
      // Predicated region
      $region9: #{tpu_custom_call.1} parent=5 // pred_check
        _
      $region10: #{tpu_custom_call.1} parent=5 // pred_check_branch
        %339 = sbr.rel (%p336) target = $region12
      $region11: #{tpu_custom_call.1} parent=5 // pred_region
        %s340 = ssub.s32 %s22, 1
        // Predicated region
        $region13: #{tpu_custom_call.1} parent=11 // pred_check
          %p341 = pneg %p69
        $region14: #{tpu_custom_call.1} parent=11 // pred_check_branch
          %343 = sbr.rel (%p341) target = $region16
        $region15: #{tpu_custom_call.1} parent=11 // pred_region
          _
        $region16: #{tpu_custom_call.1} parent=11 // pred_fallthru
          _
        // Predicated region
        $region17: #{tpu_custom_call.1} parent=11 // pred_check
          %p344 = pneg %p90
        $region18: #{tpu_custom_call.1} parent=11 // pred_check_branch
          %346 = sbr.rel (%p344) target = $region20
        $region19: #{tpu_custom_call.1} parent=11 // pred_region
          _
        $region20: #{tpu_custom_call.1} parent=11 // pred_fallthru
          _
        // Predicated region
        $region21: #{tpu_custom_call.1} parent=11 // pred_check
          %p347 = pneg %p111
        $region22: #{tpu_custom_call.1} parent=11 // pred_check_branch
          %349 = sbr.rel (%p347) target = $region24
        $region23: #{tpu_custom_call.1} parent=11 // pred_region
          _
        $region24: #{tpu_custom_call.1} parent=11 // pred_fallthru
          _
        // Predicated region
        $region25: #{tpu_custom_call.1} parent=11 // pred_check
          %p350 = pneg %p132
        $region26: #{tpu_custom_call.1} parent=11 // pred_check_branch
          %352 = sbr.rel (%p350) target = $region28
        $region27: #{tpu_custom_call.1} parent=11 // pred_region
          _
        $region28: #{tpu_custom_call.1} parent=11 // pred_fallthru
          _
        // Predicated region
        $region29: #{tpu_custom_call.1} parent=11 // pred_check
          %p353 = pneg %p153
        $region30: #{tpu_custom_call.1} parent=11 // pred_check_branch
          %355 = sbr.rel (%p353) target = $region32
        $region31: #{tpu_custom_call.1} parent=11 // pred_region
          _
        $region32: #{tpu_custom_call.1} parent=11 // pred_fallthru
          _
        // Predicated region
        $region33: #{tpu_custom_call.1} parent=11 // pred_check
          %p356 = pneg %p174
        $region34: #{tpu_custom_call.1} parent=11 // pred_check_branch
          %358 = sbr.rel (%p356) target = $region36
        $region35: #{tpu_custom_call.1} parent=11 // pred_region
          _
        $region36: #{tpu_custom_call.1} parent=11 // pred_fallthru
          _
        // Predicated region
        $region37: #{tpu_custom_call.1} parent=11 // pred_check
          %p359 = pneg %p195
        $region38: #{tpu_custom_call.1} parent=11 // pred_check_branch
          %361 = sbr.rel (%p359) target = $region40
        $region39: #{tpu_custom_call.1} parent=11 // pred_region
          _
        $region40: #{tpu_custom_call.1} parent=11 // pred_fallthru
          _
        // Predicated region
        $region41: #{tpu_custom_call.1} parent=11 // pred_check
          %p362 = pneg %p216
        $region42: #{tpu_custom_call.1} parent=11 // pred_check_branch
          %364 = sbr.rel (%p362) target = $region44
        $region43: #{tpu_custom_call.1} parent=11 // pred_region
          _
        $region44: #{tpu_custom_call.1} parent=11 // pred_fallthru
          _
        // Predicated region
        $region45: #{tpu_custom_call.1} parent=11 // pred_check
          %p365 = pneg %p237
        $region46: #{tpu_custom_call.1} parent=11 // pred_check_branch
          %367 = sbr.rel (%p365) target = $region48
        $region47: #{tpu_custom_call.1} parent=11 // pred_region
          _
        $region48: #{tpu_custom_call.1} parent=11 // pred_fallthru
          _
        // Predicated region
        $region49: #{tpu_custom_call.1} parent=11 // pred_check
          %p368 = pneg %p258
        $region50: #{tpu_custom_call.1} parent=11 // pred_check_branch
          %370 = sbr.rel (%p368) target = $region52
        $region51: #{tpu_custom_call.1} parent=11 // pred_region
          _
        $region52: #{tpu_custom_call.1} parent=11 // pred_fallthru
          _
        // Predicated region
        $region53: #{tpu_custom_call.1} parent=11 // pred_check
          %p371 = pneg %p279
        $region54: #{tpu_custom_call.1} parent=11 // pred_check_branch
          %373 = sbr.rel (%p371) target = $region56
        $region55: #{tpu_custom_call.1} parent=11 // pred_region
          _
        $region56: #{tpu_custom_call.1} parent=11 // pred_fallthru
          _
        // Predicated region
        $region57: #{tpu_custom_call.1} parent=11 // pred_check
          %p374 = pneg %p300
        $region58: #{tpu_custom_call.1} parent=11 // pred_check_branch
          %376 = sbr.rel (%p374) target = $region60
        $region59: #{tpu_custom_call.1} parent=11 // pred_region
          _
        $region60: #{tpu_custom_call.1} parent=11 // pred_fallthru
          _
      $region12: #{tpu_custom_call.1} parent=5 // pred_fallthru
        _
      %p377 = scmp.lt.s32.totalorder %s22, 2
      // Predicated region
      $region61: #{tpu_custom_call.1} parent=5 // pred_check
        %p378 = pneg %p377
      $region62: #{tpu_custom_call.1} parent=5 // pred_check_branch
        %380 = sbr.rel (%p378) target = $region64
      $region63: #{tpu_custom_call.1} parent=5 // pred_region
        // Predicated region
        $region65: #{tpu_custom_call.1} parent=63 // pred_check
          %p381 = pneg %p42
        $region66: #{tpu_custom_call.1} parent=63 // pred_check_branch
          %383 = sbr.rel (%p381) target = $region68
        $region67: #{tpu_custom_call.1} parent=63 // pred_region
          %p384 = scmp.lt.s32.totalorder %s22, 1
          %s385 = scalar_select %p384, %s22, 1
          %s386 = smul.addr %s385, 2
          %s387 = smul.addr %s386, 4
          %s388 = scalar_lea.vmem %s0, %s387
        $region68: #{tpu_custom_call.1} parent=63 // pred_fallthru
          _
      $region64: #{tpu_custom_call.1} parent=5 // pred_fallthru
        _
      %p389 = scmp.le.s32.totalorder 1, %s22
      %p390 = scmp.lt.s32.totalorder %s22, 3
      %p391 = pnand %p389, %p390
      %p392 = pneg %p391
      // Predicated region
      $region69: #{tpu_custom_call.1} parent=5 // pred_check
        _
      $region70: #{tpu_custom_call.1} parent=5 // pred_check_branch
        %394 = sbr.rel (%p391) target = $region72
      $region71: #{tpu_custom_call.1} parent=5 // pred_region
        %s395 = ssub.s32 %s22, 1
        %p396 = scmp.lt.s32.totalorder %s27, 1
        %s397 = scalar_select %p396, %s27, 1
        %s398 = smul.addr %s397, 2
        %s399 = smul.addr %s398, 4
        %s400 = scalar_lea.vmem %s0, %s399
        %p401 = pneg %p48
        %p402 = pneg %p45
        %p403 = pneg %p69
        %p404 = pneg %p66
        %p405 = pneg %p90
        %p406 = pneg %p87
        %p407 = pneg %p111
        %p408 = pneg %p108
        %p409 = pneg %p132
        %p410 = pneg %p129
        %p411 = pneg %p153
        %p412 = pneg %p150
        %p413 = pneg %p174
        %p414 = pneg %p171
        %p415 = pneg %p195
        %p416 = pneg %p192
        %p417 = pneg %p216
        %p418 = pneg %p213
        %p419 = pneg %p237
        %p420 = pneg %p234
        %p421 = pneg %p258
        %p422 = pneg %p255
        %p423 = pneg %p279
        %p424 = pneg %p276
        %p425 = pneg %p300
        %p426 = pneg %p297
        %p427 = pneg %p326
        %p428 = pneg %p323
        %s429 = sand.u32 %s313, 1
        %s430 = scalar_lea.sflag [#allocation3], %s429
        %s431 = sand.u32 %s313, 1
        %s432 = smul.addr %s431, 8
        %s433 = scalar_lea.vmem [#allocation2], %s432
        %p434 = scmp.lt.s32.totalorder %s27, 1
        %s435 = scalar_select %p434, %s27, 1
        %s436 = smul.addr %s435, 2
        %s437 = smul.addr %s436, 4
        %s438 = scalar_lea.vmem %s0, %s437
        %v439 = vld [vmem:[%s2] sm:$0xf]
        %v440 = vld [vmem:[%s438] sm:$0xff]
        %v442 = vcombine.high %v440, %v440
        %vm443 = vcmask 31744
        %v445 = vsel %vm443, %v439, 0
        %vm447 = vcmask 1043456
        %v448 = vsel %vm447, %v440, 0
        %v450 = vsel %vm447, %v442, 0
        %452 = vmatprep.subr.mxu0 0.0
        %453 = vmatpush1.msra.mxu0 0.0
        %454 = vmatprep.subr.mxu0 0.0
        %455 = vmatpush1.msra.mxu0 0.0
        %456 = vmatprep.subr.mxu0 0.0
        %457 = vmatpush1.msra.mxu0 0.0
        %458 = vmatprep.subr.mxu0 0.0
        %459 = vmatpush1.msra.mxu0 0.0
        %460 = vmatprep.subr.mxu0 0.0
        %461 = vmatpush1.msra.mxu0 0.0
        %462 = vmatprep.subr.mxu0 0.0
        %463 = vmatpush1.msra.mxu0 0.0
        %464 = vmatprep.subr.mxu0 0.0
        %465 = vmatpush1.msra.mxu0 0.0
        %466 = vmatprep.subr.mxu0 0.0
        %467 = vmatpush1.msra.mxu0 0.0
        %468 = vmatprep.subr.mxu0 0.0
        %469 = vmatpush1.msra.mxu0 0.0
        %470 = vmatprep.subr.mxu0 0.0
        %471 = vmatpush1.msra.mxu0 0.0
        %472 = vmatprep.subr.mxu0 0.0
        %473 = vmatpush1.msra.mxu0 0.0
        %474 = vmatprep.subr.mxu0 0.0
        %475 = vmatpush1.msra.mxu0 0.0
        %476 = vmatprep.subr.mxu0 0.0
        %477 = vmatpush1.msra.mxu0 0.0
        %478 = vmatprep.subr.mxu0 0.0
        %479 = vmatpush1.msra.mxu0 0.0
        %480 = vmatprep.subr.mxu0 0.0
        %481 = vmatpush1.msra.mxu0 0.0
        %482 = vmatprep.subr.mxu0 %v450
        %483 = vmatpush1.msra.mxu0 %v448
        %484 = vmatprep.subr.mxu0 0.0
        %485 = vmatpush2.msra.mxu0 0.0
        %486 = vmatprep.subr.mxu0 0.0
        %487 = vmatpush2.msra.mxu0 0.0
        %488 = vmatprep.subr.mxu0 0.0
        %489 = vmatpush2.msra.mxu0 0.0
        %490 = vmatprep.subr.mxu0 0.0
        %491 = vmatpush2.msra.mxu0 0.0
        %492 = vmatprep.subr.mxu0 0.0
        %493 = vmatpush2.msra.mxu0 0.0
        %494 = vmatprep.subr.mxu0 0.0
        %495 = vmatpush2.msra.mxu0 0.0
        %496 = vmatprep.subr.mxu0 0.0
        %497 = vmatpush2.msra.mxu0 0.0
        %498 = vmatprep.subr.mxu0 0.0
        %499 = vmatpush2.msra.mxu0 0.0
        %500 = vmatprep.subr.mxu0 0.0
        %501 = vmatpush2.msra.mxu0 0.0
        %502 = vmatprep.subr.mxu0 0.0
        %503 = vmatpush2.msra.mxu0 0.0
        %504 = vmatprep.subr.mxu0 0.0
        %505 = vmatpush2.msra.mxu0 0.0
        %506 = vmatprep.subr.mxu0 0.0
        %507 = vmatpush2.msra.mxu0 0.0
        %508 = vmatprep.subr.mxu0 0.0
        %509 = vmatpush2.msra.mxu0 0.0
        %510 = vmatprep.subr.mxu0 0.0
        %511 = vmatpush2.msra.mxu0 0.0
        %512 = vmatprep.subr.mxu0 0.0
        %513 = vmatpush2.msra.mxu0 0.0
        %514 = vmatprep.subr.mxu0 0.0
        %515 = vmatpush2.msra.mxu0 0.0
        %516 = vmatprep.mubr.f32.mxu0 0.0
        %517 = vmatmul.mubr.f32.gmra.mxu0 %v445
        %v518 = vpop.f32.mrf.mxu0
        %v519 = vadd.f32 0.0, %v518
        %v520 = vpop.f32.mrf.mxu0
        %v521 = vadd.f32 0.0, %v520
        %522 = vdwg.mxu0
        %v523 = vsel %vm447, %v519, 0.0
        %v524 = vsel %vm447, %v521, 0.0
        %v525 = vadd.f32 %v523, %v524
        %526 = vadd.xlane.f32.xlu0 %v525
        %v527 = vpop.xlane.xlu0 %526
        %v528 = vmul.f32 %v527, 0.00390625
        %v531 = vunpack.c.l.s4 839922192
        %v532 = vunpack.c.0.s8 %v531
        %v533 = vlaneseq
        %v534 = vshrl.u32 %v533, 7
        %v535 = vsub.s32 %v532, %v534
        %v536 = vrot.slane %v528, %v535
        %v538 = vsub.f32 %v440, %v536
        %v539 = vmul.f32 %v538, %v538
        %v541 = vcombine.high %v539, %v539
        %v542 = vsel %vm447, %v539, 0
        %v544 = vsel %vm447, %v541, 0
        %546 = vmatprep.subr.mxu0 0.0
        %547 = vmatpush1.msra.mxu0 0.0
        %548 = vmatprep.subr.mxu0 0.0
        %549 = vmatpush1.msra.mxu0 0.0
        %550 = vmatprep.subr.mxu0 0.0
        %551 = vmatpush1.msra.mxu0 0.0
        %552 = vmatprep.subr.mxu0 0.0
        %553 = vmatpush1.msra.mxu0 0.0
        %554 = vmatprep.subr.mxu0 0.0
        %555 = vmatpush1.msra.mxu0 0.0
        %556 = vmatprep.subr.mxu0 0.0
        %557 = vmatpush1.msra.mxu0 0.0
        %558 = vmatprep.subr.mxu0 0.0
        %559 = vmatpush1.msra.mxu0 0.0
        %560 = vmatprep.subr.mxu0 0.0
        %561 = vmatpush1.msra.mxu0 0.0
        %562 = vmatprep.subr.mxu0 0.0
        %563 = vmatpush1.msra.mxu0 0.0
        %564 = vmatprep.subr.mxu0 0.0
        %565 = vmatpush1.msra.mxu0 0.0
        %566 = vmatprep.subr.mxu0 0.0
        %567 = vmatpush1.msra.mxu0 0.0
        %568 = vmatprep.subr.mxu0 0.0
        %569 = vmatpush1.msra.mxu0 0.0
        %570 = vmatprep.subr.mxu0 0.0
        %571 = vmatpush1.msra.mxu0 0.0
        %572 = vmatprep.subr.mxu0 0.0
        %573 = vmatpush1.msra.mxu0 0.0
        %574 = vmatprep.subr.mxu0 0.0
        %575 = vmatpush1.msra.mxu0 0.0
        %576 = vmatprep.subr.mxu0 %v544
        %577 = vmatpush1.msra.mxu0 %v542
        %578 = vmatprep.subr.mxu0 0.0
        %579 = vmatpush2.msra.mxu0 0.0
        %580 = vmatprep.subr.mxu0 0.0
        %581 = vmatpush2.msra.mxu0 0.0
        %582 = vmatprep.subr.mxu0 0.0
        %583 = vmatpush2.msra.mxu0 0.0
        %584 = vmatprep.subr.mxu0 0.0
        %585 = vmatpush2.msra.mxu0 0.0
        %586 = vmatprep.subr.mxu0 0.0
        %587 = vmatpush2.msra.mxu0 0.0
        %588 = vmatprep.subr.mxu0 0.0
        %589 = vmatpush2.msra.mxu0 0.0
        %590 = vmatprep.subr.mxu0 0.0
        %591 = vmatpush2.msra.mxu0 0.0
        %592 = vmatprep.subr.mxu0 0.0
        %593 = vmatpush2.msra.mxu0 0.0
        %594 = vmatprep.subr.mxu0 0.0
        %595 = vmatpush2.msra.mxu0 0.0
        %596 = vmatprep.subr.mxu0 0.0
        %597 = vmatpush2.msra.mxu0 0.0
        %598 = vmatprep.subr.mxu0 0.0
        %599 = vmatpush2.msra.mxu0 0.0
        %600 = vmatprep.subr.mxu0 0.0
        %601 = vmatpush2.msra.mxu0 0.0
        %602 = vmatprep.subr.mxu0 0.0
        %603 = vmatpush2.msra.mxu0 0.0
        %604 = vmatprep.subr.mxu0 0.0
        %605 = vmatpush2.msra.mxu0 0.0
        %606 = vmatprep.subr.mxu0 0.0
        %607 = vmatpush2.msra.mxu0 0.0
        %608 = vmatprep.subr.mxu0 0.0
        %609 = vmatpush2.msra.mxu0 0.0
        %610 = vmatprep.mubr.f32.mxu0 0.0
        %611 = vmatmul.mubr.f32.gmra.mxu0 %v445
        %v612 = vpop.f32.mrf.mxu0
        %v613 = vadd.f32 0.0, %v612
        %v614 = vpop.f32.mrf.mxu0
        %v615 = vadd.f32 0.0, %v614
        %616 = vdwg.mxu0
        %v617 = vsel %vm447, %v613, 0.0
        %v618 = vsel %vm447, %v615, 0.0
        %v619 = vadd.f32 %v617, %v618
        %620 = vadd.xlane.f32.xlu0 %v619
        %v621 = vpop.xlane.xlu0 %620
        %v622 = vmul.f32 %v621, 0.00390625
        %v623 = vadd.f32 %v622, 1e-05
        %v624 = vrsqrt.pop %v623
        %v625 = vld [vmem:[%s3] sm:$0xf]
        %v626 = vmul.f32 %v624, %v625
        %628 = vset.pattern.permute.xlu0 0
        %629 = vperm.xlu0 %628, %v626
        %v630 = vpop.permute.xlu0 %629
        %v632 = vunpack.c.l.s4 839922192
        %v633 = vunpack.c.0.s8 %v632
        %v634 = vlaneseq
        %v635 = vshrl.u32 %v634, 7
        %v636 = vsub.s32 %v633, %v635
        %v637 = vrot.slane %v630, %v636
        %v639 = vmul.f32 %v538, %v637
        %v640 = vld [vmem:[%s4] sm:$0xf]
        %642 = vset.pattern.permute.xlu0 0
        %643 = vperm.xlu0 %642, %v640
        %v644 = vpop.permute.xlu0 %643
        %v646 = vunpack.c.l.s4 839922192
        %v647 = vunpack.c.0.s8 %v646
        %v648 = vlaneseq
        %v649 = vshrl.u32 %v648, 7
        %v650 = vsub.s32 %v647, %v649
        %v651 = vrot.slane %v644, %v650
        %v653 = vadd.f32 %v639, %v651
        %v654 = vmax.f32 %v653, 0.0
        %v655 = vld [vmem:[%s6] sm:$0xff]
        %v657 = vcombine.high %v654, %v654
        %659 = vrot.lane.b32.xlu0 %v654, 17
        %v660 = vpop.permute.xlu0 %659
        %661 = vrot.lane.b32.xlu0 %v657, 17
        %v662 = vpop.permute.xlu0 %661
        %v663 = vlaneseq
        %v664 = vand.u32 %v663, 127
        %vm665 = vcmp.lt.s32.totalorder %v664, 17
        %v666 = vsel %vm665, %v660, %v662
        %v667 = vsel %vm665, %v662, %v660
        %v668 = vld [vmem:[%s1] ss:$8 sm:$0x3]
        %v670 = vlaneseq
        %v671 = vshrl.u32 %v670, 7
        %v672 = vsub.s32 0, %v671
        %v673 = vrot.slane %v668, %v672
        %v674 = vlaneseq
        %v675 = vshrl.u32 %v674, 7
        %v676 = vsub.s32 1, %v675
        %v677 = vrot.slane %v668, %v676
        %v680 = vmul.f32 %v667, %v673
        %v681 = vmul.f32 %v666, %v677
        %v682 = vld [vmem:[%s5] sm:$0xf]
        %v684 = vsel %vm443, %v682, 0
        %v687 = vsel %vm447, %v680, 0
        %v690 = vsel %vm447, %v681, 0
        %692 = vmatprep.subr.mxu0 0.0
        %693 = vmatpush1.msra.mxu0 0.0
        %694 = vmatprep.subr.mxu0 0.0
        %695 = vmatpush1.msra.mxu0 0.0
        %696 = vmatprep.subr.mxu0 0.0
        %697 = vmatpush1.msra.mxu0 0.0
        %698 = vmatprep.subr.mxu0 0.0
        %699 = vmatpush1.msra.mxu0 0.0
        %700 = vmatprep.subr.mxu0 0.0
        %701 = vmatpush1.msra.mxu0 0.0
        %702 = vmatprep.subr.mxu0 0.0
        %703 = vmatpush1.msra.mxu0 0.0
        %704 = vmatprep.subr.mxu0 0.0
        %705 = vmatpush1.msra.mxu0 0.0
        %706 = vmatprep.subr.mxu0 0.0
        %707 = vmatpush1.msra.mxu0 0.0
        %708 = vmatprep.subr.mxu0 0.0
        %709 = vmatpush1.msra.mxu0 0.0
        %710 = vmatprep.subr.mxu0 0.0
        %711 = vmatpush1.msra.mxu0 0.0
        %712 = vmatprep.subr.mxu0 0.0
        %713 = vmatpush1.msra.mxu0 0.0
        %714 = vmatprep.subr.mxu0 0.0
        %715 = vmatpush1.msra.mxu0 0.0
        %716 = vmatprep.subr.mxu0 0.0
        %717 = vmatpush1.msra.mxu0 0.0
        %718 = vmatprep.subr.mxu0 0.0
        %719 = vmatpush1.msra.mxu0 0.0
        %720 = vmatprep.subr.mxu0 0.0
        %721 = vmatpush1.msra.mxu0 0.0
        %722 = vmatprep.subr.mxu0 %v690
        %723 = vmatpush1.msra.mxu0 %v687
        %724 = vmatprep.subr.mxu0 0.0
        %725 = vmatpush2.msra.mxu0 0.0
        %726 = vmatprep.subr.mxu0 0.0
        %727 = vmatpush2.msra.mxu0 0.0
        %728 = vmatprep.subr.mxu0 0.0
        %729 = vmatpush2.msra.mxu0 0.0
        %730 = vmatprep.subr.mxu0 0.0
        %731 = vmatpush2.msra.mxu0 0.0
        %732 = vmatprep.subr.mxu0 0.0
        %733 = vmatpush2.msra.mxu0 0.0
        %734 = vmatprep.subr.mxu0 0.0
        %735 = vmatpush2.msra.mxu0 0.0
        %736 = vmatprep.subr.mxu0 0.0
        %737 = vmatpush2.msra.mxu0 0.0
        %738 = vmatprep.subr.mxu0 0.0
        %739 = vmatpush2.msra.mxu0 0.0
        %740 = vmatprep.subr.mxu0 0.0
        %741 = vmatpush2.msra.mxu0 0.0
        %742 = vmatprep.subr.mxu0 0.0
        %743 = vmatpush2.msra.mxu0 0.0
        %744 = vmatprep.subr.mxu0 0.0
        %745 = vmatpush2.msra.mxu0 0.0
        %746 = vmatprep.subr.mxu0 0.0
        %747 = vmatpush2.msra.mxu0 0.0
        %748 = vmatprep.subr.mxu0 0.0
        %749 = vmatpush2.msra.mxu0 0.0
        %750 = vmatprep.subr.mxu0 0.0
        %751 = vmatpush2.msra.mxu0 0.0
        %752 = vmatprep.subr.mxu0 0.0
        %753 = vmatpush2.msra.mxu0 0.0
        %754 = vmatprep.subr.mxu0 0.0
        %755 = vmatpush2.msra.mxu0 0.0
        %756 = vmatprep.mubr.f32.mxu0 0.0
        %757 = vmatmul.mubr.f32.gmra.mxu0 %v684
        %v758 = vpop.f32.mrf.mxu0
        %v759 = vadd.f32 0.0, %v758
        %v760 = vpop.f32.mrf.mxu0
        %v761 = vadd.f32 0.0, %v760
        %762 = vdwg.mxu0
        %v765 = vcombine.low %v759, %v761
        %v767 = vadd.f32 %v655, %v765
        %768 = vrot.lane.b32.xlu0 %v654, 16
        %v769 = vpop.permute.xlu0 %768
        %770 = vrot.lane.b32.xlu0 %v657, 16
        %v771 = vpop.permute.xlu0 %770
        %vm772 = vcmp.lt.s32.totalorder %v664, 16
        %v773 = vsel %vm772, %v769, %v771
        %v774 = vsel %vm772, %v771, %v769
        %s775 = scalar_lea.vmem %s1, 1
        %v776 = vld [vmem:[%s775] ss:$8 sm:$0x3]
        %v778 = vlaneseq
        %v779 = vshrl.u32 %v778, 7
        %v780 = vsub.s32 0, %v779
        %v781 = vrot.slane %v776, %v780
        %v782 = vlaneseq
        %v783 = vshrl.u32 %v782, 7
        %v784 = vsub.s32 1, %v783
        %v785 = vrot.slane %v776, %v784
        %v788 = vmul.f32 %v774, %v781
        %v789 = vmul.f32 %v773, %v785
        %s790 = scalar_lea.vmem %s5, 4
        %v791 = vld [vmem:[%s790] sm:$0xf]
        %v793 = vsel %vm443, %v791, 0
        %v796 = vsel %vm447, %v788, 0
        %v799 = vsel %vm447, %v789, 0
        %801 = vmatprep.subr.mxu0 0.0
        %802 = vmatpush1.msra.mxu0 0.0
        %803 = vmatprep.subr.mxu0 0.0
        %804 = vmatpush1.msra.mxu0 0.0
        %805 = vmatprep.subr.mxu0 0.0
        %806 = vmatpush1.msra.mxu0 0.0
        %807 = vmatprep.subr.mxu0 0.0
        %808 = vmatpush1.msra.mxu0 0.0
        %809 = vmatprep.subr.mxu0 0.0
        %810 = vmatpush1.msra.mxu0 0.0
        %811 = vmatprep.subr.mxu0 0.0
        %812 = vmatpush1.msra.mxu0 0.0
        %813 = vmatprep.subr.mxu0 0.0
        %814 = vmatpush1.msra.mxu0 0.0
        %815 = vmatprep.subr.mxu0 0.0
        %816 = vmatpush1.msra.mxu0 0.0
        %817 = vmatprep.subr.mxu0 0.0
        %818 = vmatpush1.msra.mxu0 0.0
        %819 = vmatprep.subr.mxu0 0.0
        %820 = vmatpush1.msra.mxu0 0.0
        %821 = vmatprep.subr.mxu0 0.0
        %822 = vmatpush1.msra.mxu0 0.0
        %823 = vmatprep.subr.mxu0 0.0
        %824 = vmatpush1.msra.mxu0 0.0
        %825 = vmatprep.subr.mxu0 0.0
        %826 = vmatpush1.msra.mxu0 0.0
        %827 = vmatprep.subr.mxu0 0.0
        %828 = vmatpush1.msra.mxu0 0.0
        %829 = vmatprep.subr.mxu0 0.0
        %830 = vmatpush1.msra.mxu0 0.0
        %831 = vmatprep.subr.mxu0 %v799
        %832 = vmatpush1.msra.mxu0 %v796
        %833 = vmatprep.subr.mxu0 0.0
        %834 = vmatpush2.msra.mxu0 0.0
        %835 = vmatprep.subr.mxu0 0.0
        %836 = vmatpush2.msra.mxu0 0.0
        %837 = vmatprep.subr.mxu0 0.0
        %838 = vmatpush2.msra.mxu0 0.0
        %839 = vmatprep.subr.mxu0 0.0
        %840 = vmatpush2.msra.mxu0 0.0
        %841 = vmatprep.subr.mxu0 0.0
        %842 = vmatpush2.msra.mxu0 0.0
        %843 = vmatprep.subr.mxu0 0.0
        %844 = vmatpush2.msra.mxu0 0.0
        %845 = vmatprep.subr.mxu0 0.0
        %846 = vmatpush2.msra.mxu0 0.0
        %847 = vmatprep.subr.mxu0 0.0
        %848 = vmatpush2.msra.mxu0 0.0
        %849 = vmatprep.subr.mxu0 0.0
        %850 = vmatpush2.msra.mxu0 0.0
        %851 = vmatprep.subr.mxu0 0.0
        %852 = vmatpush2.msra.mxu0 0.0
        %853 = vmatprep.subr.mxu0 0.0
        %854 = vmatpush2.msra.mxu0 0.0
        %855 = vmatprep.subr.mxu0 0.0
        %856 = vmatpush2.msra.mxu0 0.0
        %857 = vmatprep.subr.mxu0 0.0
        %858 = vmatpush2.msra.mxu0 0.0
        %859 = vmatprep.subr.mxu0 0.0
        %860 = vmatpush2.msra.mxu0 0.0
        %861 = vmatprep.subr.mxu0 0.0
        %862 = vmatpush2.msra.mxu0 0.0
        %863 = vmatprep.subr.mxu0 0.0
        %864 = vmatpush2.msra.mxu0 0.0
        %865 = vmatprep.mubr.f32.mxu0 0.0
        %866 = vmatmul.mubr.f32.gmra.mxu0 %v793
        %v867 = vpop.f32.mrf.mxu0
        %v868 = vadd.f32 0.0, %v867
        %v869 = vpop.f32.mrf.mxu0
        %v870 = vadd.f32 0.0, %v869
        %871 = vdwg.mxu0
        %v874 = vcombine.low %v868, %v870
        %v876 = vadd.f32 %v767, %v874
        %877 = vrot.lane.b32.xlu0 %v654, 15
        %v878 = vpop.permute.xlu0 %877
        %879 = vrot.lane.b32.xlu0 %v657, 15
        %v880 = vpop.permute.xlu0 %879
        %vm881 = vcmp.lt.s32.totalorder %v664, 15
        %v882 = vsel %vm881, %v878, %v880
        %v883 = vsel %vm881, %v880, %v878
        %s884 = scalar_lea.vmem %s1, 2
        %v885 = vld [vmem:[%s884] ss:$8 sm:$0x3]
        %v887 = vlaneseq
        %v888 = vshrl.u32 %v887, 7
        %v889 = vsub.s32 0, %v888
        %v890 = vrot.slane %v885, %v889
        %v891 = vlaneseq
        %v892 = vshrl.u32 %v891, 7
        %v893 = vsub.s32 1, %v892
        %v894 = vrot.slane %v885, %v893
        %v897 = vmul.f32 %v883, %v890
        %v898 = vmul.f32 %v882, %v894
        %s899 = scalar_lea.vmem %s5, 8
        %v900 = vld [vmem:[%s899] sm:$0xf]
        %v902 = vsel %vm443, %v900, 0
        %v905 = vsel %vm447, %v897, 0
        %v908 = vsel %vm447, %v898, 0
        %910 = vmatprep.subr.mxu0 0.0
        %911 = vmatpush1.msra.mxu0 0.0
        %912 = vmatprep.subr.mxu0 0.0
        %913 = vmatpush1.msra.mxu0 0.0
        %914 = vmatprep.subr.mxu0 0.0
        %915 = vmatpush1.msra.mxu0 0.0
        %916 = vmatprep.subr.mxu0 0.0
        %917 = vmatpush1.msra.mxu0 0.0
        %918 = vmatprep.subr.mxu0 0.0
        %919 = vmatpush1.msra.mxu0 0.0
        %920 = vmatprep.subr.mxu0 0.0
        %921 = vmatpush1.msra.mxu0 0.0
        %922 = vmatprep.subr.mxu0 0.0
        %923 = vmatpush1.msra.mxu0 0.0
        %924 = vmatprep.subr.mxu0 0.0
        %925 = vmatpush1.msra.mxu0 0.0
        %926 = vmatprep.subr.mxu0 0.0
        %927 = vmatpush1.msra.mxu0 0.0
        %928 = vmatprep.subr.mxu0 0.0
        %929 = vmatpush1.msra.mxu0 0.0
        %930 = vmatprep.subr.mxu0 0.0
        %931 = vmatpush1.msra.mxu0 0.0
        %932 = vmatprep.subr.mxu0 0.0
        %933 = vmatpush1.msra.mxu0 0.0
        %934 = vmatprep.subr.mxu0 0.0
        %935 = vmatpush1.msra.mxu0 0.0
        %936 = vmatprep.subr.mxu0 0.0
        %937 = vmatpush1.msra.mxu0 0.0
        %938 = vmatprep.subr.mxu0 0.0
        %939 = vmatpush1.msra.mxu0 0.0
        %940 = vmatprep.subr.mxu0 %v908
        %941 = vmatpush1.msra.mxu0 %v905
        %942 = vmatprep.subr.mxu0 0.0
        %943 = vmatpush2.msra.mxu0 0.0
        %944 = vmatprep.subr.mxu0 0.0
        %945 = vmatpush2.msra.mxu0 0.0
        %946 = vmatprep.subr.mxu0 0.0
        %947 = vmatpush2.msra.mxu0 0.0
        %948 = vmatprep.subr.mxu0 0.0
        %949 = vmatpush2.msra.mxu0 0.0
        %950 = vmatprep.subr.mxu0 0.0
        %951 = vmatpush2.msra.mxu0 0.0
        %952 = vmatprep.subr.mxu0 0.0
        %953 = vmatpush2.msra.mxu0 0.0
        %954 = vmatprep.subr.mxu0 0.0
        %955 = vmatpush2.msra.mxu0 0.0
        %956 = vmatprep.subr.mxu0 0.0
        %957 = vmatpush2.msra.mxu0 0.0
        %958 = vmatprep.subr.mxu0 0.0
        %959 = vmatpush2.msra.mxu0 0.0
        %960 = vmatprep.subr.mxu0 0.0
        %961 = vmatpush2.msra.mxu0 0.0
        %962 = vmatprep.subr.mxu0 0.0
        %963 = vmatpush2.msra.mxu0 0.0
        %964 = vmatprep.subr.mxu0 0.0
        %965 = vmatpush2.msra.mxu0 0.0
        %966 = vmatprep.subr.mxu0 0.0
        %967 = vmatpush2.msra.mxu0 0.0
        %968 = vmatprep.subr.mxu0 0.0
        %969 = vmatpush2.msra.mxu0 0.0
        %970 = vmatprep.subr.mxu0 0.0
        %971 = vmatpush2.msra.mxu0 0.0
        %972 = vmatprep.subr.mxu0 0.0
        %973 = vmatpush2.msra.mxu0 0.0
        %974 = vmatprep.mubr.f32.mxu0 0.0
        %975 = vmatmul.mubr.f32.gmra.mxu0 %v902
        %v976 = vpop.f32.mrf.mxu0
        %v977 = vadd.f32 0.0, %v976
        %v978 = vpop.f32.mrf.mxu0
        %v979 = vadd.f32 0.0, %v978
        %980 = vdwg.mxu0
        %v983 = vcombine.low %v977, %v979
        %v985 = vadd.f32 %v876, %v983
        %986 = vrot.lane.b32.xlu0 %v654, 1
        %v987 = vpop.permute.xlu0 %986
        %988 = vrot.lane.b32.xlu0 %v657, 1
        %v989 = vpop.permute.xlu0 %988
        %vm990 = vcmp.lt.s32.totalorder %v664, 1
        %v991 = vsel %vm990, %v987, %v989
        %v992 = vsel %vm990, %v989, %v987
        %s993 = scalar_lea.vmem %s1, 3
        %v994 = vld [vmem:[%s993] ss:$8 sm:$0x3]
        %v996 = vlaneseq
        %v997 = vshrl.u32 %v996, 7
        %v998 = vsub.s32 0, %v997
        %v999 = vrot.slane %v994, %v998
        %v1000 = vlaneseq
        %v1001 = vshrl.u32 %v1000, 7
        %v1002 = vsub.s32 1, %v1001
        %v1003 = vrot.slane %v994, %v1002
        %v1006 = vmul.f32 %v992, %v999
        %v1007 = vmul.f32 %v991, %v1003
        %s1008 = scalar_lea.vmem %s5, 12
        %v1009 = vld [vmem:[%s1008] sm:$0xf]
        %v1011 = vsel %vm443, %v1009, 0
        %v1014 = vsel %vm447, %v1006, 0
        %v1017 = vsel %vm447, %v1007, 0
        %1019 = vmatprep.subr.mxu0 0.0
        %1020 = vmatpush1.msra.mxu0 0.0
        %1021 = vmatprep.subr.mxu0 0.0
        %1022 = vmatpush1.msra.mxu0 0.0
        %1023 = vmatprep.subr.mxu0 0.0
        %1024 = vmatpush1.msra.mxu0 0.0
        %1025 = vmatprep.subr.mxu0 0.0
        %1026 = vmatpush1.msra.mxu0 0.0
        %1027 = vmatprep.subr.mxu0 0.0
        %1028 = vmatpush1.msra.mxu0 0.0
        %1029 = vmatprep.subr.mxu0 0.0
        %1030 = vmatpush1.msra.mxu0 0.0
        %1031 = vmatprep.subr.mxu0 0.0
        %1032 = vmatpush1.msra.mxu0 0.0
        %1033 = vmatprep.subr.mxu0 0.0
        %1034 = vmatpush1.msra.mxu0 0.0
        %1035 = vmatprep.subr.mxu0 0.0
        %1036 = vmatpush1.msra.mxu0 0.0
        %1037 = vmatprep.subr.mxu0 0.0
        %1038 = vmatpush1.msra.mxu0 0.0
        %1039 = vmatprep.subr.mxu0 0.0
        %1040 = vmatpush1.msra.mxu0 0.0
        %1041 = vmatprep.subr.mxu0 0.0
        %1042 = vmatpush1.msra.mxu0 0.0
        %1043 = vmatprep.subr.mxu0 0.0
        %1044 = vmatpush1.msra.mxu0 0.0
        %1045 = vmatprep.subr.mxu0 0.0
        %1046 = vmatpush1.msra.mxu0 0.0
        %1047 = vmatprep.subr.mxu0 0.0
        %1048 = vmatpush1.msra.mxu0 0.0
        %1049 = vmatprep.subr.mxu0 %v1017
        %1050 = vmatpush1.msra.mxu0 %v1014
        %1051 = vmatprep.subr.mxu0 0.0
        %1052 = vmatpush2.msra.mxu0 0.0
        %1053 = vmatprep.subr.mxu0 0.0
        %1054 = vmatpush2.msra.mxu0 0.0
        %1055 = vmatprep.subr.mxu0 0.0
        %1056 = vmatpush2.msra.mxu0 0.0
        %1057 = vmatprep.subr.mxu0 0.0
        %1058 = vmatpush2.msra.mxu0 0.0
        %1059 = vmatprep.subr.mxu0 0.0
        %1060 = vmatpush2.msra.mxu0 0.0
        %1061 = vmatprep.subr.mxu0 0.0
        %1062 = vmatpush2.msra.mxu0 0.0
        %1063 = vmatprep.subr.mxu0 0.0
        %1064 = vmatpush2.msra.mxu0 0.0
        %1065 = vmatprep.subr.mxu0 0.0
        %1066 = vmatpush2.msra.mxu0 0.0
        %1067 = vmatprep.subr.mxu0 0.0
        %1068 = vmatpush2.msra.mxu0 0.0
        %1069 = vmatprep.subr.mxu0 0.0
        %1070 = vmatpush2.msra.mxu0 0.0
        %1071 = vmatprep.subr.mxu0 0.0
        %1072 = vmatpush2.msra.mxu0 0.0
        %1073 = vmatprep.subr.mxu0 0.0
        %1074 = vmatpush2.msra.mxu0 0.0
        %1075 = vmatprep.subr.mxu0 0.0
        %1076 = vmatpush2.msra.mxu0 0.0
        %1077 = vmatprep.subr.mxu0 0.0
        %1078 = vmatpush2.msra.mxu0 0.0
        %1079 = vmatprep.subr.mxu0 0.0
        %1080 = vmatpush2.msra.mxu0 0.0
        %1081 = vmatprep.subr.mxu0 0.0
        %1082 = vmatpush2.msra.mxu0 0.0
        %1083 = vmatprep.mubr.f32.mxu0 0.0
        %1084 = vmatmul.mubr.f32.gmra.mxu0 %v1011
        %v1085 = vpop.f32.mrf.mxu0
        %v1086 = vadd.f32 0.0, %v1085
        %v1087 = vpop.f32.mrf.mxu0
        %v1088 = vadd.f32 0.0, %v1087
        %1089 = vdwg.mxu0
        %v1092 = vcombine.low %v1086, %v1088
        %v1094 = vadd.f32 %v985, %v1092
        %s1095 = scalar_lea.vmem %s1, 4
        %v1096 = vld [vmem:[%s1095] ss:$8 sm:$0x3]
        %v1098 = vlaneseq
        %v1099 = vshrl.u32 %v1098, 7
        %v1100 = vsub.s32 0, %v1099
        %v1101 = vrot.slane %v1096, %v1100
        %v1102 = vlaneseq
        %v1103 = vshrl.u32 %v1102, 7
        %v1104 = vsub.s32 1, %v1103
        %v1105 = vrot.slane %v1096, %v1104
        %v1106 = vcombine.low %v1101, %v1105
        %v1108 = vmul.f32 %v654, %v1106
        %s1109 = scalar_lea.vmem %s5, 16
        %v1110 = vld [vmem:[%s1109] sm:$0xf]
        %v1112 = vcombine.high %v1108, %v1108
        %v1114 = vsel %vm443, %v1110, 0
        %v1116 = vsel %vm447, %v1108, 0
        %v1118 = vsel %vm447, %v1112, 0
        %1120 = vmatprep.subr.mxu0 0.0
        %1121 = vmatpush1.msra.mxu0 0.0
        %1122 = vmatprep.subr.mxu0 0.0
        %1123 = vmatpush1.msra.mxu0 0.0
        %1124 = vmatprep.subr.mxu0 0.0
        %1125 = vmatpush1.msra.mxu0 0.0
        %1126 = vmatprep.subr.mxu0 0.0
        %1127 = vmatpush1.msra.mxu0 0.0
        %1128 = vmatprep.subr.mxu0 0.0
        %1129 = vmatpush1.msra.mxu0 0.0
        %1130 = vmatprep.subr.mxu0 0.0
        %1131 = vmatpush1.msra.mxu0 0.0
        %1132 = vmatprep.subr.mxu0 0.0
        %1133 = vmatpush1.msra.mxu0 0.0
        %1134 = vmatprep.subr.mxu0 0.0
        %1135 = vmatpush1.msra.mxu0 0.0
        %1136 = vmatprep.subr.mxu0 0.0
        %1137 = vmatpush1.msra.mxu0 0.0
        %1138 = vmatprep.subr.mxu0 0.0
        %1139 = vmatpush1.msra.mxu0 0.0
        %1140 = vmatprep.subr.mxu0 0.0
        %1141 = vmatpush1.msra.mxu0 0.0
        %1142 = vmatprep.subr.mxu0 0.0
        %1143 = vmatpush1.msra.mxu0 0.0
        %1144 = vmatprep.subr.mxu0 0.0
        %1145 = vmatpush1.msra.mxu0 0.0
        %1146 = vmatprep.subr.mxu0 0.0
        %1147 = vmatpush1.msra.mxu0 0.0
        %1148 = vmatprep.subr.mxu0 0.0
        %1149 = vmatpush1.msra.mxu0 0.0
        %1150 = vmatprep.subr.mxu0 %v1118
        %1151 = vmatpush1.msra.mxu0 %v1116
        %1152 = vmatprep.subr.mxu0 0.0
        %1153 = vmatpush2.msra.mxu0 0.0
        %1154 = vmatprep.subr.mxu0 0.0
        %1155 = vmatpush2.msra.mxu0 0.0
        %1156 = vmatprep.subr.mxu0 0.0
        %1157 = vmatpush2.msra.mxu0 0.0
        %1158 = vmatprep.subr.mxu0 0.0
        %1159 = vmatpush2.msra.mxu0 0.0
        %1160 = vmatprep.subr.mxu0 0.0
        %1161 = vmatpush2.msra.mxu0 0.0
        %1162 = vmatprep.subr.mxu0 0.0
        %1163 = vmatpush2.msra.mxu0 0.0
        %1164 = vmatprep.subr.mxu0 0.0
        %1165 = vmatpush2.msra.mxu0 0.0
        %1166 = vmatprep.subr.mxu0 0.0
        %1167 = vmatpush2.msra.mxu0 0.0
        %1168 = vmatprep.subr.mxu0 0.0
        %1169 = vmatpush2.msra.mxu0 0.0
        %1170 = vmatprep.subr.mxu0 0.0
        %1171 = vmatpush2.msra.mxu0 0.0
        %1172 = vmatprep.subr.mxu0 0.0
        %1173 = vmatpush2.msra.mxu0 0.0
        %1174 = vmatprep.subr.mxu0 0.0
        %1175 = vmatpush2.msra.mxu0 0.0
        %1176 = vmatprep.subr.mxu0 0.0
        %1177 = vmatpush2.msra.mxu0 0.0
        %1178 = vmatprep.subr.mxu0 0.0
        %1179 = vmatpush2.msra.mxu0 0.0
        %1180 = vmatprep.subr.mxu0 0.0
        %1181 = vmatpush2.msra.mxu0 0.0
        %1182 = vmatprep.subr.mxu0 0.0
        %1183 = vmatpush2.msra.mxu0 0.0
        %1184 = vmatprep.mubr.f32.mxu0 0.0
        %1185 = vmatmul.mubr.f32.gmra.mxu0 %v1114
        %v1186 = vpop.f32.mrf.mxu0
        %v1187 = vadd.f32 0.0, %v1186
        %v1188 = vpop.f32.mrf.mxu0
        %v1189 = vadd.f32 0.0, %v1188
        %1190 = vdwg.mxu0
        %v1193 = vcombine.low %v1187, %v1189
        %v1195 = vadd.f32 %v1094, %v1193
        %1196 = vrot.lane.b32.xlu0 %v654, 127
        %v1197 = vpop.permute.xlu0 %1196
        %1198 = vrot.lane.b32.xlu0 %v657, 127
        %v1199 = vpop.permute.xlu0 %1198
        %vm1200 = vcmp.lt.s32.totalorder %v664, 127
        %v1201 = vsel %vm1200, %v1197, %v1199
        %v1202 = vsel %vm1200, %v1199, %v1197
        %s1203 = scalar_lea.vmem %s1, 5
        %v1204 = vld [vmem:[%s1203] ss:$8 sm:$0x3]
        %v1206 = vlaneseq
        %v1207 = vshrl.u32 %v1206, 7
        %v1208 = vsub.s32 0, %v1207
        %v1209 = vrot.slane %v1204, %v1208
        %v1210 = vlaneseq
        %v1211 = vshrl.u32 %v1210, 7
        %v1212 = vsub.s32 1, %v1211
        %v1213 = vrot.slane %v1204, %v1212
        %v1216 = vmul.f32 %v1201, %v1209
        %v1217 = vmul.f32 %v1202, %v1213
        %s1218 = scalar_lea.vmem %s5, 20
        %v1219 = vld [vmem:[%s1218] sm:$0xf]
        %v1221 = vsel %vm443, %v1219, 0
        %v1224 = vsel %vm447, %v1216, 0
        %v1227 = vsel %vm447, %v1217, 0
        %1229 = vmatprep.subr.mxu0 0.0
        %1230 = vmatpush1.msra.mxu0 0.0
        %1231 = vmatprep.subr.mxu0 0.0
        %1232 = vmatpush1.msra.mxu0 0.0
        %1233 = vmatprep.subr.mxu0 0.0
        %1234 = vmatpush1.msra.mxu0 0.0
        %1235 = vmatprep.subr.mxu0 0.0
        %1236 = vmatpush1.msra.mxu0 0.0
        %1237 = vmatprep.subr.mxu0 0.0
        %1238 = vmatpush1.msra.mxu0 0.0
        %1239 = vmatprep.subr.mxu0 0.0
        %1240 = vmatpush1.msra.mxu0 0.0
        %1241 = vmatprep.subr.mxu0 0.0
        %1242 = vmatpush1.msra.mxu0 0.0
        %1243 = vmatprep.subr.mxu0 0.0
        %1244 = vmatpush1.msra.mxu0 0.0
        %1245 = vmatprep.subr.mxu0 0.0
        %1246 = vmatpush1.msra.mxu0 0.0
        %1247 = vmatprep.subr.mxu0 0.0
        %1248 = vmatpush1.msra.mxu0 0.0
        %1249 = vmatprep.subr.mxu0 0.0
        %1250 = vmatpush1.msra.mxu0 0.0
        %1251 = vmatprep.subr.mxu0 0.0
        %1252 = vmatpush1.msra.mxu0 0.0
        %1253 = vmatprep.subr.mxu0 0.0
        %1254 = vmatpush1.msra.mxu0 0.0
        %1255 = vmatprep.subr.mxu0 0.0
        %1256 = vmatpush1.msra.mxu0 0.0
        %1257 = vmatprep.subr.mxu0 0.0
        %1258 = vmatpush1.msra.mxu0 0.0
        %1259 = vmatprep.subr.mxu0 %v1227
        %1260 = vmatpush1.msra.mxu0 %v1224
        %1261 = vmatprep.subr.mxu0 0.0
        %1262 = vmatpush2.msra.mxu0 0.0
        %1263 = vmatprep.subr.mxu0 0.0
        %1264 = vmatpush2.msra.mxu0 0.0
        %1265 = vmatprep.subr.mxu0 0.0
        %1266 = vmatpush2.msra.mxu0 0.0
        %1267 = vmatprep.subr.mxu0 0.0
        %1268 = vmatpush2.msra.mxu0 0.0
        %1269 = vmatprep.subr.mxu0 0.0
        %1270 = vmatpush2.msra.mxu0 0.0
        %1271 = vmatprep.subr.mxu0 0.0
        %1272 = vmatpush2.msra.mxu0 0.0
        %1273 = vmatprep.subr.mxu0 0.0
        %1274 = vmatpush2.msra.mxu0 0.0
        %1275 = vmatprep.subr.mxu0 0.0
        %1276 = vmatpush2.msra.mxu0 0.0
        %1277 = vmatprep.subr.mxu0 0.0
        %1278 = vmatpush2.msra.mxu0 0.0
        %1279 = vmatprep.subr.mxu0 0.0
        %1280 = vmatpush2.msra.mxu0 0.0
        %1281 = vmatprep.subr.mxu0 0.0
        %1282 = vmatpush2.msra.mxu0 0.0
        %1283 = vmatprep.subr.mxu0 0.0
        %1284 = vmatpush2.msra.mxu0 0.0
        %1285 = vmatprep.subr.mxu0 0.0
        %1286 = vmatpush2.msra.mxu0 0.0
        %1287 = vmatprep.subr.mxu0 0.0
        %1288 = vmatpush2.msra.mxu0 0.0
        %1289 = vmatprep.subr.mxu0 0.0
        %1290 = vmatpush2.msra.mxu0 0.0
        %1291 = vmatprep.subr.mxu0 0.0
        %1292 = vmatpush2.msra.mxu0 0.0
        %1293 = vmatprep.mubr.f32.mxu0 0.0
        %1294 = vmatmul.mubr.f32.gmra.mxu0 %v1221
        %v1295 = vpop.f32.mrf.mxu0
        %v1296 = vadd.f32 0.0, %v1295
        %v1297 = vpop.f32.mrf.mxu0
        %v1298 = vadd.f32 0.0, %v1297
        %1299 = vdwg.mxu0
        %v1302 = vcombine.low %v1296, %v1298
        %v1304 = vadd.f32 %v1195, %v1302
        %1305 = vrot.lane.b32.xlu0 %v654, 113
        %v1306 = vpop.permute.xlu0 %1305
        %1307 = vrot.lane.b32.xlu0 %v657, 113
        %v1308 = vpop.permute.xlu0 %1307
        %vm1309 = vcmp.lt.s32.totalorder %v664, 113
        %v1310 = vsel %vm1309, %v1306, %v1308
        %v1311 = vsel %vm1309, %v1308, %v1306
        %s1312 = scalar_lea.vmem %s1, 6
        %v1313 = vld [vmem:[%s1312] ss:$8 sm:$0x3]
        %v1315 = vlaneseq
        %v1316 = vshrl.u32 %v1315, 7
        %v1317 = vsub.s32 0, %v1316
        %v1318 = vrot.slane %v1313, %v1317
        %v1319 = vlaneseq
        %v1320 = vshrl.u32 %v1319, 7
        %v1321 = vsub.s32 1, %v1320
        %v1322 = vrot.slane %v1313, %v1321
        %v1325 = vmul.f32 %v1310, %v1318
        %v1326 = vmul.f32 %v1311, %v1322
        %s1327 = scalar_lea.vmem %s5, 24
        %v1328 = vld [vmem:[%s1327] sm:$0xf]
        %v1330 = vsel %vm443, %v1328, 0
        %v1333 = vsel %vm447, %v1325, 0
        %v1336 = vsel %vm447, %v1326, 0
        %1338 = vmatprep.subr.mxu0 0.0
        %1339 = vmatpush1.msra.mxu0 0.0
        %1340 = vmatprep.subr.mxu0 0.0
        %1341 = vmatpush1.msra.mxu0 0.0
        %1342 = vmatprep.subr.mxu0 0.0
        %1343 = vmatpush1.msra.mxu0 0.0
        %1344 = vmatprep.subr.mxu0 0.0
        %1345 = vmatpush1.msra.mxu0 0.0
        %1346 = vmatprep.subr.mxu0 0.0
        %1347 = vmatpush1.msra.mxu0 0.0
        %1348 = vmatprep.subr.mxu0 0.0
        %1349 = vmatpush1.msra.mxu0 0.0
        %1350 = vmatprep.subr.mxu0 0.0
        %1351 = vmatpush1.msra.mxu0 0.0
        %1352 = vmatprep.subr.mxu0 0.0
        %1353 = vmatpush1.msra.mxu0 0.0
        %1354 = vmatprep.subr.mxu0 0.0
        %1355 = vmatpush1.msra.mxu0 0.0
        %1356 = vmatprep.subr.mxu0 0.0
        %1357 = vmatpush1.msra.mxu0 0.0
        %1358 = vmatprep.subr.mxu0 0.0
        %1359 = vmatpush1.msra.mxu0 0.0
        %1360 = vmatprep.subr.mxu0 0.0
        %1361 = vmatpush1.msra.mxu0 0.0
        %1362 = vmatprep.subr.mxu0 0.0
        %1363 = vmatpush1.msra.mxu0 0.0
        %1364 = vmatprep.subr.mxu0 0.0
        %1365 = vmatpush1.msra.mxu0 0.0
        %1366 = vmatprep.subr.mxu0 0.0
        %1367 = vmatpush1.msra.mxu0 0.0
        %1368 = vmatprep.subr.mxu0 %v1336
        %1369 = vmatpush1.msra.mxu0 %v1333
        %1370 = vmatprep.subr.mxu0 0.0
        %1371 = vmatpush2.msra.mxu0 0.0
        %1372 = vmatprep.subr.mxu0 0.0
        %1373 = vmatpush2.msra.mxu0 0.0
        %1374 = vmatprep.subr.mxu0 0.0
        %1375 = vmatpush2.msra.mxu0 0.0
        %1376 = vmatprep.subr.mxu0 0.0
        %1377 = vmatpush2.msra.mxu0 0.0
        %1378 = vmatprep.subr.mxu0 0.0
        %1379 = vmatpush2.msra.mxu0 0.0
        %1380 = vmatprep.subr.mxu0 0.0
        %1381 = vmatpush2.msra.mxu0 0.0
        %1382 = vmatprep.subr.mxu0 0.0
        %1383 = vmatpush2.msra.mxu0 0.0
        %1384 = vmatprep.subr.mxu0 0.0
        %1385 = vmatpush2.msra.mxu0 0.0
        %1386 = vmatprep.subr.mxu0 0.0
        %1387 = vmatpush2.msra.mxu0 0.0
        %1388 = vmatprep.subr.mxu0 0.0
        %1389 = vmatpush2.msra.mxu0 0.0
        %1390 = vmatprep.subr.mxu0 0.0
        %1391 = vmatpush2.msra.mxu0 0.0
        %1392 = vmatprep.subr.mxu0 0.0
        %1393 = vmatpush2.msra.mxu0 0.0
        %1394 = vmatprep.subr.mxu0 0.0
        %1395 = vmatpush2.msra.mxu0 0.0
        %1396 = vmatprep.subr.mxu0 0.0
        %1397 = vmatpush2.msra.mxu0 0.0
        %1398 = vmatprep.subr.mxu0 0.0
        %1399 = vmatpush2.msra.mxu0 0.0
        %1400 = vmatprep.subr.mxu0 0.0
        %1401 = vmatpush2.msra.mxu0 0.0
        %1402 = vmatprep.mubr.f32.mxu0 0.0
        %1403 = vmatmul.mubr.f32.gmra.mxu0 %v1330
        %v1404 = vpop.f32.mrf.mxu0
        %v1405 = vadd.f32 0.0, %v1404
        %v1406 = vpop.f32.mrf.mxu0
        %v1407 = vadd.f32 0.0, %v1406
        %1408 = vdwg.mxu0
        %v1411 = vcombine.low %v1405, %v1407
        %v1413 = vadd.f32 %v1304, %v1411
        %1414 = vrot.lane.b32.xlu0 %v654, 112
        %v1415 = vpop.permute.xlu0 %1414
        %1416 = vrot.lane.b32.xlu0 %v657, 112
        %v1417 = vpop.permute.xlu0 %1416
        %vm1418 = vcmp.lt.s32.totalorder %v664, 112
        %v1419 = vsel %vm1418, %v1415, %v1417
        %v1420 = vsel %vm1418, %v1417, %v1415
        %s1421 = scalar_lea.vmem %s1, 7
        %v1422 = vld [vmem:[%s1421] ss:$8 sm:$0x3]
        %v1424 = vlaneseq
        %v1425 = vshrl.u32 %v1424, 7
        %v1426 = vsub.s32 0, %v1425
        %v1427 = vrot.slane %v1422, %v1426
        %v1428 = vlaneseq
        %v1429 = vshrl.u32 %v1428, 7
        %v1430 = vsub.s32 1, %v1429
        %v1431 = vrot.slane %v1422, %v1430
        %v1434 = vmul.f32 %v1419, %v1427
        %v1435 = vmul.f32 %v1420, %v1431
        %s1436 = scalar_lea.vmem %s5, 28
        %v1437 = vld [vmem:[%s1436] sm:$0xf]
        %v1439 = vsel %vm443, %v1437, 0
        %v1442 = vsel %vm447, %v1434, 0
        %v1445 = vsel %vm447, %v1435, 0
        %1447 = vmatprep.subr.mxu0 0.0
        %1448 = vmatpush1.msra.mxu0 0.0
        %1449 = vmatprep.subr.mxu0 0.0
        %1450 = vmatpush1.msra.mxu0 0.0
        %1451 = vmatprep.subr.mxu0 0.0
        %1452 = vmatpush1.msra.mxu0 0.0
        %1453 = vmatprep.subr.mxu0 0.0
        %1454 = vmatpush1.msra.mxu0 0.0
        %1455 = vmatprep.subr.mxu0 0.0
        %1456 = vmatpush1.msra.mxu0 0.0
        %1457 = vmatprep.subr.mxu0 0.0
        %1458 = vmatpush1.msra.mxu0 0.0
        %1459 = vmatprep.subr.mxu0 0.0
        %1460 = vmatpush1.msra.mxu0 0.0
        %1461 = vmatprep.subr.mxu0 0.0
        %1462 = vmatpush1.msra.mxu0 0.0
        %1463 = vmatprep.subr.mxu0 0.0
        %1464 = vmatpush1.msra.mxu0 0.0
        %1465 = vmatprep.subr.mxu0 0.0
        %1466 = vmatpush1.msra.mxu0 0.0
        %1467 = vmatprep.subr.mxu0 0.0
        %1468 = vmatpush1.msra.mxu0 0.0
        %1469 = vmatprep.subr.mxu0 0.0
        %1470 = vmatpush1.msra.mxu0 0.0
        %1471 = vmatprep.subr.mxu0 0.0
        %1472 = vmatpush1.msra.mxu0 0.0
        %1473 = vmatprep.subr.mxu0 0.0
        %1474 = vmatpush1.msra.mxu0 0.0
        %1475 = vmatprep.subr.mxu0 0.0
        %1476 = vmatpush1.msra.mxu0 0.0
        %1477 = vmatprep.subr.mxu0 %v1445
        %1478 = vmatpush1.msra.mxu0 %v1442
        %1479 = vmatprep.subr.mxu0 0.0
        %1480 = vmatpush2.msra.mxu0 0.0
        %1481 = vmatprep.subr.mxu0 0.0
        %1482 = vmatpush2.msra.mxu0 0.0
        %1483 = vmatprep.subr.mxu0 0.0
        %1484 = vmatpush2.msra.mxu0 0.0
        %1485 = vmatprep.subr.mxu0 0.0
        %1486 = vmatpush2.msra.mxu0 0.0
        %1487 = vmatprep.subr.mxu0 0.0
        %1488 = vmatpush2.msra.mxu0 0.0
        %1489 = vmatprep.subr.mxu0 0.0
        %1490 = vmatpush2.msra.mxu0 0.0
        %1491 = vmatprep.subr.mxu0 0.0
        %1492 = vmatpush2.msra.mxu0 0.0
        %1493 = vmatprep.subr.mxu0 0.0
        %1494 = vmatpush2.msra.mxu0 0.0
        %1495 = vmatprep.subr.mxu0 0.0
        %1496 = vmatpush2.msra.mxu0 0.0
        %1497 = vmatprep.subr.mxu0 0.0
        %1498 = vmatpush2.msra.mxu0 0.0
        %1499 = vmatprep.subr.mxu0 0.0
        %1500 = vmatpush2.msra.mxu0 0.0
        %1501 = vmatprep.subr.mxu0 0.0
        %1502 = vmatpush2.msra.mxu0 0.0
        %1503 = vmatprep.subr.mxu0 0.0
        %1504 = vmatpush2.msra.mxu0 0.0
        %1505 = vmatprep.subr.mxu0 0.0
        %1506 = vmatpush2.msra.mxu0 0.0
        %1507 = vmatprep.subr.mxu0 0.0
        %1508 = vmatpush2.msra.mxu0 0.0
        %1509 = vmatprep.subr.mxu0 0.0
        %1510 = vmatpush2.msra.mxu0 0.0
        %1511 = vmatprep.mubr.f32.mxu0 0.0
        %1512 = vmatmul.mubr.f32.gmra.mxu0 %v1439
        %v1513 = vpop.f32.mrf.mxu0
        %v1514 = vadd.f32 0.0, %v1513
        %v1515 = vpop.f32.mrf.mxu0
        %v1516 = vadd.f32 0.0, %v1515
        %1517 = vdwg.mxu0
        %v1520 = vcombine.low %v1514, %v1516
        %v1522 = vadd.f32 %v1413, %v1520
        %1523 = vrot.lane.b32.xlu0 %v654, 111
        %v1524 = vpop.permute.xlu0 %1523
        %1525 = vrot.lane.b32.xlu0 %v657, 111
        %v1526 = vpop.permute.xlu0 %1525
        %vm1527 = vcmp.lt.s32.totalorder %v664, 111
        %v1528 = vsel %vm1527, %v1524, %v1526
        %v1529 = vsel %vm1527, %v1526, %v1524
        %s1530 = scalar_lea.vmem %s1, 16
        %v1531 = vld [vmem:[%s1530] ss:$8 sm:$0x3]
        %v1533 = vlaneseq
        %v1534 = vshrl.u32 %v1533, 7
        %v1535 = vsub.s32 0, %v1534
        %v1536 = vrot.slane %v1531, %v1535
        %v1537 = vlaneseq
        %v1538 = vshrl.u32 %v1537, 7
        %v1539 = vsub.s32 1, %v1538
        %v1540 = vrot.slane %v1531, %v1539
        %v1543 = vmul.f32 %v1528, %v1536
        %v1544 = vmul.f32 %v1529, %v1540
        %s1545 = scalar_lea.vmem %s5, 32
        %v1546 = vld [vmem:[%s1545] sm:$0xf]
        %v1548 = vsel %vm443, %v1546, 0
        %v1551 = vsel %vm447, %v1543, 0
        %v1554 = vsel %vm447, %v1544, 0
        %1556 = vmatprep.subr.mxu0 0.0
        %1557 = vmatpush1.msra.mxu0 0.0
        %1558 = vmatprep.subr.mxu0 0.0
        %1559 = vmatpush1.msra.mxu0 0.0
        %1560 = vmatprep.subr.mxu0 0.0
        %1561 = vmatpush1.msra.mxu0 0.0
        %1562 = vmatprep.subr.mxu0 0.0
        %1563 = vmatpush1.msra.mxu0 0.0
        %1564 = vmatprep.subr.mxu0 0.0
        %1565 = vmatpush1.msra.mxu0 0.0
        %1566 = vmatprep.subr.mxu0 0.0
        %1567 = vmatpush1.msra.mxu0 0.0
        %1568 = vmatprep.subr.mxu0 0.0
        %1569 = vmatpush1.msra.mxu0 0.0
        %1570 = vmatprep.subr.mxu0 0.0
        %1571 = vmatpush1.msra.mxu0 0.0
        %1572 = vmatprep.subr.mxu0 0.0
        %1573 = vmatpush1.msra.mxu0 0.0
        %1574 = vmatprep.subr.mxu0 0.0
        %1575 = vmatpush1.msra.mxu0 0.0
        %1576 = vmatprep.subr.mxu0 0.0
        %1577 = vmatpush1.msra.mxu0 0.0
        %1578 = vmatprep.subr.mxu0 0.0
        %1579 = vmatpush1.msra.mxu0 0.0
        %1580 = vmatprep.subr.mxu0 0.0
        %1581 = vmatpush1.msra.mxu0 0.0
        %1582 = vmatprep.subr.mxu0 0.0
        %1583 = vmatpush1.msra.mxu0 0.0
        %1584 = vmatprep.subr.mxu0 0.0
        %1585 = vmatpush1.msra.mxu0 0.0
        %1586 = vmatprep.subr.mxu0 %v1554
        %1587 = vmatpush1.msra.mxu0 %v1551
        %1588 = vmatprep.subr.mxu0 0.0
        %1589 = vmatpush2.msra.mxu0 0.0
        %1590 = vmatprep.subr.mxu0 0.0
        %1591 = vmatpush2.msra.mxu0 0.0
        %1592 = vmatprep.subr.mxu0 0.0
        %1593 = vmatpush2.msra.mxu0 0.0
        %1594 = vmatprep.subr.mxu0 0.0
        %1595 = vmatpush2.msra.mxu0 0.0
        %1596 = vmatprep.subr.mxu0 0.0
        %1597 = vmatpush2.msra.mxu0 0.0
        %1598 = vmatprep.subr.mxu0 0.0
        %1599 = vmatpush2.msra.mxu0 0.0
        %1600 = vmatprep.subr.mxu0 0.0
        %1601 = vmatpush2.msra.mxu0 0.0
        %1602 = vmatprep.subr.mxu0 0.0
        %1603 = vmatpush2.msra.mxu0 0.0
        %1604 = vmatprep.subr.mxu0 0.0
        %1605 = vmatpush2.msra.mxu0 0.0
        %1606 = vmatprep.subr.mxu0 0.0
        %1607 = vmatpush2.msra.mxu0 0.0
        %1608 = vmatprep.subr.mxu0 0.0
        %1609 = vmatpush2.msra.mxu0 0.0
        %1610 = vmatprep.subr.mxu0 0.0
        %1611 = vmatpush2.msra.mxu0 0.0
        %1612 = vmatprep.subr.mxu0 0.0
        %1613 = vmatpush2.msra.mxu0 0.0
        %1614 = vmatprep.subr.mxu0 0.0
        %1615 = vmatpush2.msra.mxu0 0.0
        %1616 = vmatprep.subr.mxu0 0.0
        %1617 = vmatpush2.msra.mxu0 0.0
        %1618 = vmatprep.subr.mxu0 0.0
        %1619 = vmatpush2.msra.mxu0 0.0
        %1620 = vmatprep.mubr.f32.mxu0 0.0
        %1621 = vmatmul.mubr.f32.gmra.mxu0 %v1548
        %v1622 = vpop.f32.mrf.mxu0
        %v1623 = vadd.f32 0.0, %v1622
        %v1624 = vpop.f32.mrf.mxu0
        %v1625 = vadd.f32 0.0, %v1624
        %1626 = vdwg.mxu0
        %v1629 = vcombine.low %v1623, %v1625
        %v1631 = vadd.f32 %v1522, %v1629
        %v1633 = vcombine.high %v1631, %v1631
        %v1634 = vsel %vm447, %v1631, 0
        %v1636 = vsel %vm447, %v1633, 0
        %1638 = vmatprep.subr.mxu0 0.0
        %1639 = vmatpush1.msra.mxu0 0.0
        %1640 = vmatprep.subr.mxu0 0.0
        %1641 = vmatpush1.msra.mxu0 0.0
        %1642 = vmatprep.subr.mxu0 0.0
        %1643 = vmatpush1.msra.mxu0 0.0
        %1644 = vmatprep.subr.mxu0 0.0
        %1645 = vmatpush1.msra.mxu0 0.0
        %1646 = vmatprep.subr.mxu0 0.0
        %1647 = vmatpush1.msra.mxu0 0.0
        %1648 = vmatprep.subr.mxu0 0.0
        %1649 = vmatpush1.msra.mxu0 0.0
        %1650 = vmatprep.subr.mxu0 0.0
        %1651 = vmatpush1.msra.mxu0 0.0
        %1652 = vmatprep.subr.mxu0 0.0
        %1653 = vmatpush1.msra.mxu0 0.0
        %1654 = vmatprep.subr.mxu0 0.0
        %1655 = vmatpush1.msra.mxu0 0.0
        %1656 = vmatprep.subr.mxu0 0.0
        %1657 = vmatpush1.msra.mxu0 0.0
        %1658 = vmatprep.subr.mxu0 0.0
        %1659 = vmatpush1.msra.mxu0 0.0
        %1660 = vmatprep.subr.mxu0 0.0
        %1661 = vmatpush1.msra.mxu0 0.0
        %1662 = vmatprep.subr.mxu0 0.0
        %1663 = vmatpush1.msra.mxu0 0.0
        %1664 = vmatprep.subr.mxu0 0.0
        %1665 = vmatpush1.msra.mxu0 0.0
        %1666 = vmatprep.subr.mxu0 0.0
        %1667 = vmatpush1.msra.mxu0 0.0
        %1668 = vmatprep.subr.mxu0 %v1636
        %1669 = vmatpush1.msra.mxu0 %v1634
        %1670 = vmatprep.subr.mxu0 0.0
        %1671 = vmatpush2.msra.mxu0 0.0
        %1672 = vmatprep.subr.mxu0 0.0
        %1673 = vmatpush2.msra.mxu0 0.0
        %1674 = vmatprep.subr.mxu0 0.0
        %1675 = vmatpush2.msra.mxu0 0.0
        %1676 = vmatprep.subr.mxu0 0.0
        %1677 = vmatpush2.msra.mxu0 0.0
        %1678 = vmatprep.subr.mxu0 0.0
        %1679 = vmatpush2.msra.mxu0 0.0
        %1680 = vmatprep.subr.mxu0 0.0
        %1681 = vmatpush2.msra.mxu0 0.0
        %1682 = vmatprep.subr.mxu0 0.0
        %1683 = vmatpush2.msra.mxu0 0.0
        %1684 = vmatprep.subr.mxu0 0.0
        %1685 = vmatpush2.msra.mxu0 0.0
        %1686 = vmatprep.subr.mxu0 0.0
        %1687 = vmatpush2.msra.mxu0 0.0
        %1688 = vmatprep.subr.mxu0 0.0
        %1689 = vmatpush2.msra.mxu0 0.0
        %1690 = vmatprep.subr.mxu0 0.0
        %1691 = vmatpush2.msra.mxu0 0.0
        %1692 = vmatprep.subr.mxu0 0.0
        %1693 = vmatpush2.msra.mxu0 0.0
        %1694 = vmatprep.subr.mxu0 0.0
        %1695 = vmatpush2.msra.mxu0 0.0
        %1696 = vmatprep.subr.mxu0 0.0
        %1697 = vmatpush2.msra.mxu0 0.0
        %1698 = vmatprep.subr.mxu0 0.0
        %1699 = vmatpush2.msra.mxu0 0.0
        %1700 = vmatprep.subr.mxu0 0.0
        %1701 = vmatpush2.msra.mxu0 0.0
        %1702 = vmatprep.mubr.f32.mxu0 0.0
        %1703 = vmatmul.mubr.f32.gmra.mxu0 %v445
        %v1704 = vpop.f32.mrf.mxu0
        %v1705 = vadd.f32 0.0, %v1704
        %v1706 = vpop.f32.mrf.mxu0
        %v1707 = vadd.f32 0.0, %v1706
        %1708 = vdwg.mxu0
        %v1709 = vsel %vm447, %v1705, 0.0
        %v1710 = vsel %vm447, %v1707, 0.0
        %v1711 = vadd.f32 %v1709, %v1710
        %1712 = vadd.xlane.f32.xlu0 %v1711
        %v1713 = vpop.xlane.xlu0 %1712
        %v1714 = vmul.f32 %v1713, 0.00390625
        %v1717 = vunpack.c.l.s4 839922192
        %v1718 = vunpack.c.0.s8 %v1717
        %v1719 = vlaneseq
        %v1720 = vshrl.u32 %v1719, 7
        %v1721 = vsub.s32 %v1718, %v1720
        %v1722 = vrot.slane %v1714, %v1721
        %v1724 = vsub.f32 %v1631, %v1722
        %v1725 = vmul.f32 %v1724, %v1724
        %v1727 = vcombine.high %v1725, %v1725
        %v1728 = vsel %vm447, %v1725, 0
        %v1730 = vsel %vm447, %v1727, 0
        %1732 = vmatprep.subr.mxu0 0.0
        %1733 = vmatpush1.msra.mxu0 0.0
        %1734 = vmatprep.subr.mxu0 0.0
        %1735 = vmatpush1.msra.mxu0 0.0
        %1736 = vmatprep.subr.mxu0 0.0
        %1737 = vmatpush1.msra.mxu0 0.0
        %1738 = vmatprep.subr.mxu0 0.0
        %1739 = vmatpush1.msra.mxu0 0.0
        %1740 = vmatprep.subr.mxu0 0.0
        %1741 = vmatpush1.msra.mxu0 0.0
        %1742 = vmatprep.subr.mxu0 0.0
        %1743 = vmatpush1.msra.mxu0 0.0
        %1744 = vmatprep.subr.mxu0 0.0
        %1745 = vmatpush1.msra.mxu0 0.0
        %1746 = vmatprep.subr.mxu0 0.0
        %1747 = vmatpush1.msra.mxu0 0.0
        %1748 = vmatprep.subr.mxu0 0.0
        %1749 = vmatpush1.msra.mxu0 0.0
        %1750 = vmatprep.subr.mxu0 0.0
        %1751 = vmatpush1.msra.mxu0 0.0
        %1752 = vmatprep.subr.mxu0 0.0
        %1753 = vmatpush1.msra.mxu0 0.0
        %1754 = vmatprep.subr.mxu0 0.0
        %1755 = vmatpush1.msra.mxu0 0.0
        %1756 = vmatprep.subr.mxu0 0.0
        %1757 = vmatpush1.msra.mxu0 0.0
        %1758 = vmatprep.subr.mxu0 0.0
        %1759 = vmatpush1.msra.mxu0 0.0
        %1760 = vmatprep.subr.mxu0 0.0
        %1761 = vmatpush1.msra.mxu0 0.0
        %1762 = vmatprep.subr.mxu0 %v1730
        %1763 = vmatpush1.msra.mxu0 %v1728
        %1764 = vmatprep.subr.mxu0 0.0
        %1765 = vmatpush2.msra.mxu0 0.0
        %1766 = vmatprep.subr.mxu0 0.0
        %1767 = vmatpush2.msra.mxu0 0.0
        %1768 = vmatprep.subr.mxu0 0.0
        %1769 = vmatpush2.msra.mxu0 0.0
        %1770 = vmatprep.subr.mxu0 0.0
        %1771 = vmatpush2.msra.mxu0 0.0
        %1772 = vmatprep.subr.mxu0 0.0
        %1773 = vmatpush2.msra.mxu0 0.0
        %1774 = vmatprep.subr.mxu0 0.0
        %1775 = vmatpush2.msra.mxu0 0.0
        %1776 = vmatprep.subr.mxu0 0.0
        %1777 = vmatpush2.msra.mxu0 0.0
        %1778 = vmatprep.subr.mxu0 0.0
        %1779 = vmatpush2.msra.mxu0 0.0
        %1780 = vmatprep.subr.mxu0 0.0
        %1781 = vmatpush2.msra.mxu0 0.0
        %1782 = vmatprep.subr.mxu0 0.0
        %1783 = vmatpush2.msra.mxu0 0.0
        %1784 = vmatprep.subr.mxu0 0.0
        %1785 = vmatpush2.msra.mxu0 0.0
        %1786 = vmatprep.subr.mxu0 0.0
        %1787 = vmatpush2.msra.mxu0 0.0
        %1788 = vmatprep.subr.mxu0 0.0
        %1789 = vmatpush2.msra.mxu0 0.0
        %1790 = vmatprep.subr.mxu0 0.0
        %1791 = vmatpush2.msra.mxu0 0.0
        %1792 = vmatprep.subr.mxu0 0.0
        %1793 = vmatpush2.msra.mxu0 0.0
        %1794 = vmatprep.subr.mxu0 0.0
        %1795 = vmatpush2.msra.mxu0 0.0
        %1796 = vmatprep.mubr.f32.mxu0 0.0
        %1797 = vmatmul.mubr.f32.gmra.mxu0 %v445
        %v1798 = vpop.f32.mrf.mxu0
        %v1799 = vadd.f32 0.0, %v1798
        %v1800 = vpop.f32.mrf.mxu0
        %v1801 = vadd.f32 0.0, %v1800
        %1802 = vdwg.mxu0
        %v1803 = vsel %vm447, %v1799, 0.0
        %v1804 = vsel %vm447, %v1801, 0.0
        %v1805 = vadd.f32 %v1803, %v1804
        %1806 = vadd.xlane.f32.xlu0 %v1805
        %v1807 = vpop.xlane.xlu0 %1806
        %v1808 = vmul.f32 %v1807, 0.00390625
        %v1809 = vadd.f32 %v1808, 1e-05
        %v1810 = vrsqrt.pop %v1809
        %v1811 = vld [vmem:[%s7] sm:$0xf]
        %v1812 = vmul.f32 %v1810, %v1811
        %1814 = vset.pattern.permute.xlu0 0
        %1815 = vperm.xlu0 %1814, %v1812
        %v1816 = vpop.permute.xlu0 %1815
        %v1818 = vunpack.c.l.s4 839922192
        %v1819 = vunpack.c.0.s8 %v1818
        %v1820 = vlaneseq
        %v1821 = vshrl.u32 %v1820, 7
        %v1822 = vsub.s32 %v1819, %v1821
        %v1823 = vrot.slane %v1816, %v1822
        %v1825 = vmul.f32 %v1724, %v1823
        %v1826 = vld [vmem:[%s8] sm:$0xf]
        %1828 = vset.pattern.permute.xlu0 0
        %1829 = vperm.xlu0 %1828, %v1826
        %v1830 = vpop.permute.xlu0 %1829
        %v1832 = vunpack.c.l.s4 839922192
        %v1833 = vunpack.c.0.s8 %v1832
        %v1834 = vlaneseq
        %v1835 = vshrl.u32 %v1834, 7
        %v1836 = vsub.s32 %v1833, %v1835
        %v1837 = vrot.slane %v1830, %v1836
        %v1839 = vadd.f32 %v1825, %v1837
        %v1840 = vmax.f32 %v1839, 0.0
        %v1841 = vld [vmem:[%s10] sm:$0xff]
        %v1843 = vcombine.high %v1840, %v1840
        %1845 = vrot.lane.b32.xlu0 %v1840, 17
        %v1846 = vpop.permute.xlu0 %1845
        %1847 = vrot.lane.b32.xlu0 %v1843, 17
        %v1848 = vpop.permute.xlu0 %1847
        %v1849 = vsel %vm665, %v1846, %v1848
        %v1850 = vsel %vm665, %v1848, %v1846
        %v1851 = vmul.f32 %v1850, %v673
        %v1852 = vmul.f32 %v1849, %v677
        %v1853 = vld [vmem:[%s9] sm:$0xf]
        %v1855 = vsel %vm443, %v1853, 0
        %v1858 = vsel %vm447, %v1851, 0
        %v1861 = vsel %vm447, %v1852, 0
        %1863 = vmatprep.subr.mxu0 0.0
        %1864 = vmatpush1.msra.mxu0 0.0
        %1865 = vmatprep.subr.mxu0 0.0
        %1866 = vmatpush1.msra.mxu0 0.0
        %1867 = vmatprep.subr.mxu0 0.0
        %1868 = vmatpush1.msra.mxu0 0.0
        %1869 = vmatprep.subr.mxu0 0.0
        %1870 = vmatpush1.msra.mxu0 0.0
        %1871 = vmatprep.subr.mxu0 0.0
        %1872 = vmatpush1.msra.mxu0 0.0
        %1873 = vmatprep.subr.mxu0 0.0
        %1874 = vmatpush1.msra.mxu0 0.0
        %1875 = vmatprep.subr.mxu0 0.0
        %1876 = vmatpush1.msra.mxu0 0.0
        %1877 = vmatprep.subr.mxu0 0.0
        %1878 = vmatpush1.msra.mxu0 0.0
        %1879 = vmatprep.subr.mxu0 0.0
        %1880 = vmatpush1.msra.mxu0 0.0
        %1881 = vmatprep.subr.mxu0 0.0
        %1882 = vmatpush1.msra.mxu0 0.0
        %1883 = vmatprep.subr.mxu0 0.0
        %1884 = vmatpush1.msra.mxu0 0.0
        %1885 = vmatprep.subr.mxu0 0.0
        %1886 = vmatpush1.msra.mxu0 0.0
        %1887 = vmatprep.subr.mxu0 0.0
        %1888 = vmatpush1.msra.mxu0 0.0
        %1889 = vmatprep.subr.mxu0 0.0
        %1890 = vmatpush1.msra.mxu0 0.0
        %1891 = vmatprep.subr.mxu0 0.0
        %1892 = vmatpush1.msra.mxu0 0.0
        %1893 = vmatprep.subr.mxu0 %v1861
        %1894 = vmatpush1.msra.mxu0 %v1858
        %1895 = vmatprep.subr.mxu0 0.0
        %1896 = vmatpush2.msra.mxu0 0.0
        %1897 = vmatprep.subr.mxu0 0.0
        %1898 = vmatpush2.msra.mxu0 0.0
        %1899 = vmatprep.subr.mxu0 0.0
        %1900 = vmatpush2.msra.mxu0 0.0
        %1901 = vmatprep.subr.mxu0 0.0
        %1902 = vmatpush2.msra.mxu0 0.0
        %1903 = vmatprep.subr.mxu0 0.0
        %1904 = vmatpush2.msra.mxu0 0.0
        %1905 = vmatprep.subr.mxu0 0.0
        %1906 = vmatpush2.msra.mxu0 0.0
        %1907 = vmatprep.subr.mxu0 0.0
        %1908 = vmatpush2.msra.mxu0 0.0
        %1909 = vmatprep.subr.mxu0 0.0
        %1910 = vmatpush2.msra.mxu0 0.0
        %1911 = vmatprep.subr.mxu0 0.0
        %1912 = vmatpush2.msra.mxu0 0.0
        %1913 = vmatprep.subr.mxu0 0.0
        %1914 = vmatpush2.msra.mxu0 0.0
        %1915 = vmatprep.subr.mxu0 0.0
        %1916 = vmatpush2.msra.mxu0 0.0
        %1917 = vmatprep.subr.mxu0 0.0
        %1918 = vmatpush2.msra.mxu0 0.0
        %1919 = vmatprep.subr.mxu0 0.0
        %1920 = vmatpush2.msra.mxu0 0.0
        %1921 = vmatprep.subr.mxu0 0.0
        %1922 = vmatpush2.msra.mxu0 0.0
        %1923 = vmatprep.subr.mxu0 0.0
        %1924 = vmatpush2.msra.mxu0 0.0
        %1925 = vmatprep.subr.mxu0 0.0
        %1926 = vmatpush2.msra.mxu0 0.0
        %1927 = vmatprep.mubr.f32.mxu0 0.0
        %1928 = vmatmul.mubr.f32.gmra.mxu0 %v1855
        %v1929 = vpop.f32.mrf.mxu0
        %v1930 = vadd.f32 0.0, %v1929
        %v1931 = vpop.f32.mrf.mxu0
        %v1932 = vadd.f32 0.0, %v1931
        %1933 = vdwg.mxu0
        %v1936 = vcombine.low %v1930, %v1932
        %v1938 = vadd.f32 %v1841, %v1936
        %1939 = vrot.lane.b32.xlu0 %v1840, 16
        %v1940 = vpop.permute.xlu0 %1939
        %1941 = vrot.lane.b32.xlu0 %v1843, 16
        %v1942 = vpop.permute.xlu0 %1941
        %v1943 = vsel %vm772, %v1940, %v1942
        %v1944 = vsel %vm772, %v1942, %v1940
        %v1945 = vmul.f32 %v1944, %v781
        %v1946 = vmul.f32 %v1943, %v785
        %s1947 = scalar_lea.vmem %s9, 4
        %v1948 = vld [vmem:[%s1947] sm:$0xf]
        %v1950 = vsel %vm443, %v1948, 0
        %v1953 = vsel %vm447, %v1945, 0
        %v1956 = vsel %vm447, %v1946, 0
        %1958 = vmatprep.subr.mxu0 0.0
        %1959 = vmatpush1.msra.mxu0 0.0
        %1960 = vmatprep.subr.mxu0 0.0
        %1961 = vmatpush1.msra.mxu0 0.0
        %1962 = vmatprep.subr.mxu0 0.0
        %1963 = vmatpush1.msra.mxu0 0.0
        %1964 = vmatprep.subr.mxu0 0.0
        %1965 = vmatpush1.msra.mxu0 0.0
        %1966 = vmatprep.subr.mxu0 0.0
        %1967 = vmatpush1.msra.mxu0 0.0
        %1968 = vmatprep.subr.mxu0 0.0
        %1969 = vmatpush1.msra.mxu0 0.0
        %1970 = vmatprep.subr.mxu0 0.0
        %1971 = vmatpush1.msra.mxu0 0.0
        %1972 = vmatprep.subr.mxu0 0.0
        %1973 = vmatpush1.msra.mxu0 0.0
        %1974 = vmatprep.subr.mxu0 0.0
        %1975 = vmatpush1.msra.mxu0 0.0
        %1976 = vmatprep.subr.mxu0 0.0
        %1977 = vmatpush1.msra.mxu0 0.0
        %1978 = vmatprep.subr.mxu0 0.0
        %1979 = vmatpush1.msra.mxu0 0.0
        %1980 = vmatprep.subr.mxu0 0.0
        %1981 = vmatpush1.msra.mxu0 0.0
        %1982 = vmatprep.subr.mxu0 0.0
        %1983 = vmatpush1.msra.mxu0 0.0
        %1984 = vmatprep.subr.mxu0 0.0
        %1985 = vmatpush1.msra.mxu0 0.0
        %1986 = vmatprep.subr.mxu0 0.0
        %1987 = vmatpush1.msra.mxu0 0.0
        %1988 = vmatprep.subr.mxu0 %v1956
        %1989 = vmatpush1.msra.mxu0 %v1953
        %1990 = vmatprep.subr.mxu0 0.0
        %1991 = vmatpush2.msra.mxu0 0.0
        %1992 = vmatprep.subr.mxu0 0.0
        %1993 = vmatpush2.msra.mxu0 0.0
        %1994 = vmatprep.subr.mxu0 0.0
        %1995 = vmatpush2.msra.mxu0 0.0
        %1996 = vmatprep.subr.mxu0 0.0
        %1997 = vmatpush2.msra.mxu0 0.0
        %1998 = vmatprep.subr.mxu0 0.0
        %1999 = vmatpush2.msra.mxu0 0.0
        %2000 = vmatprep.subr.mxu0 0.0
        %2001 = vmatpush2.msra.mxu0 0.0
        %2002 = vmatprep.subr.mxu0 0.0
        %2003 = vmatpush2.msra.mxu0 0.0
        %2004 = vmatprep.subr.mxu0 0.0
        %2005 = vmatpush2.msra.mxu0 0.0
        %2006 = vmatprep.subr.mxu0 0.0
        %2007 = vmatpush2.msra.mxu0 0.0
        %2008 = vmatprep.subr.mxu0 0.0
        %2009 = vmatpush2.msra.mxu0 0.0
        %2010 = vmatprep.subr.mxu0 0.0
        %2011 = vmatpush2.msra.mxu0 0.0
        %2012 = vmatprep.subr.mxu0 0.0
        %2013 = vmatpush2.msra.mxu0 0.0
        %2014 = vmatprep.subr.mxu0 0.0
        %2015 = vmatpush2.msra.mxu0 0.0
        %2016 = vmatprep.subr.mxu0 0.0
        %2017 = vmatpush2.msra.mxu0 0.0
        %2018 = vmatprep.subr.mxu0 0.0
        %2019 = vmatpush2.msra.mxu0 0.0
        %2020 = vmatprep.subr.mxu0 0.0
        %2021 = vmatpush2.msra.mxu0 0.0
        %2022 = vmatprep.mubr.f32.mxu0 0.0
        %2023 = vmatmul.mubr.f32.gmra.mxu0 %v1950
        %v2024 = vpop.f32.mrf.mxu0
        %v2025 = vadd.f32 0.0, %v2024
        %v2026 = vpop.f32.mrf.mxu0
        %v2027 = vadd.f32 0.0, %v2026
        %2028 = vdwg.mxu0
        %v2031 = vcombine.low %v2025, %v2027
        %v2033 = vadd.f32 %v1938, %v2031
        %2034 = vrot.lane.b32.xlu0 %v1840, 15
        %v2035 = vpop.permute.xlu0 %2034
        %2036 = vrot.lane.b32.xlu0 %v1843, 15
        %v2037 = vpop.permute.xlu0 %2036
        %v2038 = vsel %vm881, %v2035, %v2037
        %v2039 = vsel %vm881, %v2037, %v2035
        %v2040 = vmul.f32 %v2039, %v890
        %v2041 = vmul.f32 %v2038, %v894
        %s2042 = scalar_lea.vmem %s9, 8
        %v2043 = vld [vmem:[%s2042] sm:$0xf]
        %v2045 = vsel %vm443, %v2043, 0
        %v2048 = vsel %vm447, %v2040, 0
        %v2051 = vsel %vm447, %v2041, 0
        %2053 = vmatprep.subr.mxu0 0.0
        %2054 = vmatpush1.msra.mxu0 0.0
        %2055 = vmatprep.subr.mxu0 0.0
        %2056 = vmatpush1.msra.mxu0 0.0
        %2057 = vmatprep.subr.mxu0 0.0
        %2058 = vmatpush1.msra.mxu0 0.0
        %2059 = vmatprep.subr.mxu0 0.0
        %2060 = vmatpush1.msra.mxu0 0.0
        %2061 = vmatprep.subr.mxu0 0.0
        %2062 = vmatpush1.msra.mxu0 0.0
        %2063 = vmatprep.subr.mxu0 0.0
        %2064 = vmatpush1.msra.mxu0 0.0
        %2065 = vmatprep.subr.mxu0 0.0
        %2066 = vmatpush1.msra.mxu0 0.0
        %2067 = vmatprep.subr.mxu0 0.0
        %2068 = vmatpush1.msra.mxu0 0.0
        %2069 = vmatprep.subr.mxu0 0.0
        %2070 = vmatpush1.msra.mxu0 0.0
        %2071 = vmatprep.subr.mxu0 0.0
        %2072 = vmatpush1.msra.mxu0 0.0
        %2073 = vmatprep.subr.mxu0 0.0
        %2074 = vmatpush1.msra.mxu0 0.0
        %2075 = vmatprep.subr.mxu0 0.0
        %2076 = vmatpush1.msra.mxu0 0.0
        %2077 = vmatprep.subr.mxu0 0.0
        %2078 = vmatpush1.msra.mxu0 0.0
        %2079 = vmatprep.subr.mxu0 0.0
        %2080 = vmatpush1.msra.mxu0 0.0
        %2081 = vmatprep.subr.mxu0 0.0
        %2082 = vmatpush1.msra.mxu0 0.0
        %2083 = vmatprep.subr.mxu0 %v2051
        %2084 = vmatpush1.msra.mxu0 %v2048
        %2085 = vmatprep.subr.mxu0 0.0
        %2086 = vmatpush2.msra.mxu0 0.0
        %2087 = vmatprep.subr.mxu0 0.0
        %2088 = vmatpush2.msra.mxu0 0.0
        %2089 = vmatprep.subr.mxu0 0.0
        %2090 = vmatpush2.msra.mxu0 0.0
        %2091 = vmatprep.subr.mxu0 0.0
        %2092 = vmatpush2.msra.mxu0 0.0
        %2093 = vmatprep.subr.mxu0 0.0
        %2094 = vmatpush2.msra.mxu0 0.0
        %2095 = vmatprep.subr.mxu0 0.0
        %2096 = vmatpush2.msra.mxu0 0.0
        %2097 = vmatprep.subr.mxu0 0.0
        %2098 = vmatpush2.msra.mxu0 0.0
        %2099 = vmatprep.subr.mxu0 0.0
        %2100 = vmatpush2.msra.mxu0 0.0
        %2101 = vmatprep.subr.mxu0 0.0
        %2102 = vmatpush2.msra.mxu0 0.0
        %2103 = vmatprep.subr.mxu0 0.0
        %2104 = vmatpush2.msra.mxu0 0.0
        %2105 = vmatprep.subr.mxu0 0.0
        %2106 = vmatpush2.msra.mxu0 0.0
        %2107 = vmatprep.subr.mxu0 0.0
        %2108 = vmatpush2.msra.mxu0 0.0
        %2109 = vmatprep.subr.mxu0 0.0
        %2110 = vmatpush2.msra.mxu0 0.0
        %2111 = vmatprep.subr.mxu0 0.0
        %2112 = vmatpush2.msra.mxu0 0.0
        %2113 = vmatprep.subr.mxu0 0.0
        %2114 = vmatpush2.msra.mxu0 0.0
        %2115 = vmatprep.subr.mxu0 0.0
        %2116 = vmatpush2.msra.mxu0 0.0
        %2117 = vmatprep.mubr.f32.mxu0 0.0
        %2118 = vmatmul.mubr.f32.gmra.mxu0 %v2045
        %v2119 = vpop.f32.mrf.mxu0
        %v2120 = vadd.f32 0.0, %v2119
        %v2121 = vpop.f32.mrf.mxu0
        %v2122 = vadd.f32 0.0, %v2121
        %2123 = vdwg.mxu0
        %v2126 = vcombine.low %v2120, %v2122
        %v2128 = vadd.f32 %v2033, %v2126
        %2129 = vrot.lane.b32.xlu0 %v1840, 1
        %v2130 = vpop.permute.xlu0 %2129
        %2131 = vrot.lane.b32.xlu0 %v1843, 1
        %v2132 = vpop.permute.xlu0 %2131
        %v2133 = vsel %vm990, %v2130, %v2132
        %v2134 = vsel %vm990, %v2132, %v2130
        %v2135 = vmul.f32 %v2134, %v999
        %v2136 = vmul.f32 %v2133, %v1003
        %s2137 = scalar_lea.vmem %s9, 12
        %v2138 = vld [vmem:[%s2137] sm:$0xf]
        %v2140 = vsel %vm443, %v2138, 0
        %v2143 = vsel %vm447, %v2135, 0
        %v2146 = vsel %vm447, %v2136, 0
        %2148 = vmatprep.subr.mxu0 0.0
        %2149 = vmatpush1.msra.mxu0 0.0
        %2150 = vmatprep.subr.mxu0 0.0
        %2151 = vmatpush1.msra.mxu0 0.0
        %2152 = vmatprep.subr.mxu0 0.0
        %2153 = vmatpush1.msra.mxu0 0.0
        %2154 = vmatprep.subr.mxu0 0.0
        %2155 = vmatpush1.msra.mxu0 0.0
        %2156 = vmatprep.subr.mxu0 0.0
        %2157 = vmatpush1.msra.mxu0 0.0
        %2158 = vmatprep.subr.mxu0 0.0
        %2159 = vmatpush1.msra.mxu0 0.0
        %2160 = vmatprep.subr.mxu0 0.0
        %2161 = vmatpush1.msra.mxu0 0.0
        %2162 = vmatprep.subr.mxu0 0.0
        %2163 = vmatpush1.msra.mxu0 0.0
        %2164 = vmatprep.subr.mxu0 0.0
        %2165 = vmatpush1.msra.mxu0 0.0
        %2166 = vmatprep.subr.mxu0 0.0
        %2167 = vmatpush1.msra.mxu0 0.0
        %2168 = vmatprep.subr.mxu0 0.0
        %2169 = vmatpush1.msra.mxu0 0.0
        %2170 = vmatprep.subr.mxu0 0.0
        %2171 = vmatpush1.msra.mxu0 0.0
        %2172 = vmatprep.subr.mxu0 0.0
        %2173 = vmatpush1.msra.mxu0 0.0
        %2174 = vmatprep.subr.mxu0 0.0
        %2175 = vmatpush1.msra.mxu0 0.0
        %2176 = vmatprep.subr.mxu0 0.0
        %2177 = vmatpush1.msra.mxu0 0.0
        %2178 = vmatprep.subr.mxu0 %v2146
        %2179 = vmatpush1.msra.mxu0 %v2143
        %2180 = vmatprep.subr.mxu0 0.0
        %2181 = vmatpush2.msra.mxu0 0.0
        %2182 = vmatprep.subr.mxu0 0.0
        %2183 = vmatpush2.msra.mxu0 0.0
        %2184 = vmatprep.subr.mxu0 0.0
        %2185 = vmatpush2.msra.mxu0 0.0
        %2186 = vmatprep.subr.mxu0 0.0
        %2187 = vmatpush2.msra.mxu0 0.0
        %2188 = vmatprep.subr.mxu0 0.0
        %2189 = vmatpush2.msra.mxu0 0.0
        %2190 = vmatprep.subr.mxu0 0.0
        %2191 = vmatpush2.msra.mxu0 0.0
        %2192 = vmatprep.subr.mxu0 0.0
        %2193 = vmatpush2.msra.mxu0 0.0
        %2194 = vmatprep.subr.mxu0 0.0
        %2195 = vmatpush2.msra.mxu0 0.0
        %2196 = vmatprep.subr.mxu0 0.0
        %2197 = vmatpush2.msra.mxu0 0.0
        %2198 = vmatprep.subr.mxu0 0.0
        %2199 = vmatpush2.msra.mxu0 0.0
        %2200 = vmatprep.subr.mxu0 0.0
        %2201 = vmatpush2.msra.mxu0 0.0
        %2202 = vmatprep.subr.mxu0 0.0
        %2203 = vmatpush2.msra.mxu0 0.0
        %2204 = vmatprep.subr.mxu0 0.0
        %2205 = vmatpush2.msra.mxu0 0.0
        %2206 = vmatprep.subr.mxu0 0.0
        %2207 = vmatpush2.msra.mxu0 0.0
        %2208 = vmatprep.subr.mxu0 0.0
        %2209 = vmatpush2.msra.mxu0 0.0
        %2210 = vmatprep.subr.mxu0 0.0
        %2211 = vmatpush2.msra.mxu0 0.0
        %2212 = vmatprep.mubr.f32.mxu0 0.0
        %2213 = vmatmul.mubr.f32.gmra.mxu0 %v2140
        %v2214 = vpop.f32.mrf.mxu0
        %v2215 = vadd.f32 0.0, %v2214
        %v2216 = vpop.f32.mrf.mxu0
        %v2217 = vadd.f32 0.0, %v2216
        %2218 = vdwg.mxu0
        %v2221 = vcombine.low %v2215, %v2217
        %v2223 = vadd.f32 %v2128, %v2221
        %v2224 = vmul.f32 %v1840, %v1106
        %s2225 = scalar_lea.vmem %s9, 16
        %v2226 = vld [vmem:[%s2225] sm:$0xf]
        %v2228 = vcombine.high %v2224, %v2224
        %v2230 = vsel %vm443, %v2226, 0
        %v2232 = vsel %vm447, %v2224, 0
        %v2234 = vsel %vm447, %v2228, 0
        %2236 = vmatprep.subr.mxu0 0.0
        %2237 = vmatpush1.msra.mxu0 0.0
        %2238 = vmatprep.subr.mxu0 0.0
        %2239 = vmatpush1.msra.mxu0 0.0
        %2240 = vmatprep.subr.mxu0 0.0
        %2241 = vmatpush1.msra.mxu0 0.0
        %2242 = vmatprep.subr.mxu0 0.0
        %2243 = vmatpush1.msra.mxu0 0.0
        %2244 = vmatprep.subr.mxu0 0.0
        %2245 = vmatpush1.msra.mxu0 0.0
        %2246 = vmatprep.subr.mxu0 0.0
        %2247 = vmatpush1.msra.mxu0 0.0
        %2248 = vmatprep.subr.mxu0 0.0
        %2249 = vmatpush1.msra.mxu0 0.0
        %2250 = vmatprep.subr.mxu0 0.0
        %2251 = vmatpush1.msra.mxu0 0.0
        %2252 = vmatprep.subr.mxu0 0.0
        %2253 = vmatpush1.msra.mxu0 0.0
        %2254 = vmatprep.subr.mxu0 0.0
        %2255 = vmatpush1.msra.mxu0 0.0
        %2256 = vmatprep.subr.mxu0 0.0
        %2257 = vmatpush1.msra.mxu0 0.0
        %2258 = vmatprep.subr.mxu0 0.0
        %2259 = vmatpush1.msra.mxu0 0.0
        %2260 = vmatprep.subr.mxu0 0.0
        %2261 = vmatpush1.msra.mxu0 0.0
        %2262 = vmatprep.subr.mxu0 0.0
        %2263 = vmatpush1.msra.mxu0 0.0
        %2264 = vmatprep.subr.mxu0 0.0
        %2265 = vmatpush1.msra.mxu0 0.0
        %2266 = vmatprep.subr.mxu0 %v2234
        %2267 = vmatpush1.msra.mxu0 %v2232
        %2268 = vmatprep.subr.mxu0 0.0
        %2269 = vmatpush2.msra.mxu0 0.0
        %2270 = vmatprep.subr.mxu0 0.0
        %2271 = vmatpush2.msra.mxu0 0.0
        %2272 = vmatprep.subr.mxu0 0.0
        %2273 = vmatpush2.msra.mxu0 0.0
        %2274 = vmatprep.subr.mxu0 0.0
        %2275 = vmatpush2.msra.mxu0 0.0
        %2276 = vmatprep.subr.mxu0 0.0
        %2277 = vmatpush2.msra.mxu0 0.0
        %2278 = vmatprep.subr.mxu0 0.0
        %2279 = vmatpush2.msra.mxu0 0.0
        %2280 = vmatprep.subr.mxu0 0.0
        %2281 = vmatpush2.msra.mxu0 0.0
        %2282 = vmatprep.subr.mxu0 0.0
        %2283 = vmatpush2.msra.mxu0 0.0
        %2284 = vmatprep.subr.mxu0 0.0
        %2285 = vmatpush2.msra.mxu0 0.0
        %2286 = vmatprep.subr.mxu0 0.0
        %2287 = vmatpush2.msra.mxu0 0.0
        %2288 = vmatprep.subr.mxu0 0.0
        %2289 = vmatpush2.msra.mxu0 0.0
        %2290 = vmatprep.subr.mxu0 0.0
        %2291 = vmatpush2.msra.mxu0 0.0
        %2292 = vmatprep.subr.mxu0 0.0
        %2293 = vmatpush2.msra.mxu0 0.0
        %2294 = vmatprep.subr.mxu0 0.0
        %2295 = vmatpush2.msra.mxu0 0.0
        %2296 = vmatprep.subr.mxu0 0.0
        %2297 = vmatpush2.msra.mxu0 0.0
        %2298 = vmatprep.subr.mxu0 0.0
        %2299 = vmatpush2.msra.mxu0 0.0
        %2300 = vmatprep.mubr.f32.mxu0 0.0
        %2301 = vmatmul.mubr.f32.gmra.mxu0 %v2230
        %v2302 = vpop.f32.mrf.mxu0
        %v2303 = vadd.f32 0.0, %v2302
        %v2304 = vpop.f32.mrf.mxu0
        %v2305 = vadd.f32 0.0, %v2304
        %2306 = vdwg.mxu0
        %v2309 = vcombine.low %v2303, %v2305
        %v2311 = vadd.f32 %v2223, %v2309
        %2312 = vrot.lane.b32.xlu0 %v1840, 127
        %v2313 = vpop.permute.xlu0 %2312
        %2314 = vrot.lane.b32.xlu0 %v1843, 127
        %v2315 = vpop.permute.xlu0 %2314
        %v2316 = vsel %vm1200, %v2313, %v2315
        %v2317 = vsel %vm1200, %v2315, %v2313
        %v2318 = vmul.f32 %v2316, %v1209
        %v2319 = vmul.f32 %v2317, %v1213
        %s2320 = scalar_lea.vmem %s9, 20
        %v2321 = vld [vmem:[%s2320] sm:$0xf]
        %v2323 = vsel %vm443, %v2321, 0
        %v2326 = vsel %vm447, %v2318, 0
        %v2329 = vsel %vm447, %v2319, 0
        %2331 = vmatprep.subr.mxu0 0.0
        %2332 = vmatpush1.msra.mxu0 0.0
        %2333 = vmatprep.subr.mxu0 0.0
        %2334 = vmatpush1.msra.mxu0 0.0
        %2335 = vmatprep.subr.mxu0 0.0
        %2336 = vmatpush1.msra.mxu0 0.0
        %2337 = vmatprep.subr.mxu0 0.0
        %2338 = vmatpush1.msra.mxu0 0.0
        %2339 = vmatprep.subr.mxu0 0.0
        %2340 = vmatpush1.msra.mxu0 0.0
        %2341 = vmatprep.subr.mxu0 0.0
        %2342 = vmatpush1.msra.mxu0 0.0
        %2343 = vmatprep.subr.mxu0 0.0
        %2344 = vmatpush1.msra.mxu0 0.0
        %2345 = vmatprep.subr.mxu0 0.0
        %2346 = vmatpush1.msra.mxu0 0.0
        %2347 = vmatprep.subr.mxu0 0.0
        %2348 = vmatpush1.msra.mxu0 0.0
        %2349 = vmatprep.subr.mxu0 0.0
        %2350 = vmatpush1.msra.mxu0 0.0
        %2351 = vmatprep.subr.mxu0 0.0
        %2352 = vmatpush1.msra.mxu0 0.0
        %2353 = vmatprep.subr.mxu0 0.0
        %2354 = vmatpush1.msra.mxu0 0.0
        %2355 = vmatprep.subr.mxu0 0.0
        %2356 = vmatpush1.msra.mxu0 0.0
        %2357 = vmatprep.subr.mxu0 0.0
        %2358 = vmatpush1.msra.mxu0 0.0
        %2359 = vmatprep.subr.mxu0 0.0
        %2360 = vmatpush1.msra.mxu0 0.0
        %2361 = vmatprep.subr.mxu0 %v2329
        %2362 = vmatpush1.msra.mxu0 %v2326
        %2363 = vmatprep.subr.mxu0 0.0
        %2364 = vmatpush2.msra.mxu0 0.0
        %2365 = vmatprep.subr.mxu0 0.0
        %2366 = vmatpush2.msra.mxu0 0.0
        %2367 = vmatprep.subr.mxu0 0.0
        %2368 = vmatpush2.msra.mxu0 0.0
        %2369 = vmatprep.subr.mxu0 0.0
        %2370 = vmatpush2.msra.mxu0 0.0
        %2371 = vmatprep.subr.mxu0 0.0
        %2372 = vmatpush2.msra.mxu0 0.0
        %2373 = vmatprep.subr.mxu0 0.0
        %2374 = vmatpush2.msra.mxu0 0.0
        %2375 = vmatprep.subr.mxu0 0.0
        %2376 = vmatpush2.msra.mxu0 0.0
        %2377 = vmatprep.subr.mxu0 0.0
        %2378 = vmatpush2.msra.mxu0 0.0
        %2379 = vmatprep.subr.mxu0 0.0
        %2380 = vmatpush2.msra.mxu0 0.0
        %2381 = vmatprep.subr.mxu0 0.0
        %2382 = vmatpush2.msra.mxu0 0.0
        %2383 = vmatprep.subr.mxu0 0.0
        %2384 = vmatpush2.msra.mxu0 0.0
        %2385 = vmatprep.subr.mxu0 0.0
        %2386 = vmatpush2.msra.mxu0 0.0
        %2387 = vmatprep.subr.mxu0 0.0
        %2388 = vmatpush2.msra.mxu0 0.0
        %2389 = vmatprep.subr.mxu0 0.0
        %2390 = vmatpush2.msra.mxu0 0.0
        %2391 = vmatprep.subr.mxu0 0.0
        %2392 = vmatpush2.msra.mxu0 0.0
        %2393 = vmatprep.subr.mxu0 0.0
        %2394 = vmatpush2.msra.mxu0 0.0
        %2395 = vmatprep.mubr.f32.mxu0 0.0
        %2396 = vmatmul.mubr.f32.gmra.mxu0 %v2323
        %v2397 = vpop.f32.mrf.mxu0
        %v2398 = vadd.f32 0.0, %v2397
        %v2399 = vpop.f32.mrf.mxu0
        %v2400 = vadd.f32 0.0, %v2399
        %2401 = vdwg.mxu0
        %v2404 = vcombine.low %v2398, %v2400
        %v2406 = vadd.f32 %v2311, %v2404
        %2407 = vrot.lane.b32.xlu0 %v1840, 113
        %v2408 = vpop.permute.xlu0 %2407
        %2409 = vrot.lane.b32.xlu0 %v1843, 113
        %v2410 = vpop.permute.xlu0 %2409
        %v2411 = vsel %vm1309, %v2408, %v2410
        %v2412 = vsel %vm1309, %v2410, %v2408
        %v2413 = vmul.f32 %v2411, %v1318
        %v2414 = vmul.f32 %v2412, %v1322
        %s2415 = scalar_lea.vmem %s9, 24
        %v2416 = vld [vmem:[%s2415] sm:$0xf]
        %v2418 = vsel %vm443, %v2416, 0
        %v2421 = vsel %vm447, %v2413, 0
        %v2424 = vsel %vm447, %v2414, 0
        %2426 = vmatprep.subr.mxu0 0.0
        %2427 = vmatpush1.msra.mxu0 0.0
        %2428 = vmatprep.subr.mxu0 0.0
        %2429 = vmatpush1.msra.mxu0 0.0
        %2430 = vmatprep.subr.mxu0 0.0
        %2431 = vmatpush1.msra.mxu0 0.0
        %2432 = vmatprep.subr.mxu0 0.0
        %2433 = vmatpush1.msra.mxu0 0.0
        %2434 = vmatprep.subr.mxu0 0.0
        %2435 = vmatpush1.msra.mxu0 0.0
        %2436 = vmatprep.subr.mxu0 0.0
        %2437 = vmatpush1.msra.mxu0 0.0
        %2438 = vmatprep.subr.mxu0 0.0
        %2439 = vmatpush1.msra.mxu0 0.0
        %2440 = vmatprep.subr.mxu0 0.0
        %2441 = vmatpush1.msra.mxu0 0.0
        %2442 = vmatprep.subr.mxu0 0.0
        %2443 = vmatpush1.msra.mxu0 0.0
        %2444 = vmatprep.subr.mxu0 0.0
        %2445 = vmatpush1.msra.mxu0 0.0
        %2446 = vmatprep.subr.mxu0 0.0
        %2447 = vmatpush1.msra.mxu0 0.0
        %2448 = vmatprep.subr.mxu0 0.0
        %2449 = vmatpush1.msra.mxu0 0.0
        %2450 = vmatprep.subr.mxu0 0.0
        %2451 = vmatpush1.msra.mxu0 0.0
        %2452 = vmatprep.subr.mxu0 0.0
        %2453 = vmatpush1.msra.mxu0 0.0
        %2454 = vmatprep.subr.mxu0 0.0
        %2455 = vmatpush1.msra.mxu0 0.0
        %2456 = vmatprep.subr.mxu0 %v2424
        %2457 = vmatpush1.msra.mxu0 %v2421
        %2458 = vmatprep.subr.mxu0 0.0
        %2459 = vmatpush2.msra.mxu0 0.0
        %2460 = vmatprep.subr.mxu0 0.0
        %2461 = vmatpush2.msra.mxu0 0.0
        %2462 = vmatprep.subr.mxu0 0.0
        %2463 = vmatpush2.msra.mxu0 0.0
        %2464 = vmatprep.subr.mxu0 0.0
        %2465 = vmatpush2.msra.mxu0 0.0
        %2466 = vmatprep.subr.mxu0 0.0
        %2467 = vmatpush2.msra.mxu0 0.0
        %2468 = vmatprep.subr.mxu0 0.0
        %2469 = vmatpush2.msra.mxu0 0.0
        %2470 = vmatprep.subr.mxu0 0.0
        %2471 = vmatpush2.msra.mxu0 0.0
        %2472 = vmatprep.subr.mxu0 0.0
        %2473 = vmatpush2.msra.mxu0 0.0
        %2474 = vmatprep.subr.mxu0 0.0
        %2475 = vmatpush2.msra.mxu0 0.0
        %2476 = vmatprep.subr.mxu0 0.0
        %2477 = vmatpush2.msra.mxu0 0.0
        %2478 = vmatprep.subr.mxu0 0.0
        %2479 = vmatpush2.msra.mxu0 0.0
        %2480 = vmatprep.subr.mxu0 0.0
        %2481 = vmatpush2.msra.mxu0 0.0
        %2482 = vmatprep.subr.mxu0 0.0
        %2483 = vmatpush2.msra.mxu0 0.0
        %2484 = vmatprep.subr.mxu0 0.0
        %2485 = vmatpush2.msra.mxu0 0.0
        %2486 = vmatprep.subr.mxu0 0.0
        %2487 = vmatpush2.msra.mxu0 0.0
        %2488 = vmatprep.subr.mxu0 0.0
        %2489 = vmatpush2.msra.mxu0 0.0
        %2490 = vmatprep.mubr.f32.mxu0 0.0
        %2491 = vmatmul.mubr.f32.gmra.mxu0 %v2418
        %v2492 = vpop.f32.mrf.mxu0
        %v2493 = vadd.f32 0.0, %v2492
        %v2494 = vpop.f32.mrf.mxu0
        %v2495 = vadd.f32 0.0, %v2494
        %2496 = vdwg.mxu0
        %v2499 = vcombine.low %v2493, %v2495
        %v2501 = vadd.f32 %v2406, %v2499
        %2502 = vrot.lane.b32.xlu0 %v1840, 112
        %v2503 = vpop.permute.xlu0 %2502
        %2504 = vrot.lane.b32.xlu0 %v1843, 112
        %v2505 = vpop.permute.xlu0 %2504
        %v2506 = vsel %vm1418, %v2503, %v2505
        %v2507 = vsel %vm1418, %v2505, %v2503
        %v2508 = vmul.f32 %v2506, %v1427
        %v2509 = vmul.f32 %v2507, %v1431
        %s2510 = scalar_lea.vmem %s9, 28
        %v2511 = vld [vmem:[%s2510] sm:$0xf]
        %v2513 = vsel %vm443, %v2511, 0
        %v2516 = vsel %vm447, %v2508, 0
        %v2519 = vsel %vm447, %v2509, 0
        %2521 = vmatprep.subr.mxu0 0.0
        %2522 = vmatpush1.msra.mxu0 0.0
        %2523 = vmatprep.subr.mxu0 0.0
        %2524 = vmatpush1.msra.mxu0 0.0
        %2525 = vmatprep.subr.mxu0 0.0
        %2526 = vmatpush1.msra.mxu0 0.0
        %2527 = vmatprep.subr.mxu0 0.0
        %2528 = vmatpush1.msra.mxu0 0.0
        %2529 = vmatprep.subr.mxu0 0.0
        %2530 = vmatpush1.msra.mxu0 0.0
        %2531 = vmatprep.subr.mxu0 0.0
        %2532 = vmatpush1.msra.mxu0 0.0
        %2533 = vmatprep.subr.mxu0 0.0
        %2534 = vmatpush1.msra.mxu0 0.0
        %2535 = vmatprep.subr.mxu0 0.0
        %2536 = vmatpush1.msra.mxu0 0.0
        %2537 = vmatprep.subr.mxu0 0.0
        %2538 = vmatpush1.msra.mxu0 0.0
        %2539 = vmatprep.subr.mxu0 0.0
        %2540 = vmatpush1.msra.mxu0 0.0
        %2541 = vmatprep.subr.mxu0 0.0
        %2542 = vmatpush1.msra.mxu0 0.0
        %2543 = vmatprep.subr.mxu0 0.0
        %2544 = vmatpush1.msra.mxu0 0.0
        %2545 = vmatprep.subr.mxu0 0.0
        %2546 = vmatpush1.msra.mxu0 0.0
        %2547 = vmatprep.subr.mxu0 0.0
        %2548 = vmatpush1.msra.mxu0 0.0
        %2549 = vmatprep.subr.mxu0 0.0
        %2550 = vmatpush1.msra.mxu0 0.0
        %2551 = vmatprep.subr.mxu0 %v2519
        %2552 = vmatpush1.msra.mxu0 %v2516
        %2553 = vmatprep.subr.mxu0 0.0
        %2554 = vmatpush2.msra.mxu0 0.0
        %2555 = vmatprep.subr.mxu0 0.0
        %2556 = vmatpush2.msra.mxu0 0.0
        %2557 = vmatprep.subr.mxu0 0.0
        %2558 = vmatpush2.msra.mxu0 0.0
        %2559 = vmatprep.subr.mxu0 0.0
        %2560 = vmatpush2.msra.mxu0 0.0
        %2561 = vmatprep.subr.mxu0 0.0
        %2562 = vmatpush2.msra.mxu0 0.0
        %2563 = vmatprep.subr.mxu0 0.0
        %2564 = vmatpush2.msra.mxu0 0.0
        %2565 = vmatprep.subr.mxu0 0.0
        %2566 = vmatpush2.msra.mxu0 0.0
        %2567 = vmatprep.subr.mxu0 0.0
        %2568 = vmatpush2.msra.mxu0 0.0
        %2569 = vmatprep.subr.mxu0 0.0
        %2570 = vmatpush2.msra.mxu0 0.0
        %2571 = vmatprep.subr.mxu0 0.0
        %2572 = vmatpush2.msra.mxu0 0.0
        %2573 = vmatprep.subr.mxu0 0.0
        %2574 = vmatpush2.msra.mxu0 0.0
        %2575 = vmatprep.subr.mxu0 0.0
        %2576 = vmatpush2.msra.mxu0 0.0
        %2577 = vmatprep.subr.mxu0 0.0
        %2578 = vmatpush2.msra.mxu0 0.0
        %2579 = vmatprep.subr.mxu0 0.0
        %2580 = vmatpush2.msra.mxu0 0.0
        %2581 = vmatprep.subr.mxu0 0.0
        %2582 = vmatpush2.msra.mxu0 0.0
        %2583 = vmatprep.subr.mxu0 0.0
        %2584 = vmatpush2.msra.mxu0 0.0
        %2585 = vmatprep.mubr.f32.mxu0 0.0
        %2586 = vmatmul.mubr.f32.gmra.mxu0 %v2513
        %v2587 = vpop.f32.mrf.mxu0
        %v2588 = vadd.f32 0.0, %v2587
        %v2589 = vpop.f32.mrf.mxu0
        %v2590 = vadd.f32 0.0, %v2589
        %2591 = vdwg.mxu0
        %v2594 = vcombine.low %v2588, %v2590
        %v2596 = vadd.f32 %v2501, %v2594
        %2597 = vrot.lane.b32.xlu0 %v1840, 111
        %v2598 = vpop.permute.xlu0 %2597
        %2599 = vrot.lane.b32.xlu0 %v1843, 111
        %v2600 = vpop.permute.xlu0 %2599
        %v2601 = vsel %vm1527, %v2598, %v2600
        %v2602 = vsel %vm1527, %v2600, %v2598
        %v2603 = vmul.f32 %v2601, %v1536
        %v2604 = vmul.f32 %v2602, %v1540
        %s2605 = scalar_lea.vmem %s9, 32
        %v2606 = vld [vmem:[%s2605] sm:$0xf]
        %v2608 = vsel %vm443, %v2606, 0
        %v2611 = vsel %vm447, %v2603, 0
        %v2614 = vsel %vm447, %v2604, 0
        %2616 = vmatprep.subr.mxu0 0.0
        %2617 = vmatpush1.msra.mxu0 0.0
        %2618 = vmatprep.subr.mxu0 0.0
        %2619 = vmatpush1.msra.mxu0 0.0
        %2620 = vmatprep.subr.mxu0 0.0
        %2621 = vmatpush1.msra.mxu0 0.0
        %2622 = vmatprep.subr.mxu0 0.0
        %2623 = vmatpush1.msra.mxu0 0.0
        %2624 = vmatprep.subr.mxu0 0.0
        %2625 = vmatpush1.msra.mxu0 0.0
        %2626 = vmatprep.subr.mxu0 0.0
        %2627 = vmatpush1.msra.mxu0 0.0
        %2628 = vmatprep.subr.mxu0 0.0
        %2629 = vmatpush1.msra.mxu0 0.0
        %2630 = vmatprep.subr.mxu0 0.0
        %2631 = vmatpush1.msra.mxu0 0.0
        %2632 = vmatprep.subr.mxu0 0.0
        %2633 = vmatpush1.msra.mxu0 0.0
        %2634 = vmatprep.subr.mxu0 0.0
        %2635 = vmatpush1.msra.mxu0 0.0
        %2636 = vmatprep.subr.mxu0 0.0
        %2637 = vmatpush1.msra.mxu0 0.0
        %2638 = vmatprep.subr.mxu0 0.0
        %2639 = vmatpush1.msra.mxu0 0.0
        %2640 = vmatprep.subr.mxu0 0.0
        %2641 = vmatpush1.msra.mxu0 0.0
        %2642 = vmatprep.subr.mxu0 0.0
        %2643 = vmatpush1.msra.mxu0 0.0
        %2644 = vmatprep.subr.mxu0 0.0
        %2645 = vmatpush1.msra.mxu0 0.0
        %2646 = vmatprep.subr.mxu0 %v2614
        %2647 = vmatpush1.msra.mxu0 %v2611
        %2648 = vmatprep.subr.mxu0 0.0
        %2649 = vmatpush2.msra.mxu0 0.0
        %2650 = vmatprep.subr.mxu0 0.0
        %2651 = vmatpush2.msra.mxu0 0.0
        %2652 = vmatprep.subr.mxu0 0.0
        %2653 = vmatpush2.msra.mxu0 0.0
        %2654 = vmatprep.subr.mxu0 0.0
        %2655 = vmatpush2.msra.mxu0 0.0
        %2656 = vmatprep.subr.mxu0 0.0
        %2657 = vmatpush2.msra.mxu0 0.0
        %2658 = vmatprep.subr.mxu0 0.0
        %2659 = vmatpush2.msra.mxu0 0.0
        %2660 = vmatprep.subr.mxu0 0.0
        %2661 = vmatpush2.msra.mxu0 0.0
        %2662 = vmatprep.subr.mxu0 0.0
        %2663 = vmatpush2.msra.mxu0 0.0
        %2664 = vmatprep.subr.mxu0 0.0
        %2665 = vmatpush2.msra.mxu0 0.0
        %2666 = vmatprep.subr.mxu0 0.0
        %2667 = vmatpush2.msra.mxu0 0.0
        %2668 = vmatprep.subr.mxu0 0.0
        %2669 = vmatpush2.msra.mxu0 0.0
        %2670 = vmatprep.subr.mxu0 0.0
        %2671 = vmatpush2.msra.mxu0 0.0
        %2672 = vmatprep.subr.mxu0 0.0
        %2673 = vmatpush2.msra.mxu0 0.0
        %2674 = vmatprep.subr.mxu0 0.0
        %2675 = vmatpush2.msra.mxu0 0.0
        %2676 = vmatprep.subr.mxu0 0.0
        %2677 = vmatpush2.msra.mxu0 0.0
        %2678 = vmatprep.subr.mxu0 0.0
        %2679 = vmatpush2.msra.mxu0 0.0
        %2680 = vmatprep.mubr.f32.mxu0 0.0
        %2681 = vmatmul.mubr.f32.gmra.mxu0 %v2608
        %v2682 = vpop.f32.mrf.mxu0
        %v2683 = vadd.f32 0.0, %v2682
        %v2684 = vpop.f32.mrf.mxu0
        %v2685 = vadd.f32 0.0, %v2684
        %2686 = vdwg.mxu0
        %v2689 = vcombine.low %v2683, %v2685
        %v2691 = vadd.f32 %v2596, %v2689
        %v2693 = vcombine.high %v2691, %v2691
        %v2694 = vsel %vm447, %v2691, 0
        %v2696 = vsel %vm447, %v2693, 0
        %2698 = vmatprep.subr.mxu0 0.0
        %2699 = vmatpush1.msra.mxu0 0.0
        %2700 = vmatprep.subr.mxu0 0.0
        %2701 = vmatpush1.msra.mxu0 0.0
        %2702 = vmatprep.subr.mxu0 0.0
        %2703 = vmatpush1.msra.mxu0 0.0
        %2704 = vmatprep.subr.mxu0 0.0
        %2705 = vmatpush1.msra.mxu0 0.0
        %2706 = vmatprep.subr.mxu0 0.0
        %2707 = vmatpush1.msra.mxu0 0.0
        %2708 = vmatprep.subr.mxu0 0.0
        %2709 = vmatpush1.msra.mxu0 0.0
        %2710 = vmatprep.subr.mxu0 0.0
        %2711 = vmatpush1.msra.mxu0 0.0
        %2712 = vmatprep.subr.mxu0 0.0
        %2713 = vmatpush1.msra.mxu0 0.0
        %2714 = vmatprep.subr.mxu0 0.0
        %2715 = vmatpush1.msra.mxu0 0.0
        %2716 = vmatprep.subr.mxu0 0.0
        %2717 = vmatpush1.msra.mxu0 0.0
        %2718 = vmatprep.subr.mxu0 0.0
        %2719 = vmatpush1.msra.mxu0 0.0
        %2720 = vmatprep.subr.mxu0 0.0
        %2721 = vmatpush1.msra.mxu0 0.0
        %2722 = vmatprep.subr.mxu0 0.0
        %2723 = vmatpush1.msra.mxu0 0.0
        %2724 = vmatprep.subr.mxu0 0.0
        %2725 = vmatpush1.msra.mxu0 0.0
        %2726 = vmatprep.subr.mxu0 0.0
        %2727 = vmatpush1.msra.mxu0 0.0
        %2728 = vmatprep.subr.mxu0 %v2696
        %2729 = vmatpush1.msra.mxu0 %v2694
        %2730 = vmatprep.subr.mxu0 0.0
        %2731 = vmatpush2.msra.mxu0 0.0
        %2732 = vmatprep.subr.mxu0 0.0
        %2733 = vmatpush2.msra.mxu0 0.0
        %2734 = vmatprep.subr.mxu0 0.0
        %2735 = vmatpush2.msra.mxu0 0.0
        %2736 = vmatprep.subr.mxu0 0.0
        %2737 = vmatpush2.msra.mxu0 0.0
        %2738 = vmatprep.subr.mxu0 0.0
        %2739 = vmatpush2.msra.mxu0 0.0
        %2740 = vmatprep.subr.mxu0 0.0
        %2741 = vmatpush2.msra.mxu0 0.0
        %2742 = vmatprep.subr.mxu0 0.0
        %2743 = vmatpush2.msra.mxu0 0.0
        %2744 = vmatprep.subr.mxu0 0.0
        %2745 = vmatpush2.msra.mxu0 0.0
        %2746 = vmatprep.subr.mxu0 0.0
        %2747 = vmatpush2.msra.mxu0 0.0
        %2748 = vmatprep.subr.mxu0 0.0
        %2749 = vmatpush2.msra.mxu0 0.0
        %2750 = vmatprep.subr.mxu0 0.0
        %2751 = vmatpush2.msra.mxu0 0.0
        %2752 = vmatprep.subr.mxu0 0.0
        %2753 = vmatpush2.msra.mxu0 0.0
        %2754 = vmatprep.subr.mxu0 0.0
        %2755 = vmatpush2.msra.mxu0 0.0
        %2756 = vmatprep.subr.mxu0 0.0
        %2757 = vmatpush2.msra.mxu0 0.0
        %2758 = vmatprep.subr.mxu0 0.0
        %2759 = vmatpush2.msra.mxu0 0.0
        %2760 = vmatprep.subr.mxu0 0.0
        %2761 = vmatpush2.msra.mxu0 0.0
        %2762 = vmatprep.mubr.f32.mxu0 0.0
        %2763 = vmatmul.mubr.f32.gmra.mxu0 %v445
        %v2764 = vpop.f32.mrf.mxu0
        %v2765 = vadd.f32 0.0, %v2764
        %v2766 = vpop.f32.mrf.mxu0
        %v2767 = vadd.f32 0.0, %v2766
        %2768 = vdwg.mxu0
        %v2769 = vsel %vm447, %v2765, 0.0
        %v2770 = vsel %vm447, %v2767, 0.0
        %v2771 = vadd.f32 %v2769, %v2770
        %2772 = vadd.xlane.f32.xlu0 %v2771
        %v2773 = vpop.xlane.xlu0 %2772
        %v2774 = vmul.f32 %v2773, 0.00390625
        %v2777 = vunpack.c.l.s4 839922192
        %v2778 = vunpack.c.0.s8 %v2777
        %v2779 = vlaneseq
        %v2780 = vshrl.u32 %v2779, 7
        %v2781 = vsub.s32 %v2778, %v2780
        %v2782 = vrot.slane %v2774, %v2781
        %v2784 = vsub.f32 %v2691, %v2782
        %v2785 = vmul.f32 %v2784, %v2784
        %v2787 = vcombine.high %v2785, %v2785
        %v2788 = vsel %vm447, %v2785, 0
        %v2790 = vsel %vm447, %v2787, 0
        %2792 = vmatprep.subr.mxu0 0.0
        %2793 = vmatpush1.msra.mxu0 0.0
        %2794 = vmatprep.subr.mxu0 0.0
        %2795 = vmatpush1.msra.mxu0 0.0
        %2796 = vmatprep.subr.mxu0 0.0
        %2797 = vmatpush1.msra.mxu0 0.0
        %2798 = vmatprep.subr.mxu0 0.0
        %2799 = vmatpush1.msra.mxu0 0.0
        %2800 = vmatprep.subr.mxu0 0.0
        %2801 = vmatpush1.msra.mxu0 0.0
        %2802 = vmatprep.subr.mxu0 0.0
        %2803 = vmatpush1.msra.mxu0 0.0
        %2804 = vmatprep.subr.mxu0 0.0
        %2805 = vmatpush1.msra.mxu0 0.0
        %2806 = vmatprep.subr.mxu0 0.0
        %2807 = vmatpush1.msra.mxu0 0.0
        %2808 = vmatprep.subr.mxu0 0.0
        %2809 = vmatpush1.msra.mxu0 0.0
        %2810 = vmatprep.subr.mxu0 0.0
        %2811 = vmatpush1.msra.mxu0 0.0
        %2812 = vmatprep.subr.mxu0 0.0
        %2813 = vmatpush1.msra.mxu0 0.0
        %2814 = vmatprep.subr.mxu0 0.0
        %2815 = vmatpush1.msra.mxu0 0.0
        %2816 = vmatprep.subr.mxu0 0.0
        %2817 = vmatpush1.msra.mxu0 0.0
        %2818 = vmatprep.subr.mxu0 0.0
        %2819 = vmatpush1.msra.mxu0 0.0
        %2820 = vmatprep.subr.mxu0 0.0
        %2821 = vmatpush1.msra.mxu0 0.0
        %2822 = vmatprep.subr.mxu0 %v2790
        %2823 = vmatpush1.msra.mxu0 %v2788
        %2824 = vmatprep.subr.mxu0 0.0
        %2825 = vmatpush2.msra.mxu0 0.0
        %2826 = vmatprep.subr.mxu0 0.0
        %2827 = vmatpush2.msra.mxu0 0.0
        %2828 = vmatprep.subr.mxu0 0.0
        %2829 = vmatpush2.msra.mxu0 0.0
        %2830 = vmatprep.subr.mxu0 0.0
        %2831 = vmatpush2.msra.mxu0 0.0
        %2832 = vmatprep.subr.mxu0 0.0
        %2833 = vmatpush2.msra.mxu0 0.0
        %2834 = vmatprep.subr.mxu0 0.0
        %2835 = vmatpush2.msra.mxu0 0.0
        %2836 = vmatprep.subr.mxu0 0.0
        %2837 = vmatpush2.msra.mxu0 0.0
        %2838 = vmatprep.subr.mxu0 0.0
        %2839 = vmatpush2.msra.mxu0 0.0
        %2840 = vmatprep.subr.mxu0 0.0
        %2841 = vmatpush2.msra.mxu0 0.0
        %2842 = vmatprep.subr.mxu0 0.0
        %2843 = vmatpush2.msra.mxu0 0.0
        %2844 = vmatprep.subr.mxu0 0.0
        %2845 = vmatpush2.msra.mxu0 0.0
        %2846 = vmatprep.subr.mxu0 0.0
        %2847 = vmatpush2.msra.mxu0 0.0
        %2848 = vmatprep.subr.mxu0 0.0
        %2849 = vmatpush2.msra.mxu0 0.0
        %2850 = vmatprep.subr.mxu0 0.0
        %2851 = vmatpush2.msra.mxu0 0.0
        %2852 = vmatprep.subr.mxu0 0.0
        %2853 = vmatpush2.msra.mxu0 0.0
        %2854 = vmatprep.subr.mxu0 0.0
        %2855 = vmatpush2.msra.mxu0 0.0
        %2856 = vmatprep.mubr.f32.mxu0 0.0
        %2857 = vmatmul.mubr.f32.gmra.mxu0 %v445
        %v2858 = vpop.f32.mrf.mxu0
        %v2859 = vadd.f32 0.0, %v2858
        %v2860 = vpop.f32.mrf.mxu0
        %v2861 = vadd.f32 0.0, %v2860
        %2862 = vdwg.mxu0
        %v2863 = vsel %vm447, %v2859, 0.0
        %v2864 = vsel %vm447, %v2861, 0.0
        %v2865 = vadd.f32 %v2863, %v2864
        %2866 = vadd.xlane.f32.xlu0 %v2865
        %v2867 = vpop.xlane.xlu0 %2866
        %v2868 = vmul.f32 %v2867, 0.00390625
        %v2869 = vadd.f32 %v2868, 1e-05
        %v2870 = vrsqrt.pop %v2869
        %v2871 = vld [vmem:[%s11] sm:$0xf]
        %v2872 = vmul.f32 %v2870, %v2871
        %2874 = vset.pattern.permute.xlu0 0
        %2875 = vperm.xlu0 %2874, %v2872
        %v2876 = vpop.permute.xlu0 %2875
        %v2878 = vunpack.c.l.s4 839922192
        %v2879 = vunpack.c.0.s8 %v2878
        %v2880 = vlaneseq
        %v2881 = vshrl.u32 %v2880, 7
        %v2882 = vsub.s32 %v2879, %v2881
        %v2883 = vrot.slane %v2876, %v2882
        %v2885 = vmul.f32 %v2784, %v2883
        %v2886 = vld [vmem:[%s12] sm:$0xf]
        %2888 = vset.pattern.permute.xlu0 0
        %2889 = vperm.xlu0 %2888, %v2886
        %v2890 = vpop.permute.xlu0 %2889
        %v2892 = vunpack.c.l.s4 839922192
        %v2893 = vunpack.c.0.s8 %v2892
        %v2894 = vlaneseq
        %v2895 = vshrl.u32 %v2894, 7
        %v2896 = vsub.s32 %v2893, %v2895
        %v2897 = vrot.slane %v2890, %v2896
        %v2899 = vadd.f32 %v2885, %v2897
        %2900 = vst [vmem:[%s433] sm:$0xff] %v2899
        %s2901 = sand.u32 %s313, 1
        %s2902 = scalar_lea.sflag [#allocation3], %s2901
        %s2903 = sand.u32 %s313, 1
        %s2904 = smul.addr %s2903, 8
        %s2905 = scalar_lea.vmem [#allocation2], %s2904
        // Predicated region
        $region73: #{tpu_custom_call.1} parent=71 // pred_check
          %p2906 = pneg %p323
        $region74: #{tpu_custom_call.1} parent=71 // pred_check_branch
          %2908 = sbr.rel (%p2906) target = $region76
        $region75: #{tpu_custom_call.1} parent=71 // pred_region
          %s2910 = ssub.s32 128, 128
          %2911 = vsyncadd %s2902, %s2910
          %s2912 = smul.addr %s27, 2
          %s2913 = smul.addr %s2912, 64
          %s2914 = scalar_lea.hbm %s13, %s2913
          %s2916 = sshll.u32 %s2905, 4
          %s2917 = int_to_ptr.vmem [resolvable:$true] %s2916
          %2919 = dma.vmem_to_hbm [thread:$0]  %s2917, 128, %s2914, %s2902
        $region76: #{tpu_custom_call.1} parent=71 // pred_fallthru
          _
      $region72: #{tpu_custom_call.1} parent=5 // pred_fallthru
        _
      %p2920 = scmp.le.s32.totalorder 2, %s22
      // Predicated region
      $region77: #{tpu_custom_call.1} parent=5 // pred_check
        %p2921 = pneg %p2920
      $region78: #{tpu_custom_call.1} parent=5 // pred_check_branch
        %2923 = sbr.rel (%p2921) target = $region80
      $region79: #{tpu_custom_call.1} parent=5 // pred_region
        %s2924 = ssub.s32 %s22, 2
        // Predicated region
        $region81: #{tpu_custom_call.1} parent=79 // pred_check
          %p2925 = pneg %p329
        $region82: #{tpu_custom_call.1} parent=79 // pred_check_branch
          %2927 = sbr.rel (%p2925) target = $region84
        $region83: #{tpu_custom_call.1} parent=79 // pred_region
          %s2928 = sand.u32 %s314, 1
          %s2929 = scalar_lea.sflag [#allocation3], %s2928
          %s2930 = sand.u32 %s314, 1
          %s2931 = smul.addr %s2930, 8
          %s2932 = scalar_lea.vmem [#allocation2], %s2931
          %2933 = dma.done %s2929, 128
        $region84: #{tpu_custom_call.1} parent=79 // pred_fallthru
          _
      $region80: #{tpu_custom_call.1} parent=5 // pred_fallthru
        _
    $region6: #{tpu_custom_call.1} parent=1 // loop_footer
      %s26 = sadd.s32 1, %s22
    $region7: #{tpu_custom_call.1} parent=1 // loop_footer_branch
      %21 = sbr.rel target = $region3
    $region8: #{tpu_custom_call.1} parent=1 // loop_exit
      _
    %2934 = vsyncpa [#allocation3], 1
    %s2935 = scalar_lea.sflag [#allocation3], 1
    %2936 = vsyncpa %s2935, 1

</llo_original>
